<compile_context>
chip_gen: v6e
topology: v6e:2x2x1
jax: 0.10.0
libtpu: 0.0.40
codegen_flags: <defaults>
</compile_context>

<pallas_src>
import functools
import math

import jax
import jax.numpy as jnp
from jax import lax
from jax.experimental import pallas as pl
from jax.experimental.pallas import tpu as pltpu


def _attention_kernel(x_ref, wqkv_ref, wproj_ref, bproj_ref, o_ref, *,
                      num_heads, seq_len, batch_block, scale):
    """One program = `batch_block` full samples, all heads fused."""
    cdt = x_ref.dtype                          # MXU operand dtype (bf16 or f32)
    rows, c = x_ref.shape                      # rows = batch_block * seq_len
    dh = c // num_heads

    x = x_ref[...]                                                   # (rows, C)

    # One full-width QKV projection: (rows, C) @ (C, 3C), f32 accumulation.
    qkv = jnp.dot(x, wqkv_ref[...], preferred_element_type=jnp.float32)

    # Per (sample, head) scaled-dot-product attention on static slices.
    sample_ctx = []
    for bi in range(batch_block):
        r0 = bi * seq_len
        head_ctx = []
        for h in range(num_heads):
            # Fold the softmax scale into q: N*Dh muls instead of N*N.
            q = qkv[r0:r0 + seq_len, h * dh:(h + 1) * dh] * scale     # (N, Dh)
            k = qkv[r0:r0 + seq_len, c + h * dh:c + (h + 1) * dh]     # (N, Dh)
            v = qkv[r0:r0 + seq_len, 2 * c + h * dh:2 * c + (h + 1) * dh]
            scores = lax.dot_general(q.astype(cdt), k.astype(cdt),
                                     (((1,), (1,)), ((), ())),
                                     preferred_element_type=jnp.float32)  # (N,N)
            m = jnp.max(scores, axis=-1, keepdims=True)
            p = jnp.exp(scores - m)
            denom = jnp.sum(p, axis=-1, keepdims=True)
            # attention_dropout(p=0.0) is the identity.
            ctx = jnp.dot(p.astype(cdt), v.astype(cdt),
                          preferred_element_type=jnp.float32)         # (N, Dh)
            ctx = ctx * pl.reciprocal(denom, approx=True)             # EUP vrcp
            head_ctx.append(ctx)
        sample_ctx.append(jnp.concatenate(head_ctx, axis=-1))         # (N, C)
    ctx_all = (jnp.concatenate(sample_ctx, axis=0)
               if batch_block > 1 else sample_ctx[0])                 # (rows, C)

    # Single output projection with a full-C contraction, plus bias.
    out = jnp.dot(ctx_all.astype(cdt), wproj_ref[...],
                  preferred_element_type=jnp.float32)                 # (rows, C)
    out = out + bproj_ref[...].astype(jnp.float32)
    # proj_dropout(p=0.0) is the identity.  Single lane-dense store.
    o_ref[...] = out.astype(o_ref.dtype)


def attention_pallas(x, w_qkv, w_proj, b_proj, num_heads, *,
                     mm_dtype=jnp.bfloat16, batch_block=1):
    """x: (B, N, C). w_qkv: (C, 3C), w_proj: (C, C), b_proj: (C,).

    Weights are in `x @ W` layout (the transpose of PyTorch nn.Linear.weight).
    `mm_dtype` sets the MXU operand dtype (default bf16 = the fast path on
    v5e/v6e/v7x); accumulation, softmax and the output stay f32-precision.
    `batch_block` samples are processed per grid step (bb*N rows per matmul).
    """
    b, n, c = x.shape
    if c % num_heads != 0:
        raise ValueError(f"dim {c} must be divisible by num_heads {num_heads}")
    if c % 128 != 0:
        raise ValueError(f"dim {c} must be a multiple of 128 (lane-dense blocks)")
    if n % 8 != 0:
        raise ValueError(f"seq {n} must be a multiple of 8")
    if b % batch_block != 0:
        raise ValueError(f"batch {b} must be divisible by batch_block {batch_block}")

    scale = 1.0 / math.sqrt(c)            # PyTorch module: 1/sqrt(dim), not head_dim
    out_dtype = x.dtype
    rows = batch_block * n

    x_flat = x.reshape(b * n, c).astype(mm_dtype)
    wqkv_c = w_qkv.astype(mm_dtype)
    wproj_c = w_proj.astype(mm_dtype)
    bproj_2d = b_proj.reshape(1, c).astype(jnp.float32)

    # Explicit scoped-VMEM budget (v7x has only 64 MiB/TC): double-buffered
    # x/out blocks + grid-invariant weights + f32 temporaries, with headroom.
    mm_item = jnp.dtype(mm_dtype).itemsize
    out_item = jnp.dtype(out_dtype).itemsize
    est = (2 * rows * c * (mm_item + out_item)        # pipelined x / out blocks
           + (3 * c * c + c * c) * mm_item + 4 * c    # weights + bias (invariant)
           + rows * 3 * c * 4                          # qkv f32 temporary
           + rows * c * 4                              # ctx f32 temporary
           + 2 * n * n * 4)                            # scores + exp temporaries
    vmem_limit = int(min(max(2 * est, 32 * 1024 * 1024), 64 * 1024 * 1024))

    kernel = functools.partial(_attention_kernel, num_heads=num_heads,
                               seq_len=n, batch_block=batch_block, scale=scale)

    out_flat = pl.pallas_call(
        kernel,
        out_shape=jax.ShapeDtypeStruct((b * n, c), out_dtype),
        grid_spec=pltpu.PrefetchScalarGridSpec(
            num_scalar_prefetch=0,
            grid=(b // batch_block,),
            in_specs=[
                # x rows for this program        -> (bb*N, C)
                pl.BlockSpec((rows, c), lambda i: (i, 0)),
                # full qkv weight, grid-invariant -> DMA'd once
                pl.BlockSpec((c, 3 * c), lambda i: (0, 0)),
                # full proj weight, grid-invariant
                pl.BlockSpec((c, c), lambda i: (0, 0)),
                # proj bias, grid-invariant
                pl.BlockSpec((1, c), lambda i: (0, 0)),
            ],
            out_specs=pl.BlockSpec((rows, c), lambda i: (i, 0)),
        ),
        compiler_params=pltpu.CompilerParams(
            dimension_semantics=("parallel",),
            vmem_limit_bytes=vmem_limit),
    )(x_flat, wqkv_c, wproj_c, bproj_2d)

    return out_flat.reshape(b, n, c)


def attention_ref(x, w_qkv, w_proj, b_proj, num_heads):
    """Plain-JAX reference matching the PyTorch forward exactly."""
    b, n, c = x.shape
    dh = c // num_heads
    scale = 1.0 / math.sqrt(c)
    qkv = x @ w_qkv                                           # (b, n, 3c)
    qkv = qkv.reshape(b, n, 3, num_heads, dh).transpose(2, 0, 3, 1, 4)
    q, k, v = qkv[0], qkv[1], qkv[2]                          # (b, h, n, dh)
    attn = jnp.einsum('bhqd,bhkd->bhqk', q, k) * scale
    attn = jax.nn.softmax(attn, axis=-1)
    ctx = jnp.einsum('bhqk,bhkd->bhqd', attn, v)
    ctx = jnp.transpose(ctx, (0, 2, 1, 3)).reshape(b, n, c)
    return ctx @ w_proj + b_proj


if __name__ == "__main__":
    # Small but lane-dense shapes: dim multiple of 128, seq multiple of 8.
    batch, seq, dim, num_heads = 2, 64, 128, 8

    key = jax.random.PRNGKey(0)
    kx, kq, kp, kb = jax.random.split(key, 4)
    lim = 1.0 / math.sqrt(dim)

    x = jax.random.normal(kx, (batch, seq, dim), dtype=jnp.float32)
    # "x @ W" layout (transpose of nn.Linear.weight); qkv has no bias.
    w_qkv = jax.random.uniform(kq, (dim, 3 * dim), minval=-lim, maxval=lim,
                               dtype=jnp.float32)
    w_proj = jax.random.uniform(kp, (dim, dim), minval=-lim, maxval=lim,
                                dtype=jnp.float32)
    b_proj = jax.random.uniform(kb, (dim,), minval=-lim, maxval=lim,
                                dtype=jnp.float32)

    y_ref = attention_ref(x, w_qkv, w_proj, b_proj, num_heads)

    # f32-operand path (tight check; approx reciprocal adds ~1e-4 rel error).
    y_f32 = jax.block_until_ready(
        attention_pallas(x, w_qkv, w_proj, b_proj, num_heads,
                         mm_dtype=jnp.float32))
    assert y_f32.shape == (batch, seq, dim)
    assert jnp.allclose(y_f32, y_ref, atol=5e-3, rtol=5e-3), float(
        jnp.max(jnp.abs(y_f32 - y_ref)))

    # Default path: bf16 MXU operands, f32 accumulation (fast path on all gens).
    y_bf16 = jax.block_until_ready(
        attention_pallas(x, w_qkv, w_proj, b_proj, num_heads))
    assert y_bf16.shape == (batch, seq, dim)
    assert jnp.allclose(y_bf16, y_ref, atol=1e-1, rtol=1e-1), float(
        jnp.max(jnp.abs(y_bf16 - y_ref)))

    # Batch-blocked path: bb*N = 128 rows per program (fuller MXU M dimension).
    y_bb = jax.block_until_ready(
        attention_pallas(x, w_qkv, w_proj, b_proj, num_heads, batch_block=2))
    assert jnp.allclose(y_bb, y_ref, atol=1e-1, rtol=1e-1), float(
        jnp.max(jnp.abs(y_bb - y_ref)))

    print("KERNEL_OK")
</pallas_src>

<mosaic_0001>
module attributes {stable_mosaic.version = 11 : i64} {
  func.func @_attention_kernel(%arg0: i32, %arg1: memref<64x128xf32, #tpu.memory_space<vmem>>, %arg2: memref<128x384xf32, #tpu.memory_space<vmem>>, %arg3: memref<128x128xf32, #tpu.memory_space<vmem>>, %arg4: memref<1x128xf32, #tpu.memory_space<vmem>>, %arg5: memref<64x128xf32, #tpu.memory_space<vmem>>) attributes {dimension_semantics = [#tpu.dimension_semantics<parallel>], iteration_bounds = array<i64: 2>, scalar_prefetch = 0 : i64, scratch_operands = 0 : i64, tpu.core_type = #tpu.core_type<tc>, window_params = [{transform_indices = @transform_0, window_bounds = array<i64: 64, 128>}, {pipeline_mode = #tpu.pipeline_mode<synchronous>, transform_indices = @transform_1, window_bounds = array<i64: 128, 384>}, {pipeline_mode = #tpu.pipeline_mode<synchronous>, transform_indices = @transform_2, window_bounds = array<i64: 128, 128>}, {pipeline_mode = #tpu.pipeline_mode<synchronous>, transform_indices = @transform_3, window_bounds = array<i64: 1, 128>}, {transform_indices = @transform_4, window_bounds = array<i64: 64, 128>}]} {
    %c0 = arith.constant 0 : index
    %c0_0 = arith.constant 0 : index
    %0 = vector.load %arg1[%c0, %c0_0] : memref<64x128xf32, #tpu.memory_space<vmem>>, vector<64x128xf32>
    %c0_1 = arith.constant 0 : index
    %c0_2 = arith.constant 0 : index
    %1 = vector.load %arg2[%c0_1, %c0_2] : memref<128x384xf32, #tpu.memory_space<vmem>>, vector<128x384xf32>
    %cst = arith.constant dense<0.000000e+00> : vector<64x384xf32>
    %2 = tpu.matmul %0, %1, %cst {dimension_numbers = #tpu.dot_dimension_numbers<[1], [0], [0], [1], [0, 0, 1, 1], [], []>} : vector<64x128xf32>, vector<128x384xf32>, vector<64x384xf32> -> vector<64x384xf32>
    %3 = vector.extract_strided_slice %2 {offsets = [0, 0], sizes = [64, 16], strides = [1, 1]} : vector<64x384xf32> to vector<64x16xf32>
    %cst_3 = arith.constant 0.0883883461 : f32
    %4 = vector.broadcast %cst_3 : f32 to vector<64x16xf32>
    %5 = arith.mulf %3, %4 : vector<64x16xf32>
    %6 = vector.extract_strided_slice %2 {offsets = [0, 128], sizes = [64, 16], strides = [1, 1]} : vector<64x384xf32> to vector<64x16xf32>
    %7 = vector.extract_strided_slice %2 {offsets = [0, 256], sizes = [64, 16], strides = [1, 1]} : vector<64x384xf32> to vector<64x16xf32>
    %cst_4 = arith.constant dense<0.000000e+00> : vector<64x64xf32>
    %8 = tpu.matmul %5, %6, %cst_4 {dimension_numbers = #tpu.dot_dimension_numbers<[1], [1], [0], [0], [0, 0, 1, 0], [], []>} : vector<64x16xf32>, vector<64x16xf32>, vector<64x64xf32> -> vector<64x64xf32>
    %cst_5 = arith.constant dense<0xFF800000> : vector<64xf32>
    %9 = vector.multi_reduction <maximumf>, %8, %cst_5 [1] : vector<64x64xf32> to vector<64xf32>
    %10 = vector.shape_cast %9 : vector<64xf32> to vector<64x1xf32>
    %11 = vector.broadcast %10 : vector<64x1xf32> to vector<64x64xf32>
    %12 = arith.subf %8, %11 : vector<64x64xf32>
    %13 = math.exp %12 : vector<64x64xf32>
    %cst_6 = arith.constant dense<0.000000e+00> : vector<64xf32>
    %14 = vector.multi_reduction <add>, %13, %cst_6 [1] : vector<64x64xf32> to vector<64xf32>
    %15 = vector.shape_cast %14 : vector<64xf32> to vector<64x1xf32>
    %cst_7 = arith.constant dense<0.000000e+00> : vector<64x16xf32>
    %16 = tpu.matmul %13, %7, %cst_7 {dimension_numbers = #tpu.dot_dimension_numbers<[1], [0], [0], [1], [0, 0, 1, 1], [], []>} : vector<64x64xf32>, vector<64x16xf32>, vector<64x16xf32> -> vector<64x16xf32>
    %17 = tpu.reciprocal %15 {approx = true} : vector<64x1xf32> -> vector<64x1xf32>
    %18 = vector.broadcast %17 : vector<64x1xf32> to vector<64x16xf32>
    %19 = arith.mulf %16, %18 : vector<64x16xf32>
    %20 = vector.extract_strided_slice %2 {offsets = [0, 16], sizes = [64, 16], strides = [1, 1]} : vector<64x384xf32> to vector<64x16xf32>
    %cst_8 = arith.constant 0.0883883461 : f32
    %21 = vector.broadcast %cst_8 : f32 to vector<64x16xf32>
    %22 = arith.mulf %20, %21 : vector<64x16xf32>
    %23 = vector.extract_strided_slice %2 {offsets = [0, 144], sizes = [64, 16], strides = [1, 1]} : vector<64x384xf32> to vector<64x16xf32>
    %24 = vector.extract_strided_slice %2 {offsets = [0, 272], sizes = [64, 16], strides = [1, 1]} : vector<64x384xf32> to vector<64x16xf32>
    %cst_9 = arith.constant dense<0.000000e+00> : vector<64x64xf32>
    %25 = tpu.matmul %22, %23, %cst_9 {dimension_numbers = #tpu.dot_dimension_numbers<[1], [1], [0], [0], [0, 0, 1, 0], [], []>} : vector<64x16xf32>, vector<64x16xf32>, vector<64x64xf32> -> vector<64x64xf32>
    %cst_10 = arith.constant dense<0xFF800000> : vector<64xf32>
    %26 = vector.multi_reduction <maximumf>, %25, %cst_10 [1] : vector<64x64xf32> to vector<64xf32>
    %27 = vector.shape_cast %26 : vector<64xf32> to vector<64x1xf32>
    %28 = vector.broadcast %27 : vector<64x1xf32> to vector<64x64xf32>
    %29 = arith.subf %25, %28 : vector<64x64xf32>
    %30 = math.exp %29 : vector<64x64xf32>
    %cst_11 = arith.constant dense<0.000000e+00> : vector<64xf32>
    %31 = vector.multi_reduction <add>, %30, %cst_11 [1] : vector<64x64xf32> to vector<64xf32>
    %32 = vector.shape_cast %31 : vector<64xf32> to vector<64x1xf32>
    %cst_12 = arith.constant dense<0.000000e+00> : vector<64x16xf32>
    %33 = tpu.matmul %30, %24, %cst_12 {dimension_numbers = #tpu.dot_dimension_numbers<[1], [0], [0], [1], [0, 0, 1, 1], [], []>} : vector<64x64xf32>, vector<64x16xf32>, vector<64x16xf32> -> vector<64x16xf32>
    %34 = tpu.reciprocal %32 {approx = true} : vector<64x1xf32> -> vector<64x1xf32>
    %35 = vector.broadcast %34 : vector<64x1xf32> to vector<64x16xf32>
    %36 = arith.mulf %33, %35 : vector<64x16xf32>
    %37 = vector.extract_strided_slice %2 {offsets = [0, 32], sizes = [64, 16], strides = [1, 1]} : vector<64x384xf32> to vector<64x16xf32>
    %cst_13 = arith.constant 0.0883883461 : f32
    %38 = vector.broadcast %cst_13 : f32 to vector<64x16xf32>
    %39 = arith.mulf %37, %38 : vector<64x16xf32>
    %40 = vector.extract_strided_slice %2 {offsets = [0, 160], sizes = [64, 16], strides = [1, 1]} : vector<64x384xf32> to vector<64x16xf32>
    %41 = vector.extract_strided_slice %2 {offsets = [0, 288], sizes = [64, 16], strides = [1, 1]} : vector<64x384xf32> to vector<64x16xf32>
    %cst_14 = arith.constant dense<0.000000e+00> : vector<64x64xf32>
    %42 = tpu.matmul %39, %40, %cst_14 {dimension_numbers = #tpu.dot_dimension_numbers<[1], [1], [0], [0], [0, 0, 1, 0], [], []>} : vector<64x16xf32>, vector<64x16xf32>, vector<64x64xf32> -> vector<64x64xf32>
    %cst_15 = arith.constant dense<0xFF800000> : vector<64xf32>
    %43 = vector.multi_reduction <maximumf>, %42, %cst_15 [1] : vector<64x64xf32> to vector<64xf32>
    %44 = vector.shape_cast %43 : vector<64xf32> to vector<64x1xf32>
    %45 = vector.broadcast %44 : vector<64x1xf32> to vector<64x64xf32>
    %46 = arith.subf %42, %45 : vector<64x64xf32>
    %47 = math.exp %46 : vector<64x64xf32>
    %cst_16 = arith.constant dense<0.000000e+00> : vector<64xf32>
    %48 = vector.multi_reduction <add>, %47, %cst_16 [1] : vector<64x64xf32> to vector<64xf32>
    %49 = vector.shape_cast %48 : vector<64xf32> to vector<64x1xf32>
    %cst_17 = arith.constant dense<0.000000e+00> : vector<64x16xf32>
    %50 = tpu.matmul %47, %41, %cst_17 {dimension_numbers = #tpu.dot_dimension_numbers<[1], [0], [0], [1], [0, 0, 1, 1], [], []>} : vector<64x64xf32>, vector<64x16xf32>, vector<64x16xf32> -> vector<64x16xf32>
    %51 = tpu.reciprocal %49 {approx = true} : vector<64x1xf32> -> vector<64x1xf32>
    %52 = vector.broadcast %51 : vector<64x1xf32> to vector<64x16xf32>
    %53 = arith.mulf %50, %52 : vector<64x16xf32>
    %54 = vector.extract_strided_slice %2 {offsets = [0, 48], sizes = [64, 16], strides = [1, 1]} : vector<64x384xf32> to vector<64x16xf32>
    %cst_18 = arith.constant 0.0883883461 : f32
    %55 = vector.broadcast %cst_18 : f32 to vector<64x16xf32>
    %56 = arith.mulf %54, %55 : vector<64x16xf32>
    %57 = vector.extract_strided_slice %2 {offsets = [0, 176], sizes = [64, 16], strides = [1, 1]} : vector<64x384xf32> to vector<64x16xf32>
    %58 = vector.extract_strided_slice %2 {offsets = [0, 304], sizes = [64, 16], strides = [1, 1]} : vector<64x384xf32> to vector<64x16xf32>
    %cst_19 = arith.constant dense<0.000000e+00> : vector<64x64xf32>
    %59 = tpu.matmul %56, %57, %cst_19 {dimension_numbers = #tpu.dot_dimension_numbers<[1], [1], [0], [0], [0, 0, 1, 0], [], []>} : vector<64x16xf32>, vector<64x16xf32>, vector<64x64xf32> -> vector<64x64xf32>
    %cst_20 = arith.constant dense<0xFF800000> : vector<64xf32>
    %60 = vector.multi_reduction <maximumf>, %59, %cst_20 [1] : vector<64x64xf32> to vector<64xf32>
    %61 = vector.shape_cast %60 : vector<64xf32> to vector<64x1xf32>
    %62 = vector.broadcast %61 : vector<64x1xf32> to vector<64x64xf32>
    %63 = arith.subf %59, %62 : vector<64x64xf32>
    %64 = math.exp %63 : vector<64x64xf32>
    %cst_21 = arith.constant dense<0.000000e+00> : vector<64xf32>
    %65 = vector.multi_reduction <add>, %64, %cst_21 [1] : vector<64x64xf32> to vector<64xf32>
    %66 = vector.shape_cast %65 : vector<64xf32> to vector<64x1xf32>
    %cst_22 = arith.constant dense<0.000000e+00> : vector<64x16xf32>
    %67 = tpu.matmul %64, %58, %cst_22 {dimension_numbers = #tpu.dot_dimension_numbers<[1], [0], [0], [1], [0, 0, 1, 1], [], []>} : vector<64x64xf32>, vector<64x16xf32>, vector<64x16xf32> -> vector<64x16xf32>
    %68 = tpu.reciprocal %66 {approx = true} : vector<64x1xf32> -> vector<64x1xf32>
    %69 = vector.broadcast %68 : vector<64x1xf32> to vector<64x16xf32>
    %70 = arith.mulf %67, %69 : vector<64x16xf32>
    %71 = vector.extract_strided_slice %2 {offsets = [0, 64], sizes = [64, 16], strides = [1, 1]} : vector<64x384xf32> to vector<64x16xf32>
    %cst_23 = arith.constant 0.0883883461 : f32
    %72 = vector.broadcast %cst_23 : f32 to vector<64x16xf32>
    %73 = arith.mulf %71, %72 : vector<64x16xf32>
    %74 = vector.extract_strided_slice %2 {offsets = [0, 192], sizes = [64, 16], strides = [1, 1]} : vector<64x384xf32> to vector<64x16xf32>
    %75 = vector.extract_strided_slice %2 {offsets = [0, 320], sizes = [64, 16], strides = [1, 1]} : vector<64x384xf32> to vector<64x16xf32>
    %cst_24 = arith.constant dense<0.000000e+00> : vector<64x64xf32>
    %76 = tpu.matmul %73, %74, %cst_24 {dimension_numbers = #tpu.dot_dimension_numbers<[1], [1], [0], [0], [0, 0, 1, 0], [], []>} : vector<64x16xf32>, vector<64x16xf32>, vector<64x64xf32> -> vector<64x64xf32>
    %cst_25 = arith.constant dense<0xFF800000> : vector<64xf32>
    %77 = vector.multi_reduction <maximumf>, %76, %cst_25 [1] : vector<64x64xf32> to vector<64xf32>
    %78 = vector.shape_cast %77 : vector<64xf32> to vector<64x1xf32>
    %79 = vector.broadcast %78 : vector<64x1xf32> to vector<64x64xf32>
    %80 = arith.subf %76, %79 : vector<64x64xf32>
    %81 = math.exp %80 : vector<64x64xf32>
    %cst_26 = arith.constant dense<0.000000e+00> : vector<64xf32>
    %82 = vector.multi_reduction <add>, %81, %cst_26 [1] : vector<64x64xf32> to vector<64xf32>
    %83 = vector.shape_cast %82 : vector<64xf32> to vector<64x1xf32>
    %cst_27 = arith.constant dense<0.000000e+00> : vector<64x16xf32>
    %84 = tpu.matmul %81, %75, %cst_27 {dimension_numbers = #tpu.dot_dimension_numbers<[1], [0], [0], [1], [0, 0, 1, 1], [], []>} : vector<64x64xf32>, vector<64x16xf32>, vector<64x16xf32> -> vector<64x16xf32>
    %85 = tpu.reciprocal %83 {approx = true} : vector<64x1xf32> -> vector<64x1xf32>
    %86 = vector.broadcast %85 : vector<64x1xf32> to vector<64x16xf32>
    %87 = arith.mulf %84, %86 : vector<64x16xf32>
    %88 = vector.extract_strided_slice %2 {offsets = [0, 80], sizes = [64, 16], strides = [1, 1]} : vector<64x384xf32> to vector<64x16xf32>
    %cst_28 = arith.constant 0.0883883461 : f32
    %89 = vector.broadcast %cst_28 : f32 to vector<64x16xf32>
    %90 = arith.mulf %88, %89 : vector<64x16xf32>
    %91 = vector.extract_strided_slice %2 {offsets = [0, 208], sizes = [64, 16], strides = [1, 1]} : vector<64x384xf32> to vector<64x16xf32>
    %92 = vector.extract_strided_slice %2 {offsets = [0, 336], sizes = [64, 16], strides = [1, 1]} : vector<64x384xf32> to vector<64x16xf32>
    %cst_29 = arith.constant dense<0.000000e+00> : vector<64x64xf32>
    %93 = tpu.matmul %90, %91, %cst_29 {dimension_numbers = #tpu.dot_dimension_numbers<[1], [1], [0], [0], [0, 0, 1, 0], [], []>} : vector<64x16xf32>, vector<64x16xf32>, vector<64x64xf32> -> vector<64x64xf32>
    %cst_30 = arith.constant dense<0xFF800000> : vector<64xf32>
    %94 = vector.multi_reduction <maximumf>, %93, %cst_30 [1] : vector<64x64xf32> to vector<64xf32>
    %95 = vector.shape_cast %94 : vector<64xf32> to vector<64x1xf32>
    %96 = vector.broadcast %95 : vector<64x1xf32> to vector<64x64xf32>
    %97 = arith.subf %93, %96 : vector<64x64xf32>
    %98 = math.exp %97 : vector<64x64xf32>
    %cst_31 = arith.constant dense<0.000000e+00> : vector<64xf32>
    %99 = vector.multi_reduction <add>, %98, %cst_31 [1] : vector<64x64xf32> to vector<64xf32>
    %100 = vector.shape_cast %99 : vector<64xf32> to vector<64x1xf32>
    %cst_32 = arith.constant dense<0.000000e+00> : vector<64x16xf32>
    %101 = tpu.matmul %98, %92, %cst_32 {dimension_numbers = #tpu.dot_dimension_numbers<[1], [0], [0], [1], [0, 0, 1, 1], [], []>} : vector<64x64xf32>, vector<64x16xf32>, vector<64x16xf32> -> vector<64x16xf32>
    %102 = tpu.reciprocal %100 {approx = true} : vector<64x1xf32> -> vector<64x1xf32>
    %103 = vector.broadcast %102 : vector<64x1xf32> to vector<64x16xf32>
    %104 = arith.mulf %101, %103 : vector<64x16xf32>
    %105 = vector.extract_strided_slice %2 {offsets = [0, 96], sizes = [64, 16], strides = [1, 1]} : vector<64x384xf32> to vector<64x16xf32>
    %cst_33 = arith.constant 0.0883883461 : f32
    %106 = vector.broadcast %cst_33 : f32 to vector<64x16xf32>
    %107 = arith.mulf %105, %106 : vector<64x16xf32>
    %108 = vector.extract_strided_slice %2 {offsets = [0, 224], sizes = [64, 16], strides = [1, 1]} : vector<64x384xf32> to vector<64x16xf32>
    %109 = vector.extract_strided_slice %2 {offsets = [0, 352], sizes = [64, 16], strides = [1, 1]} : vector<64x384xf32> to vector<64x16xf32>
    %cst_34 = arith.constant dense<0.000000e+00> : vector<64x64xf32>
    %110 = tpu.matmul %107, %108, %cst_34 {dimension_numbers = #tpu.dot_dimension_numbers<[1], [1], [0], [0], [0, 0, 1, 0], [], []>} : vector<64x16xf32>, vector<64x16xf32>, vector<64x64xf32> -> vector<64x64xf32>
    %cst_35 = arith.constant dense<0xFF800000> : vector<64xf32>
    %111 = vector.multi_reduction <maximumf>, %110, %cst_35 [1] : vector<64x64xf32> to vector<64xf32>
    %112 = vector.shape_cast %111 : vector<64xf32> to vector<64x1xf32>
    %113 = vector.broadcast %112 : vector<64x1xf32> to vector<64x64xf32>
    %114 = arith.subf %110, %113 : vector<64x64xf32>
    %115 = math.exp %114 : vector<64x64xf32>
    %cst_36 = arith.constant dense<0.000000e+00> : vector<64xf32>
    %116 = vector.multi_reduction <add>, %115, %cst_36 [1] : vector<64x64xf32> to vector<64xf32>
    %117 = vector.shape_cast %116 : vector<64xf32> to vector<64x1xf32>
    %cst_37 = arith.constant dense<0.000000e+00> : vector<64x16xf32>
    %118 = tpu.matmul %115, %109, %cst_37 {dimension_numbers = #tpu.dot_dimension_numbers<[1], [0], [0], [1], [0, 0, 1, 1], [], []>} : vector<64x64xf32>, vector<64x16xf32>, vector<64x16xf32> -> vector<64x16xf32>
    %119 = tpu.reciprocal %117 {approx = true} : vector<64x1xf32> -> vector<64x1xf32>
    %120 = vector.broadcast %119 : vector<64x1xf32> to vector<64x16xf32>
    %121 = arith.mulf %118, %120 : vector<64x16xf32>
    %122 = vector.extract_strided_slice %2 {offsets = [0, 112], sizes = [64, 16], strides = [1, 1]} : vector<64x384xf32> to vector<64x16xf32>
    %cst_38 = arith.constant 0.0883883461 : f32
    %123 = vector.broadcast %cst_38 : f32 to vector<64x16xf32>
    %124 = arith.mulf %122, %123 : vector<64x16xf32>
    %125 = vector.extract_strided_slice %2 {offsets = [0, 240], sizes = [64, 16], strides = [1, 1]} : vector<64x384xf32> to vector<64x16xf32>
    %126 = vector.extract_strided_slice %2 {offsets = [0, 368], sizes = [64, 16], strides = [1, 1]} : vector<64x384xf32> to vector<64x16xf32>
    %cst_39 = arith.constant dense<0.000000e+00> : vector<64x64xf32>
    %127 = tpu.matmul %124, %125, %cst_39 {dimension_numbers = #tpu.dot_dimension_numbers<[1], [1], [0], [0], [0, 0, 1, 0], [], []>} : vector<64x16xf32>, vector<64x16xf32>, vector<64x64xf32> -> vector<64x64xf32>
    %cst_40 = arith.constant dense<0xFF800000> : vector<64xf32>
    %128 = vector.multi_reduction <maximumf>, %127, %cst_40 [1] : vector<64x64xf32> to vector<64xf32>
    %129 = vector.shape_cast %128 : vector<64xf32> to vector<64x1xf32>
    %130 = vector.broadcast %129 : vector<64x1xf32> to vector<64x64xf32>
    %131 = arith.subf %127, %130 : vector<64x64xf32>
    %132 = math.exp %131 : vector<64x64xf32>
    %cst_41 = arith.constant dense<0.000000e+00> : vector<64xf32>
    %133 = vector.multi_reduction <add>, %132, %cst_41 [1] : vector<64x64xf32> to vector<64xf32>
    %134 = vector.shape_cast %133 : vector<64xf32> to vector<64x1xf32>
    %cst_42 = arith.constant dense<0.000000e+00> : vector<64x16xf32>
    %135 = tpu.matmul %132, %126, %cst_42 {dimension_numbers = #tpu.dot_dimension_numbers<[1], [0], [0], [1], [0, 0, 1, 1], [], []>} : vector<64x64xf32>, vector<64x16xf32>, vector<64x16xf32> -> vector<64x16xf32>
    %136 = tpu.reciprocal %134 {approx = true} : vector<64x1xf32> -> vector<64x1xf32>
    %137 = vector.broadcast %136 : vector<64x1xf32> to vector<64x16xf32>
    %138 = arith.mulf %135, %137 : vector<64x16xf32>
    %139 = tpu.concatenate %19, %36, %53, %70, %87, %104, %121, %138 in 1 : vector<64x16xf32>, vector<64x16xf32>, vector<64x16xf32>, vector<64x16xf32>, vector<64x16xf32>, vector<64x16xf32>, vector<64x16xf32>, vector<64x16xf32> -> vector<64x128xf32>
    %c0_43 = arith.constant 0 : index
    %c0_44 = arith.constant 0 : index
    %140 = vector.load %arg3[%c0_43, %c0_44] : memref<128x128xf32, #tpu.memory_space<vmem>>, vector<128x128xf32>
    %cst_45 = arith.constant dense<0.000000e+00> : vector<64x128xf32>
    %141 = tpu.matmul %139, %140, %cst_45 {dimension_numbers = #tpu.dot_dimension_numbers<[1], [0], [0], [1], [0, 0, 1, 1], [], []>} : vector<64x128xf32>, vector<128x128xf32>, vector<64x128xf32> -> vector<64x128xf32>
    %c0_46 = arith.constant 0 : index
    %c0_47 = arith.constant 0 : index
    %142 = vector.load %arg4[%c0_46, %c0_47] : memref<1x128xf32, #tpu.memory_space<vmem>>, vector<1x128xf32>
    %143 = vector.broadcast %142 : vector<1x128xf32> to vector<64x128xf32>
    %144 = arith.addf %141, %143 : vector<64x128xf32>
    %c0_48 = arith.constant 0 : index
    %c0_49 = arith.constant 0 : index
    %145 = vector.load %arg5[%c0_48, %c0_49] : memref<64x128xf32, #tpu.memory_space<vmem>>, vector<64x128xf32>
    tpu.vector_store %arg5[%c0_48, %c0_49], %144 {strides = array<i32>} : memref<64x128xf32, #tpu.memory_space<vmem>>, vector<64x128xf32>,
    return
  }
  func.func @transform_0(%arg0: i32) -> (i32, i32) {
    %c0_i32 = arith.constant 0 : i32
    %c0_i32_0 = arith.constant 0 : i32
    return %arg0, %c0_i32 : i32, i32
  }
  func.func @transform_1(%arg0: i32) -> (i32, i32) {
    %c0_i32 = arith.constant 0 : i32
    %c0_i32_0 = arith.constant 0 : i32
    %c0_i32_1 = arith.constant 0 : i32
    return %c0_i32, %c0_i32_0 : i32, i32
  }
  func.func @transform_2(%arg0: i32) -> (i32, i32) {
    %c0_i32 = arith.constant 0 : i32
    %c0_i32_0 = arith.constant 0 : i32
    %c0_i32_1 = arith.constant 0 : i32
    return %c0_i32, %c0_i32_0 : i32, i32
  }
  func.func @transform_3(%arg0: i32) -> (i32, i32) {
    %c0_i32 = arith.constant 0 : i32
    %c0_i32_0 = arith.constant 0 : i32
    %c0_i32_1 = arith.constant 0 : i32
    return %c0_i32, %c0_i32_0 : i32, i32
  }
  func.func @transform_4(%arg0: i32) -> (i32, i32) {
    %c0_i32 = arith.constant 0 : i32
    %c0_i32_0 = arith.constant 0 : i32
    return %arg0, %c0_i32 : i32, i32
  }
}

</mosaic_0001>

<llo_original>
// kernel: tpu_custom_call.1
$region0: #{tpu_custom_call.1}
  #allocation0 [shape = 'u32[]', space=smem, size = 0x4, offset = 0x4, fixed_abs, tag = 'smem constant byte address 0x4 - core index']
  #allocation1 [shape = 'u32[144,128]{1,0:T(1,128)}', space=vmem, size = 0x12000, scoped, tag = 'internal scratch']
  %s0 = inlined_call_operand.hbm [shape: f32[128,128], index: 0, kind: input, shape index: {}]
  %s1 = inlined_call_operand.hbm [shape: f32[128,384], index: 1, kind: input, shape index: {}]
  %s2 = inlined_call_operand.hbm [shape: f32[128,128], index: 2, kind: input, shape index: {}]
  %s3 = inlined_call_operand.vmem [shape: f32[1,128], index: 3, kind: input, shape index: {}]
  %s4 = inlined_call_operand.hbm [shape: f32[128,128], index: 4, kind: output, shape index: {}]
  %s5 = sld [smem:[#allocation0]]
  $region61: #{tpu_custom_call.1} parent=0
    _
  %s7 = ssub.s32 1, %s5
  %s8 = scalar_select 0, %s7, %s5
  $region1: #{tpu_custom_call.1} parent=0
    #allocation2 [shape = 'u8[65536]{0}', space=vmem, size = 0x10000, scoped, tag = 'input window, operand 0']
    #allocation3 [shape = 's32[2]{0}', space=sflag, size = 0x8, scoped, tag = 'scoped memory for tpu_custom_call.1']
    #allocation4 [shape = 's32[2]{0}', space=sflag, size = 0x8, scoped, tag = 'scoped memory for tpu_custom_call.1']
    #allocation5 [shape = 'u8[196608]{0}', space=vmem, size = 0x30000, scoped, tag = 'input window, operand 1, single buffered']
    #allocation6 [shape = 's32[1]{0}', space=sflag, size = 0x4, scoped, tag = 'scoped memory for tpu_custom_call.1']
    #allocation7 [shape = 'u8[65536]{0}', space=vmem, size = 0x10000, scoped, tag = 'input window, operand 2, single buffered']
    #allocation8 [shape = 'u8[65536]{0}', space=vmem, size = 0x10000, scoped, tag = 'output window, operand 0']
    %9 = vsyncpa [#allocation3], 0
    %s10 = scalar_lea.sflag [#allocation3], 1
    %11 = vsyncpa %s10, 0
    %12 = vsyncpa [#allocation6], 0
    %13 = vsyncpa [#allocation4], 0
    %s14 = scalar_lea.sflag [#allocation4], 1
    %15 = vsyncpa %s14, 0
    loop: start=0, step=1, limit=4
    $region2: #{tpu_custom_call.1} parent=1 // loop_pre_header
      _
    $region3: #{tpu_custom_call.1} parent=1 // loop_header
      %s17 = sphi 0, %s21
      %p18 = scmp.ge.s32.totalorder %s17, 4
      %s27 = sphi 0, %s29
      %s30 = sphi 0, %s27
      %s31 = sphi 0, %s30
      %s47 = sphi 0, %s31
      %s51 = sphi 0, %s51
      %s53 = sphi 0, %s51
      %s54 = sphi 0, %s53
      %s68 = sphi 0, %s54
      %s72 = sphi 0, %s72
      %s74 = sphi 0, %s72
      %s75 = sphi 0, %s74
      %s89 = sphi 0, %s75
      %s93 = sphi 0, %s93
      %s95 = sphi 0, %s93
      %s96 = sphi 0, %s95
      %s110 = sphi 0, %s96
      %s116 = sphi 0, %s118
      %s119 = sphi 0, %s116
      %s120 = sphi 0, %s119
      %s136 = sphi 0, %s120
    $region4: #{tpu_custom_call.1} parent=1 // loop_header_branch
      %20 = sbr.rel (%p18) target = $region8
    $region5: #{tpu_custom_call.1} parent=1 // loop_body
      %s22 = ssub.s32 %s17, 1
      %s23 = ssub.s32 %s17, 2
      %s24 = sadd.s32 %s17, 1
      %s25 = ssub.s32 %s17, %s24
      %p26 = scmp.eq.s32.totalorder %s25, 0
      %s28 = sadd.s32 %s27, 1
      %s29 = scalar_select %p26, %s27, %s28
      %p32 = pneg %p26
      %p33 = scmp.eq.s32.totalorder %s17, 1
      %p34 = por %p32, %p33
      %p35 = scmp.ne.s32.totalorder %s27, %s30
      %p36 = scmp.eq.s32.totalorder %s17, 0
      %p37 = por %p35, %p36
      %p38 = scmp.ne.s32.totalorder %s27, %s30
      %p39 = scmp.eq.s32.totalorder %s22, 1
      %p40 = por %p38, %p39
      %p41 = scmp.ne.s32.totalorder %s30, %s31
      %p42 = scmp.eq.s32.totalorder %s22, 0
      %p43 = por %p41, %p42
      %p44 = scmp.ne.s32.totalorder %s30, %s31
      %p45 = scmp.eq.s32.totalorder %s23, 1
      %p46 = por %p44, %p45
      %p48 = scmp.ne.s32.totalorder %s31, %s47
      %p49 = scmp.eq.s32.totalorder %s23, 0
      %p50 = por %p48, %p49
      %s52 = sadd.s32 %s51, 1
      %p55 = scmp.eq.s32.totalorder %s17, 1
      %p56 = scmp.ne.s32.totalorder %s51, %s53
      %p57 = scmp.eq.s32.totalorder %s17, 0
      %p58 = por %p56, %p57
      %p59 = scmp.ne.s32.totalorder %s51, %s53
      %p60 = scmp.eq.s32.totalorder %s22, 1
      %p61 = por %p59, %p60
      %p62 = scmp.ne.s32.totalorder %s53, %s54
      %p63 = scmp.eq.s32.totalorder %s22, 0
      %p64 = por %p62, %p63
      %p65 = scmp.ne.s32.totalorder %s53, %s54
      %p66 = scmp.eq.s32.totalorder %s23, 1
      %p67 = por %p65, %p66
      %p69 = scmp.ne.s32.totalorder %s54, %s68
      %p70 = scmp.eq.s32.totalorder %s23, 0
      %p71 = por %p69, %p70
      %s73 = sadd.s32 %s72, 1
      %p76 = scmp.eq.s32.totalorder %s17, 1
      %p77 = scmp.ne.s32.totalorder %s72, %s74
      %p78 = scmp.eq.s32.totalorder %s17, 0
      %p79 = por %p77, %p78
      %p80 = scmp.ne.s32.totalorder %s72, %s74
      %p81 = scmp.eq.s32.totalorder %s22, 1
      %p82 = por %p80, %p81
      %p83 = scmp.ne.s32.totalorder %s74, %s75
      %p84 = scmp.eq.s32.totalorder %s22, 0
      %p85 = por %p83, %p84
      %p86 = scmp.ne.s32.totalorder %s74, %s75
      %p87 = scmp.eq.s32.totalorder %s23, 1
      %p88 = por %p86, %p87
      %p90 = scmp.ne.s32.totalorder %s75, %s89
      %p91 = scmp.eq.s32.totalorder %s23, 0
      %p92 = por %p90, %p91
      %s94 = sadd.s32 %s93, 1
      %p97 = scmp.eq.s32.totalorder %s17, 1
      %p98 = scmp.ne.s32.totalorder %s93, %s95
      %p99 = scmp.eq.s32.totalorder %s17, 0
      %p100 = por %p98, %p99
      %p101 = scmp.ne.s32.totalorder %s93, %s95
      %p102 = scmp.eq.s32.totalorder %s22, 1
      %p103 = por %p101, %p102
      %p104 = scmp.ne.s32.totalorder %s95, %s96
      %p105 = scmp.eq.s32.totalorder %s22, 0
      %p106 = por %p104, %p105
      %p107 = scmp.ne.s32.totalorder %s95, %s96
      %p108 = scmp.eq.s32.totalorder %s23, 1
      %p109 = por %p107, %p108
      %p111 = scmp.ne.s32.totalorder %s96, %s110
      %p112 = scmp.eq.s32.totalorder %s23, 0
      %p113 = por %p111, %p112
      %s114 = ssub.s32 %s17, %s24
      %p115 = scmp.eq.s32.totalorder %s114, 0
      %s117 = sadd.s32 %s116, 1
      %s118 = scalar_select %p115, %s116, %s117
      %p121 = pneg %p115
      %p122 = scmp.eq.s32.totalorder %s17, 1
      %p123 = por %p121, %p122
      %p124 = scmp.ne.s32.totalorder %s116, %s119
      %p125 = scmp.eq.s32.totalorder %s17, 0
      %p126 = por %p124, %p125
      %p127 = scmp.ne.s32.totalorder %s116, %s119
      %p128 = scmp.eq.s32.totalorder %s22, 1
      %p129 = por %p127, %p128
      %p130 = scmp.ne.s32.totalorder %s119, %s120
      %p131 = scmp.eq.s32.totalorder %s22, 0
      %p132 = por %p130, %p131
      %p133 = scmp.ne.s32.totalorder %s119, %s120
      %p134 = scmp.eq.s32.totalorder %s23, 1
      %p135 = por %p133, %p134
      %p137 = scmp.ne.s32.totalorder %s120, %s136
      %p138 = scmp.eq.s32.totalorder %s23, 0
      %p139 = por %p137, %p138
      %p140 = scmp.le.s32.totalorder 1, %s17
      %p141 = scmp.lt.s32.totalorder %s17, 3
      %p142 = pnand %p140, %p141
      %p143 = pneg %p142
      // Predicated region
      $region9: #{tpu_custom_call.1} parent=5 // pred_check
        _
      $region10: #{tpu_custom_call.1} parent=5 // pred_check_branch
        %145 = sbr.rel (%p142) target = $region12
      $region11: #{tpu_custom_call.1} parent=5 // pred_region
        %s146 = ssub.s32 %s17, 1
        // Predicated region
        $region13: #{tpu_custom_call.1} parent=11 // pred_check
          %p147 = pneg %p64
        $region14: #{tpu_custom_call.1} parent=11 // pred_check_branch
          %149 = sbr.rel (%p147) target = $region16
        $region15: #{tpu_custom_call.1} parent=11 // pred_region
          %s151 = ssub.s32 6144, 6144
          %152 = vsyncadd [#allocation6], %s151
          %s153 = sshll.u32 [#allocation5], 4
          %s154 = int_to_ptr.vmem [resolvable:$true] %s153
          %159 = dma.hbm_to_vmem [thread:$0]  %s1, 6144, %s154, [#allocation6], 384, 384, 24
        $region16: #{tpu_custom_call.1} parent=11 // pred_fallthru
          _
        // Predicated region
        $region17: #{tpu_custom_call.1} parent=11 // pred_check
          %p160 = pneg %p85
        $region18: #{tpu_custom_call.1} parent=11 // pred_check_branch
          %162 = sbr.rel (%p160) target = $region20
        $region19: #{tpu_custom_call.1} parent=11 // pred_region
          %s164 = ssub.s32 2048, 2048
          %165 = vsyncadd [#allocation6], %s164
          %s166 = sshll.u32 [#allocation7], 4
          %s167 = int_to_ptr.vmem [resolvable:$true] %s166
          %172 = dma.hbm_to_vmem [thread:$0]  %s2, 2048, %s167, [#allocation6], 128, 128, 8
        $region20: #{tpu_custom_call.1} parent=11 // pred_fallthru
          _
        // Predicated region
        $region21: #{tpu_custom_call.1} parent=11 // pred_check
          %p173 = pneg %p106
        $region22: #{tpu_custom_call.1} parent=11 // pred_check_branch
          %175 = sbr.rel (%p173) target = $region24
        $region23: #{tpu_custom_call.1} parent=11 // pred_region
          _
        $region24: #{tpu_custom_call.1} parent=11 // pred_fallthru
          _
      $region12: #{tpu_custom_call.1} parent=5 // pred_fallthru
        _
      %p176 = scmp.lt.s32.totalorder %s17, 2
      // Predicated region
      $region25: #{tpu_custom_call.1} parent=5 // pred_check
        %p177 = pneg %p176
      $region26: #{tpu_custom_call.1} parent=5 // pred_check_branch
        %179 = sbr.rel (%p177) target = $region28
      $region27: #{tpu_custom_call.1} parent=5 // pred_region
        // Predicated region
        $region29: #{tpu_custom_call.1} parent=27 // pred_check
          %p180 = pneg %p37
        $region30: #{tpu_custom_call.1} parent=27 // pred_check_branch
          %182 = sbr.rel (%p180) target = $region32
        $region31: #{tpu_custom_call.1} parent=27 // pred_region
          %s183 = sand.u32 %s27, 1
          %s184 = scalar_lea.sflag [#allocation3], %s183
          %s185 = sand.u32 %s27, 1
          %s186 = smul.addr %s185, 64
          %s187 = scalar_lea.vmem [#allocation2], %s186
          %s188 = smul.u32 8, %s17
          %s190 = ssub.s32 1024, 1024
          %191 = vsyncadd %s184, %s190
          %s192 = smul.addr %s188, 128
          %s193 = scalar_lea.hbm %s0, %s192
          %s194 = sshll.u32 %s187, 4
          %s195 = int_to_ptr.vmem [resolvable:$true] %s194
          %200 = dma.hbm_to_vmem [thread:$0]  %s193, 1024, %s195, %s184, 128, 128, 8
        $region32: #{tpu_custom_call.1} parent=27 // pred_fallthru
          _
      $region28: #{tpu_custom_call.1} parent=5 // pred_fallthru
        _
      %p201 = scmp.le.s32.totalorder 1, %s17
      %p202 = scmp.lt.s32.totalorder %s17, 3
      %p203 = pnand %p201, %p202
      %p204 = pneg %p203
      // Predicated region
      $region33: #{tpu_custom_call.1} parent=5 // pred_check
        _
      $region34: #{tpu_custom_call.1} parent=5 // pred_check_branch
        %206 = sbr.rel (%p203) target = $region36
      $region35: #{tpu_custom_call.1} parent=5 // pred_region
        %s207 = ssub.s32 %s17, 1
        %s208 = sand.u32 %s30, 1
        %s209 = scalar_lea.sflag [#allocation3], %s208
        %s210 = sand.u32 %s30, 1
        %s211 = smul.addr %s210, 64
        %s212 = scalar_lea.vmem [#allocation2], %s211
        // Predicated region
        $region37: #{tpu_custom_call.1} parent=35 // pred_check
          %p213 = pneg %p43
        $region38: #{tpu_custom_call.1} parent=35 // pred_check_branch
          %215 = sbr.rel (%p213) target = $region40
        $region39: #{tpu_custom_call.1} parent=35 // pred_region
          %216 = dma.done %s209, 1024
        $region40: #{tpu_custom_call.1} parent=35 // pred_fallthru
          _
        // Predicated region
        $region41: #{tpu_custom_call.1} parent=35 // pred_check
          %p217 = pneg %p64
        $region42: #{tpu_custom_call.1} parent=35 // pred_check_branch
          %219 = sbr.rel (%p217) target = $region44
        $region43: #{tpu_custom_call.1} parent=35 // pred_region
          %220 = dma.done [#allocation6], 6144
        $region44: #{tpu_custom_call.1} parent=35 // pred_fallthru
          _
        // Predicated region
        $region45: #{tpu_custom_call.1} parent=35 // pred_check
          %p221 = pneg %p85
        $region46: #{tpu_custom_call.1} parent=35 // pred_check_branch
          %223 = sbr.rel (%p221) target = $region48
        $region47: #{tpu_custom_call.1} parent=35 // pred_region
          %224 = dma.done [#allocation6], 2048
        $region48: #{tpu_custom_call.1} parent=35 // pred_fallthru
          _
        %s225 = sand.u32 %s30, 1
        %s226 = scalar_lea.sflag [#allocation3], %s225
        %s227 = sand.u32 %s30, 1
        %s228 = smul.addr %s227, 64
        %s229 = scalar_lea.vmem [#allocation2], %s228
        %p230 = pneg %p43
        %p231 = pneg %p40
        %p232 = pneg %p64
        %p233 = pneg %p61
        %p234 = pneg %p85
        %p235 = pneg %p82
        %p236 = pneg %p106
        %p237 = pneg %p103
        %p238 = pneg %p132
        %p239 = pneg %p129
        %s240 = sand.u32 %s119, 1
        %s241 = scalar_lea.sflag [#allocation4], %s240
        %s242 = sand.u32 %s119, 1
        %s243 = smul.addr %s242, 64
        %s244 = scalar_lea.vmem [#allocation8], %s243
        %s245 = smul.u32 8, %s22
        %s246 = smul.u32 8, %s22
        %v247 = vld [vmem:[%s212] sm:$0xff]
        %v248 = vld [vmem:[%s212 + $0x8] sm:$0xff]
        %v249 = vld [vmem:[%s212 + $0x10] sm:$0xff]
        %v250 = vld [vmem:[%s212 + $0x18] sm:$0xff]
        %v251 = vld [vmem:[%s212 + $0x20] sm:$0xff]
        %v252 = vld [vmem:[%s212 + $0x28] sm:$0xff]
        %v253 = vld [vmem:[%s212 + $0x30] sm:$0xff]
        %v254 = vld [vmem:[%s212 + $0x38] sm:$0xff]
        %v255 = vld [vmem:[#allocation5] sm:$0xff]
        %v256 = vld [vmem:[#allocation5 + $0x8] sm:$0xff]
        %v257 = vld [vmem:[#allocation5 + $0x10] sm:$0xff]
        %v258 = vld [vmem:[#allocation5 + $0x18] sm:$0xff]
        %v259 = vld [vmem:[#allocation5 + $0x20] sm:$0xff]
        %v260 = vld [vmem:[#allocation5 + $0x28] sm:$0xff]
        %v261 = vld [vmem:[#allocation5 + $0x30] sm:$0xff]
        %v262 = vld [vmem:[#allocation5 + $0x38] sm:$0xff]
        %v263 = vld [vmem:[#allocation5 + $0x40] sm:$0xff]
        %v264 = vld [vmem:[#allocation5 + $0x48] sm:$0xff]
        %v265 = vld [vmem:[#allocation5 + $0x50] sm:$0xff]
        %v266 = vld [vmem:[#allocation5 + $0x58] sm:$0xff]
        %v267 = vld [vmem:[#allocation5 + $0x60] sm:$0xff]
        %v268 = vld [vmem:[#allocation5 + $0x68] sm:$0xff]
        %v269 = vld [vmem:[#allocation5 + $0x70] sm:$0xff]
        %v270 = vld [vmem:[#allocation5 + $0x78] sm:$0xff]
        %v271 = vld [vmem:[#allocation5 + $0x80] sm:$0xff]
        %v272 = vld [vmem:[#allocation5 + $0x88] sm:$0xff]
        %v273 = vld [vmem:[#allocation5 + $0x90] sm:$0xff]
        %v274 = vld [vmem:[#allocation5 + $0x98] sm:$0xff]
        %v275 = vld [vmem:[#allocation5 + $0xa0] sm:$0xff]
        %v276 = vld [vmem:[#allocation5 + $0xa8] sm:$0xff]
        %v277 = vld [vmem:[#allocation5 + $0xb0] sm:$0xff]
        %v278 = vld [vmem:[#allocation5 + $0xb8] sm:$0xff]
        %v279 = vld [vmem:[#allocation5 + $0xc0] sm:$0xff]
        %v280 = vld [vmem:[#allocation5 + $0xc8] sm:$0xff]
        %v281 = vld [vmem:[#allocation5 + $0xd0] sm:$0xff]
        %v282 = vld [vmem:[#allocation5 + $0xd8] sm:$0xff]
        %v283 = vld [vmem:[#allocation5 + $0xe0] sm:$0xff]
        %v284 = vld [vmem:[#allocation5 + $0xe8] sm:$0xff]
        %v285 = vld [vmem:[#allocation5 + $0xf0] sm:$0xff]
        %v286 = vld [vmem:[#allocation5 + $0xf8] sm:$0xff]
        %v287 = vld [vmem:[#allocation5 + $0x100] sm:$0xff]
        %v288 = vld [vmem:[#allocation5 + $0x108] sm:$0xff]
        %v289 = vld [vmem:[#allocation5 + $0x110] sm:$0xff]
        %v290 = vld [vmem:[#allocation5 + $0x118] sm:$0xff]
        %v291 = vld [vmem:[#allocation5 + $0x120] sm:$0xff]
        %v292 = vld [vmem:[#allocation5 + $0x128] sm:$0xff]
        %v293 = vld [vmem:[#allocation5 + $0x130] sm:$0xff]
        %v294 = vld [vmem:[#allocation5 + $0x138] sm:$0xff]
        %v295 = vld [vmem:[#allocation5 + $0x140] sm:$0xff]
        %v296 = vld [vmem:[#allocation5 + $0x148] sm:$0xff]
        %v297 = vld [vmem:[#allocation5 + $0x150] sm:$0xff]
        %v298 = vld [vmem:[#allocation5 + $0x158] sm:$0xff]
        %v299 = vld [vmem:[#allocation5 + $0x160] sm:$0xff]
        %v300 = vld [vmem:[#allocation5 + $0x168] sm:$0xff]
        %v301 = vld [vmem:[#allocation5 + $0x170] sm:$0xff]
        %v302 = vld [vmem:[#allocation5 + $0x178] sm:$0xff]
        %303 = vmatprep.subr.mxu0 %v301
        %304 = vmatpush1.msra.mxu0 %v300
        %305 = vmatprep.subr.mxu0 %v298
        %306 = vmatpush1.msra.mxu0 %v297
        %307 = vmatprep.subr.mxu0 %v295
        %308 = vmatpush1.msra.mxu0 %v294
        %309 = vmatprep.subr.mxu0 %v292
        %310 = vmatpush1.msra.mxu0 %v291
        %311 = vmatprep.subr.mxu0 %v289
        %312 = vmatpush1.msra.mxu0 %v288
        %313 = vmatprep.subr.mxu0 %v286
        %314 = vmatpush1.msra.mxu0 %v285
        %315 = vmatprep.subr.mxu0 %v283
        %316 = vmatpush1.msra.mxu0 %v282
        %317 = vmatprep.subr.mxu0 %v280
        %318 = vmatpush1.msra.mxu0 %v279
        %319 = vmatprep.subr.mxu0 %v277
        %320 = vmatpush1.msra.mxu0 %v276
        %321 = vmatprep.subr.mxu0 %v274
        %322 = vmatpush1.msra.mxu0 %v273
        %323 = vmatprep.subr.mxu0 %v271
        %324 = vmatpush1.msra.mxu0 %v270
        %325 = vmatprep.subr.mxu0 %v268
        %326 = vmatpush1.msra.mxu0 %v267
        %327 = vmatprep.subr.mxu0 %v265
        %328 = vmatpush1.msra.mxu0 %v264
        %329 = vmatprep.subr.mxu0 %v262
        %330 = vmatpush1.msra.mxu0 %v261
        %331 = vmatprep.subr.mxu0 %v259
        %332 = vmatpush1.msra.mxu0 %v258
        %333 = vmatprep.subr.mxu0 %v256
        %334 = vmatpush1.msra.mxu0 %v255
        %335 = vmatprep.subr.mxu0 0.0
        %336 = vmatpush2.msra.mxu0 0.0
        %337 = vmatprep.subr.mxu0 0.0
        %338 = vmatpush2.msra.mxu0 0.0
        %339 = vmatprep.subr.mxu0 0.0
        %340 = vmatpush2.msra.mxu0 0.0
        %341 = vmatprep.subr.mxu0 0.0
        %342 = vmatpush2.msra.mxu0 0.0
        %343 = vmatprep.subr.mxu0 0.0
        %344 = vmatpush2.msra.mxu0 0.0
        %345 = vmatprep.subr.mxu0 0.0
        %346 = vmatpush2.msra.mxu0 0.0
        %347 = vmatprep.subr.mxu0 0.0
        %348 = vmatpush2.msra.mxu0 0.0
        %349 = vmatprep.subr.mxu0 0.0
        %350 = vmatpush2.msra.mxu0 0.0
        %351 = vmatprep.subr.mxu0 0.0
        %352 = vmatpush2.msra.mxu0 0.0
        %353 = vmatprep.subr.mxu0 0.0
        %354 = vmatpush2.msra.mxu0 0.0
        %355 = vmatprep.subr.mxu0 0.0
        %356 = vmatpush2.msra.mxu0 0.0
        %357 = vmatprep.subr.mxu0 0.0
        %358 = vmatpush2.msra.mxu0 0.0
        %359 = vmatprep.subr.mxu0 0.0
        %360 = vmatpush2.msra.mxu0 0.0
        %361 = vmatprep.subr.mxu0 0.0
        %362 = vmatpush2.msra.mxu0 0.0
        %363 = vmatprep.subr.mxu0 0.0
        %364 = vmatpush2.msra.mxu0 0.0
        %365 = vmatprep.subr.mxu0 0.0
        %366 = vmatpush2.msra.mxu0 0.0
        %367 = vmatprep.mubr.f32.mxu0 0.0
        %368 = vmatmul.mubr.f32.gmra.mxu0 %v247
        %v369 = vpop.f32.mrf.mxu0
        %v370 = vadd.f32 0.0, %v369
        %v371 = vpop.f32.mrf.mxu0
        %v372 = vadd.f32 0.0, %v371
        %373 = vmatprep.mubr.f32.mxu0 0.0
        %374 = vmatmul.mubr.f32.gmra.mxu0 %v248
        %v375 = vpop.f32.mrf.mxu0
        %v376 = vadd.f32 0.0, %v375
        %v377 = vpop.f32.mrf.mxu0
        %v378 = vadd.f32 0.0, %v377
        %379 = vmatprep.mubr.f32.mxu0 0.0
        %380 = vmatmul.mubr.f32.gmra.mxu0 %v249
        %v381 = vpop.f32.mrf.mxu0
        %v382 = vadd.f32 0.0, %v381
        %v383 = vpop.f32.mrf.mxu0
        %v384 = vadd.f32 0.0, %v383
        %385 = vmatprep.mubr.f32.mxu0 0.0
        %386 = vmatmul.mubr.f32.gmra.mxu0 %v250
        %v387 = vpop.f32.mrf.mxu0
        %v388 = vadd.f32 0.0, %v387
        %v389 = vpop.f32.mrf.mxu0
        %v390 = vadd.f32 0.0, %v389
        %391 = vmatprep.mubr.f32.mxu0 0.0
        %392 = vmatmul.mubr.f32.gmra.mxu0 %v251
        %v393 = vpop.f32.mrf.mxu0
        %v394 = vadd.f32 0.0, %v393
        %v395 = vpop.f32.mrf.mxu0
        %v396 = vadd.f32 0.0, %v395
        %397 = vmatprep.mubr.f32.mxu0 0.0
        %398 = vmatmul.mubr.f32.gmra.mxu0 %v252
        %v399 = vpop.f32.mrf.mxu0
        %v400 = vadd.f32 0.0, %v399
        %v401 = vpop.f32.mrf.mxu0
        %v402 = vadd.f32 0.0, %v401
        %403 = vmatprep.mubr.f32.mxu0 0.0
        %404 = vmatmul.mubr.f32.gmra.mxu0 %v253
        %v405 = vpop.f32.mrf.mxu0
        %v406 = vadd.f32 0.0, %v405
        %v407 = vpop.f32.mrf.mxu0
        %v408 = vadd.f32 0.0, %v407
        %409 = vmatprep.mubr.f32.mxu0 0.0
        %410 = vmatmul.mubr.f32.gmra.mxu0 %v254
        %v411 = vpop.f32.mrf.mxu0
        %v412 = vadd.f32 0.0, %v411
        %v413 = vpop.f32.mrf.mxu0
        %v414 = vadd.f32 0.0, %v413
        %415 = vdwg.mxu0
        %416 = vmatprep.subr.mxu0 0.0
        %417 = vmatpush1.msra.mxu0 %v302
        %418 = vmatprep.subr.mxu0 0.0
        %419 = vmatpush1.msra.mxu0 %v299
        %420 = vmatprep.subr.mxu0 0.0
        %421 = vmatpush1.msra.mxu0 %v296
        %422 = vmatprep.subr.mxu0 0.0
        %423 = vmatpush1.msra.mxu0 %v293
        %424 = vmatprep.subr.mxu0 0.0
        %425 = vmatpush1.msra.mxu0 %v290
        %426 = vmatprep.subr.mxu0 0.0
        %427 = vmatpush1.msra.mxu0 %v287
        %428 = vmatprep.subr.mxu0 0.0
        %429 = vmatpush1.msra.mxu0 %v284
        %430 = vmatprep.subr.mxu0 0.0
        %431 = vmatpush1.msra.mxu0 %v281
        %432 = vmatprep.subr.mxu0 0.0
        %433 = vmatpush1.msra.mxu0 %v278
        %434 = vmatprep.subr.mxu0 0.0
        %435 = vmatpush1.msra.mxu0 %v275
        %436 = vmatprep.subr.mxu0 0.0
        %437 = vmatpush1.msra.mxu0 %v272
        %438 = vmatprep.subr.mxu0 0.0
        %439 = vmatpush1.msra.mxu0 %v269
        %440 = vmatprep.subr.mxu0 0.0
        %441 = vmatpush1.msra.mxu0 %v266
        %442 = vmatprep.subr.mxu0 0.0
        %443 = vmatpush1.msra.mxu0 %v263
        %444 = vmatprep.subr.mxu0 0.0
        %445 = vmatpush1.msra.mxu0 %v260
        %446 = vmatprep.subr.mxu0 0.0
        %447 = vmatpush1.msra.mxu0 %v257
        %448 = vmatprep.subr.mxu0 0.0
        %449 = vmatpush2.msra.mxu0 0.0
        %450 = vmatprep.subr.mxu0 0.0
        %451 = vmatpush2.msra.mxu0 0.0
        %452 = vmatprep.subr.mxu0 0.0
        %453 = vmatpush2.msra.mxu0 0.0
        %454 = vmatprep.subr.mxu0 0.0
        %455 = vmatpush2.msra.mxu0 0.0
        %456 = vmatprep.subr.mxu0 0.0
        %457 = vmatpush2.msra.mxu0 0.0
        %458 = vmatprep.subr.mxu0 0.0
        %459 = vmatpush2.msra.mxu0 0.0
        %460 = vmatprep.subr.mxu0 0.0
        %461 = vmatpush2.msra.mxu0 0.0
        %462 = vmatprep.subr.mxu0 0.0
        %463 = vmatpush2.msra.mxu0 0.0
        %464 = vmatprep.subr.mxu0 0.0
        %465 = vmatpush2.msra.mxu0 0.0
        %466 = vmatprep.subr.mxu0 0.0
        %467 = vmatpush2.msra.mxu0 0.0
        %468 = vmatprep.subr.mxu0 0.0
        %469 = vmatpush2.msra.mxu0 0.0
        %470 = vmatprep.subr.mxu0 0.0
        %471 = vmatpush2.msra.mxu0 0.0
        %472 = vmatprep.subr.mxu0 0.0
        %473 = vmatpush2.msra.mxu0 0.0
        %474 = vmatprep.subr.mxu0 0.0
        %475 = vmatpush2.msra.mxu0 0.0
        %476 = vmatprep.subr.mxu0 0.0
        %477 = vmatpush2.msra.mxu0 0.0
        %478 = vmatprep.subr.mxu0 0.0
        %479 = vmatpush2.msra.mxu0 0.0
        %480 = vmatprep.mubr.f32.mxu0 0.0
        %481 = vmatmul.mubr.f32.gmra.mxu0 %v247
        %v482 = vpop.f32.mrf.mxu0
        %v483 = vadd.f32 0.0, %v482
        %v484 = vpop.f32.mrf.mxu0
        %485 = vmatprep.mubr.f32.mxu0 0.0
        %486 = vmatmul.mubr.f32.gmra.mxu0 %v248
        %v487 = vpop.f32.mrf.mxu0
        %v488 = vadd.f32 0.0, %v487
        %v489 = vpop.f32.mrf.mxu0
        %490 = vmatprep.mubr.f32.mxu0 0.0
        %491 = vmatmul.mubr.f32.gmra.mxu0 %v249
        %v492 = vpop.f32.mrf.mxu0
        %v493 = vadd.f32 0.0, %v492
        %v494 = vpop.f32.mrf.mxu0
        %495 = vmatprep.mubr.f32.mxu0 0.0
        %496 = vmatmul.mubr.f32.gmra.mxu0 %v250
        %v497 = vpop.f32.mrf.mxu0
        %v498 = vadd.f32 0.0, %v497
        %v499 = vpop.f32.mrf.mxu0
        %500 = vmatprep.mubr.f32.mxu0 0.0
        %501 = vmatmul.mubr.f32.gmra.mxu0 %v251
        %v502 = vpop.f32.mrf.mxu0
        %v503 = vadd.f32 0.0, %v502
        %v504 = vpop.f32.mrf.mxu0
        %505 = vmatprep.mubr.f32.mxu0 0.0
        %506 = vmatmul.mubr.f32.gmra.mxu0 %v252
        %v507 = vpop.f32.mrf.mxu0
        %v508 = vadd.f32 0.0, %v507
        %v509 = vpop.f32.mrf.mxu0
        %510 = vmatprep.mubr.f32.mxu0 0.0
        %511 = vmatmul.mubr.f32.gmra.mxu0 %v253
        %v512 = vpop.f32.mrf.mxu0
        %v513 = vadd.f32 0.0, %v512
        %v514 = vpop.f32.mrf.mxu0
        %515 = vmatprep.mubr.f32.mxu0 0.0
        %516 = vmatmul.mubr.f32.gmra.mxu0 %v254
        %v517 = vpop.f32.mrf.mxu0
        %v518 = vadd.f32 0.0, %v517
        %v519 = vpop.f32.mrf.mxu0
        %520 = vdwg.mxu0
        %v521 = vmul.f32 %v370, 0.088388346
        %v522 = vmul.f32 %v376, 0.088388346
        %v523 = vmul.f32 %v382, 0.088388346
        %v524 = vmul.f32 %v388, 0.088388346
        %v525 = vmul.f32 %v394, 0.088388346
        %v526 = vmul.f32 %v400, 0.088388346
        %v527 = vmul.f32 %v406, 0.088388346
        %v528 = vmul.f32 %v412, 0.088388346
        %vm529 = vcmask 130048
        %v531 = vsel %vm529, %v521, 0
        %v534 = vsel %vm529, %v522, 0
        %v537 = vsel %vm529, %v523, 0
        %v540 = vsel %vm529, %v524, 0
        %v543 = vsel %vm529, %v525, 0
        %v546 = vsel %vm529, %v526, 0
        %v549 = vsel %vm529, %v527, 0
        %v552 = vsel %vm529, %v528, 0
        %v555 = vsel %vm529, %v372, 0
        %v558 = vsel %vm529, %v378, 0
        %v561 = vsel %vm529, %v384, 0
        %v564 = vsel %vm529, %v390, 0
        %v567 = vsel %vm529, %v396, 0
        %v570 = vsel %vm529, %v402, 0
        %v573 = vsel %vm529, %v408, 0
        %v576 = vsel %vm529, %v414, 0
        %578 = vmatprep.subr.mxu0 0.0
        %579 = vmatpush1.xpose.msra.mxu0 0.0
        %580 = vmatprep.subr.mxu0 0.0
        %581 = vmatpush1.xpose.msra.mxu0 0.0
        %582 = vmatprep.subr.mxu0 0.0
        %583 = vmatpush1.xpose.msra.mxu0 0.0
        %584 = vmatprep.subr.mxu0 0.0
        %585 = vmatpush1.xpose.msra.mxu0 0.0
        %586 = vmatprep.subr.mxu0 0.0
        %587 = vmatpush1.xpose.msra.mxu0 0.0
        %588 = vmatprep.subr.mxu0 0.0
        %589 = vmatpush1.xpose.msra.mxu0 0.0
        %590 = vmatprep.subr.mxu0 0.0
        %591 = vmatpush1.xpose.msra.mxu0 0.0
        %592 = vmatprep.subr.mxu0 0.0
        %593 = vmatpush1.xpose.msra.mxu0 0.0
        %594 = vmatprep.subr.mxu0 0.0
        %595 = vmatpush1.xpose.msra.mxu0 %v576
        %596 = vmatprep.subr.mxu0 0.0
        %597 = vmatpush1.xpose.msra.mxu0 %v573
        %598 = vmatprep.subr.mxu0 0.0
        %599 = vmatpush1.xpose.msra.mxu0 %v570
        %600 = vmatprep.subr.mxu0 0.0
        %601 = vmatpush1.xpose.msra.mxu0 %v567
        %602 = vmatprep.subr.mxu0 0.0
        %603 = vmatpush1.xpose.msra.mxu0 %v564
        %604 = vmatprep.subr.mxu0 0.0
        %605 = vmatpush1.xpose.msra.mxu0 %v561
        %606 = vmatprep.subr.mxu0 0.0
        %607 = vmatpush1.xpose.msra.mxu0 %v558
        %608 = vmatprep.subr.mxu0 0.0
        %609 = vmatpush1.xpose.msra.mxu0 %v555
        %610 = vmatprep.subr.mxu0 0.0
        %611 = vmatpush2.xpose.msra.mxu0 0.0
        %612 = vmatprep.subr.mxu0 0.0
        %613 = vmatpush2.xpose.msra.mxu0 0.0
        %614 = vmatprep.subr.mxu0 0.0
        %615 = vmatpush2.xpose.msra.mxu0 0.0
        %616 = vmatprep.subr.mxu0 0.0
        %617 = vmatpush2.xpose.msra.mxu0 0.0
        %618 = vmatprep.subr.mxu0 0.0
        %619 = vmatpush2.xpose.msra.mxu0 0.0
        %620 = vmatprep.subr.mxu0 0.0
        %621 = vmatpush2.xpose.msra.mxu0 0.0
        %622 = vmatprep.subr.mxu0 0.0
        %623 = vmatpush2.xpose.msra.mxu0 0.0
        %624 = vmatprep.subr.mxu0 0.0
        %625 = vmatpush2.xpose.msra.mxu0 0.0
        %626 = vmatprep.subr.mxu0 0.0
        %627 = vmatpush2.xpose.msra.mxu0 0.0
        %628 = vmatprep.subr.mxu0 0.0
        %629 = vmatpush2.xpose.msra.mxu0 0.0
        %630 = vmatprep.subr.mxu0 0.0
        %631 = vmatpush2.xpose.msra.mxu0 0.0
        %632 = vmatprep.subr.mxu0 0.0
        %633 = vmatpush2.xpose.msra.mxu0 0.0
        %634 = vmatprep.subr.mxu0 0.0
        %635 = vmatpush2.xpose.msra.mxu0 0.0
        %636 = vmatprep.subr.mxu0 0.0
        %637 = vmatpush2.xpose.msra.mxu0 0.0
        %638 = vmatprep.subr.mxu0 0.0
        %639 = vmatpush2.xpose.msra.mxu0 0.0
        %640 = vmatprep.subr.mxu0 0.0
        %641 = vmatpush2.xpose.msra.mxu0 0.0
        %642 = vmatprep.mubr.f32.mxu0 0.0
        %643 = vmatmul.mubr.f32.gmra.mxu0 %v531
        %v644 = vpop.f32.mrf.mxu0
        %v645 = vadd.f32 0.0, %v644
        %v646 = vpop.f32.mrf.mxu0
        %647 = vmatprep.mubr.f32.mxu0 0.0
        %648 = vmatmul.mubr.f32.gmra.mxu0 %v534
        %v649 = vpop.f32.mrf.mxu0
        %v650 = vadd.f32 0.0, %v649
        %v651 = vpop.f32.mrf.mxu0
        %652 = vmatprep.mubr.f32.mxu0 0.0
        %653 = vmatmul.mubr.f32.gmra.mxu0 %v537
        %v654 = vpop.f32.mrf.mxu0
        %v655 = vadd.f32 0.0, %v654
        %v656 = vpop.f32.mrf.mxu0
        %657 = vmatprep.mubr.f32.mxu0 0.0
        %658 = vmatmul.mubr.f32.gmra.mxu0 %v540
        %v659 = vpop.f32.mrf.mxu0
        %v660 = vadd.f32 0.0, %v659
        %v661 = vpop.f32.mrf.mxu0
        %662 = vmatprep.mubr.f32.mxu0 0.0
        %663 = vmatmul.mubr.f32.gmra.mxu0 %v543
        %v664 = vpop.f32.mrf.mxu0
        %v665 = vadd.f32 0.0, %v664
        %v666 = vpop.f32.mrf.mxu0
        %667 = vmatprep.mubr.f32.mxu0 0.0
        %668 = vmatmul.mubr.f32.gmra.mxu0 %v546
        %v669 = vpop.f32.mrf.mxu0
        %v670 = vadd.f32 0.0, %v669
        %v671 = vpop.f32.mrf.mxu0
        %672 = vmatprep.mubr.f32.mxu0 0.0
        %673 = vmatmul.mubr.f32.gmra.mxu0 %v549
        %v674 = vpop.f32.mrf.mxu0
        %v675 = vadd.f32 0.0, %v674
        %v676 = vpop.f32.mrf.mxu0
        %677 = vmatprep.mubr.f32.mxu0 0.0
        %678 = vmatmul.mubr.f32.gmra.mxu0 %v552
        %v679 = vpop.f32.mrf.mxu0
        %v680 = vadd.f32 0.0, %v679
        %v681 = vpop.f32.mrf.mxu0
        %682 = vdwg.mxu0
        %vm683 = vcmask 523264
        %v684 = vsel %vm683, %v645, -inf
        %685 = vmax.xlane.f32.xlu0 %v684
        %v686 = vpop.xlane.xlu0 %685
        %v687 = vsel %vm683, %v650, -inf
        %688 = vmax.xlane.f32.xlu0 %v687
        %v689 = vpop.xlane.xlu0 %688
        %v690 = vsel %vm683, %v655, -inf
        %691 = vmax.xlane.f32.xlu0 %v690
        %v692 = vpop.xlane.xlu0 %691
        %v693 = vsel %vm683, %v660, -inf
        %694 = vmax.xlane.f32.xlu0 %v693
        %v695 = vpop.xlane.xlu0 %694
        %v696 = vsel %vm683, %v665, -inf
        %697 = vmax.xlane.f32.xlu0 %v696
        %v698 = vpop.xlane.xlu0 %697
        %v699 = vsel %vm683, %v670, -inf
        %700 = vmax.xlane.f32.xlu0 %v699
        %v701 = vpop.xlane.xlu0 %700
        %v702 = vsel %vm683, %v675, -inf
        %703 = vmax.xlane.f32.xlu0 %v702
        %v704 = vpop.xlane.xlu0 %703
        %v705 = vsel %vm683, %v680, -inf
        %706 = vmax.xlane.f32.xlu0 %v705
        %v707 = vpop.xlane.xlu0 %706
        %v708 = vsub.f32 %v645, %v686
        %v709 = vsub.f32 %v650, %v689
        %v710 = vsub.f32 %v655, %v692
        %v711 = vsub.f32 %v660, %v695
        %v712 = vsub.f32 %v665, %v698
        %v713 = vsub.f32 %v670, %v701
        %v714 = vsub.f32 %v675, %v704
        %v715 = vsub.f32 %v680, %v707
        %v716 = vmul.f32 %v708, 1.442695
        %v717 = vpow.pop %v716
        %v718 = vmul.f32 %v709, 1.442695
        %v719 = vpow.pop %v718
        %v720 = vmul.f32 %v710, 1.442695
        %v721 = vpow.pop %v720
        %v722 = vmul.f32 %v711, 1.442695
        %v723 = vpow.pop %v722
        %v724 = vmul.f32 %v712, 1.442695
        %v725 = vpow.pop %v724
        %v726 = vmul.f32 %v713, 1.442695
        %v727 = vpow.pop %v726
        %v728 = vmul.f32 %v714, 1.442695
        %v729 = vpow.pop %v728
        %v730 = vmul.f32 %v715, 1.442695
        %v731 = vpow.pop %v730
        %v732 = vsel %vm683, %v717, 0.0
        %733 = vadd.xlane.f32.xlu0 %v732
        %v734 = vpop.xlane.xlu0 %733
        %v735 = vsel %vm683, %v719, 0.0
        %736 = vadd.xlane.f32.xlu0 %v735
        %v737 = vpop.xlane.xlu0 %736
        %v738 = vsel %vm683, %v721, 0.0
        %739 = vadd.xlane.f32.xlu0 %v738
        %v740 = vpop.xlane.xlu0 %739
        %v741 = vsel %vm683, %v723, 0.0
        %742 = vadd.xlane.f32.xlu0 %v741
        %v743 = vpop.xlane.xlu0 %742
        %v744 = vsel %vm683, %v725, 0.0
        %745 = vadd.xlane.f32.xlu0 %v744
        %v746 = vpop.xlane.xlu0 %745
        %v747 = vsel %vm683, %v727, 0.0
        %748 = vadd.xlane.f32.xlu0 %v747
        %v749 = vpop.xlane.xlu0 %748
        %v750 = vsel %vm683, %v729, 0.0
        %751 = vadd.xlane.f32.xlu0 %v750
        %v752 = vpop.xlane.xlu0 %751
        %v753 = vsel %vm683, %v731, 0.0
        %754 = vadd.xlane.f32.xlu0 %v753
        %v755 = vpop.xlane.xlu0 %754
        %v757 = vsel %vm683, %v717, 0
        %v760 = vsel %vm683, %v719, 0
        %v763 = vsel %vm683, %v721, 0
        %v766 = vsel %vm683, %v723, 0
        %v769 = vsel %vm683, %v725, 0
        %v772 = vsel %vm683, %v727, 0
        %v775 = vsel %vm683, %v729, 0
        %v778 = vsel %vm683, %v731, 0
        %780 = vmatprep.subr.mxu0 0.0
        %781 = vmatpush1.msra.mxu0 0.0
        %782 = vmatprep.subr.mxu0 0.0
        %783 = vmatpush1.msra.mxu0 0.0
        %784 = vmatprep.subr.mxu0 0.0
        %785 = vmatpush1.msra.mxu0 0.0
        %786 = vmatprep.subr.mxu0 0.0
        %787 = vmatpush1.msra.mxu0 0.0
        %788 = vmatprep.subr.mxu0 0.0
        %789 = vmatpush1.msra.mxu0 0.0
        %790 = vmatprep.subr.mxu0 0.0
        %791 = vmatpush1.msra.mxu0 0.0
        %792 = vmatprep.subr.mxu0 0.0
        %793 = vmatpush1.msra.mxu0 0.0
        %794 = vmatprep.subr.mxu0 0.0
        %795 = vmatpush1.msra.mxu0 0.0
        %796 = vmatprep.subr.mxu0 0.0
        %797 = vmatpush1.msra.mxu0 %v518
        %798 = vmatprep.subr.mxu0 0.0
        %799 = vmatpush1.msra.mxu0 %v513
        %800 = vmatprep.subr.mxu0 0.0
        %801 = vmatpush1.msra.mxu0 %v508
        %802 = vmatprep.subr.mxu0 0.0
        %803 = vmatpush1.msra.mxu0 %v503
        %804 = vmatprep.subr.mxu0 0.0
        %805 = vmatpush1.msra.mxu0 %v498
        %806 = vmatprep.subr.mxu0 0.0
        %807 = vmatpush1.msra.mxu0 %v493
        %808 = vmatprep.subr.mxu0 0.0
        %809 = vmatpush1.msra.mxu0 %v488
        %810 = vmatprep.subr.mxu0 0.0
        %811 = vmatpush1.msra.mxu0 %v483
        %812 = vmatprep.subr.mxu0 0.0
        %813 = vmatpush2.msra.mxu0 0.0
        %814 = vmatprep.subr.mxu0 0.0
        %815 = vmatpush2.msra.mxu0 0.0
        %816 = vmatprep.subr.mxu0 0.0
        %817 = vmatpush2.msra.mxu0 0.0
        %818 = vmatprep.subr.mxu0 0.0
        %819 = vmatpush2.msra.mxu0 0.0
        %820 = vmatprep.subr.mxu0 0.0
        %821 = vmatpush2.msra.mxu0 0.0
        %822 = vmatprep.subr.mxu0 0.0
        %823 = vmatpush2.msra.mxu0 0.0
        %824 = vmatprep.subr.mxu0 0.0
        %825 = vmatpush2.msra.mxu0 0.0
        %826 = vmatprep.subr.mxu0 0.0
        %827 = vmatpush2.msra.mxu0 0.0
        %828 = vmatprep.subr.mxu0 0.0
        %829 = vmatpush2.msra.mxu0 0.0
        %830 = vmatprep.subr.mxu0 0.0
        %831 = vmatpush2.msra.mxu0 0.0
        %832 = vmatprep.subr.mxu0 0.0
        %833 = vmatpush2.msra.mxu0 0.0
        %834 = vmatprep.subr.mxu0 0.0
        %835 = vmatpush2.msra.mxu0 0.0
        %836 = vmatprep.subr.mxu0 0.0
        %837 = vmatpush2.msra.mxu0 0.0
        %838 = vmatprep.subr.mxu0 0.0
        %839 = vmatpush2.msra.mxu0 0.0
        %840 = vmatprep.subr.mxu0 0.0
        %841 = vmatpush2.msra.mxu0 0.0
        %842 = vmatprep.subr.mxu0 0.0
        %843 = vmatpush2.msra.mxu0 0.0
        %844 = vmatprep.mubr.f32.mxu0 0.0
        %845 = vmatmul.mubr.f32.gmra.mxu0 %v757
        %v846 = vpop.f32.mrf.mxu0
        %v847 = vadd.f32 0.0, %v846
        %v848 = vpop.f32.mrf.mxu0
        %849 = vmatprep.mubr.f32.mxu0 0.0
        %850 = vmatmul.mubr.f32.gmra.mxu0 %v760
        %v851 = vpop.f32.mrf.mxu0
        %v852 = vadd.f32 0.0, %v851
        %v853 = vpop.f32.mrf.mxu0
        %854 = vmatprep.mubr.f32.mxu0 0.0
        %855 = vmatmul.mubr.f32.gmra.mxu0 %v763
        %v856 = vpop.f32.mrf.mxu0
        %v857 = vadd.f32 0.0, %v856
        %v858 = vpop.f32.mrf.mxu0
        %859 = vmatprep.mubr.f32.mxu0 0.0
        %860 = vmatmul.mubr.f32.gmra.mxu0 %v766
        %v861 = vpop.f32.mrf.mxu0
        %v862 = vadd.f32 0.0, %v861
        %v863 = vpop.f32.mrf.mxu0
        %864 = vmatprep.mubr.f32.mxu0 0.0
        %865 = vmatmul.mubr.f32.gmra.mxu0 %v769
        %v866 = vpop.f32.mrf.mxu0
        %v867 = vadd.f32 0.0, %v866
        %v868 = vpop.f32.mrf.mxu0
        %869 = vmatprep.mubr.f32.mxu0 0.0
        %870 = vmatmul.mubr.f32.gmra.mxu0 %v772
        %v871 = vpop.f32.mrf.mxu0
        %v872 = vadd.f32 0.0, %v871
        %v873 = vpop.f32.mrf.mxu0
        %874 = vmatprep.mubr.f32.mxu0 0.0
        %875 = vmatmul.mubr.f32.gmra.mxu0 %v775
        %v876 = vpop.f32.mrf.mxu0
        %v877 = vadd.f32 0.0, %v876
        %v878 = vpop.f32.mrf.mxu0
        %879 = vmatprep.mubr.f32.mxu0 0.0
        %880 = vmatmul.mubr.f32.gmra.mxu0 %v778
        %v881 = vpop.f32.mrf.mxu0
        %v882 = vadd.f32 0.0, %v881
        %v883 = vpop.f32.mrf.mxu0
        %884 = vdwg.mxu0
        %v885 = vrcp.pop %v734
        %v886 = vrcp.pop %v737
        %v887 = vrcp.pop %v740
        %v888 = vrcp.pop %v743
        %v889 = vrcp.pop %v746
        %v890 = vrcp.pop %v749
        %v891 = vrcp.pop %v752
        %v892 = vrcp.pop %v755
        %v893 = vmul.f32 %v847, %v885
        %v894 = vmul.f32 %v852, %v886
        %v895 = vmul.f32 %v857, %v887
        %v896 = vmul.f32 %v862, %v888
        %v897 = vmul.f32 %v867, %v889
        %v898 = vmul.f32 %v872, %v890
        %v899 = vmul.f32 %v877, %v891
        %v900 = vmul.f32 %v882, %v892
        %901 = vrot.lane.b32.xlu0 %v521, 112
        %v902 = vpop.permute.xlu0 %901
        %903 = vrot.lane.b32.xlu0 %v522, 112
        %v904 = vpop.permute.xlu0 %903
        %905 = vrot.lane.b32.xlu0 %v523, 112
        %v906 = vpop.permute.xlu0 %905
        %907 = vrot.lane.b32.xlu0 %v524, 112
        %v908 = vpop.permute.xlu0 %907
        %909 = vrot.lane.b32.xlu0 %v525, 112
        %v910 = vpop.permute.xlu0 %909
        %911 = vrot.lane.b32.xlu0 %v526, 112
        %v912 = vpop.permute.xlu0 %911
        %913 = vrot.lane.b32.xlu0 %v527, 112
        %v914 = vpop.permute.xlu0 %913
        %915 = vrot.lane.b32.xlu0 %v528, 112
        %v916 = vpop.permute.xlu0 %915
        %917 = vrot.lane.b32.xlu0 %v372, 112
        %v918 = vpop.permute.xlu0 %917
        %919 = vrot.lane.b32.xlu0 %v378, 112
        %v920 = vpop.permute.xlu0 %919
        %921 = vrot.lane.b32.xlu0 %v384, 112
        %v922 = vpop.permute.xlu0 %921
        %923 = vrot.lane.b32.xlu0 %v390, 112
        %v924 = vpop.permute.xlu0 %923
        %925 = vrot.lane.b32.xlu0 %v396, 112
        %v926 = vpop.permute.xlu0 %925
        %927 = vrot.lane.b32.xlu0 %v402, 112
        %v928 = vpop.permute.xlu0 %927
        %929 = vrot.lane.b32.xlu0 %v408, 112
        %v930 = vpop.permute.xlu0 %929
        %931 = vrot.lane.b32.xlu0 %v414, 112
        %v932 = vpop.permute.xlu0 %931
        %v933 = vsel %vm529, %v902, 0
        %v935 = vsel %vm529, %v904, 0
        %v937 = vsel %vm529, %v906, 0
        %v939 = vsel %vm529, %v908, 0
        %v941 = vsel %vm529, %v910, 0
        %v943 = vsel %vm529, %v912, 0
        %v945 = vsel %vm529, %v914, 0
        %v947 = vsel %vm529, %v916, 0
        %v949 = vsel %vm529, %v918, 0
        %v951 = vsel %vm529, %v920, 0
        %v953 = vsel %vm529, %v922, 0
        %v955 = vsel %vm529, %v924, 0
        %v957 = vsel %vm529, %v926, 0
        %v959 = vsel %vm529, %v928, 0
        %v961 = vsel %vm529, %v930, 0
        %v963 = vsel %vm529, %v932, 0
        %965 = vmatprep.subr.mxu0 0.0
        %966 = vmatpush1.xpose.msra.mxu0 0.0
        %967 = vmatprep.subr.mxu0 0.0
        %968 = vmatpush1.xpose.msra.mxu0 0.0
        %969 = vmatprep.subr.mxu0 0.0
        %970 = vmatpush1.xpose.msra.mxu0 0.0
        %971 = vmatprep.subr.mxu0 0.0
        %972 = vmatpush1.xpose.msra.mxu0 0.0
        %973 = vmatprep.subr.mxu0 0.0
        %974 = vmatpush1.xpose.msra.mxu0 0.0
        %975 = vmatprep.subr.mxu0 0.0
        %976 = vmatpush1.xpose.msra.mxu0 0.0
        %977 = vmatprep.subr.mxu0 0.0
        %978 = vmatpush1.xpose.msra.mxu0 0.0
        %979 = vmatprep.subr.mxu0 0.0
        %980 = vmatpush1.xpose.msra.mxu0 0.0
        %981 = vmatprep.subr.mxu0 0.0
        %982 = vmatpush1.xpose.msra.mxu0 %v963
        %983 = vmatprep.subr.mxu0 0.0
        %984 = vmatpush1.xpose.msra.mxu0 %v961
        %985 = vmatprep.subr.mxu0 0.0
        %986 = vmatpush1.xpose.msra.mxu0 %v959
        %987 = vmatprep.subr.mxu0 0.0
        %988 = vmatpush1.xpose.msra.mxu0 %v957
        %989 = vmatprep.subr.mxu0 0.0
        %990 = vmatpush1.xpose.msra.mxu0 %v955
        %991 = vmatprep.subr.mxu0 0.0
        %992 = vmatpush1.xpose.msra.mxu0 %v953
        %993 = vmatprep.subr.mxu0 0.0
        %994 = vmatpush1.xpose.msra.mxu0 %v951
        %995 = vmatprep.subr.mxu0 0.0
        %996 = vmatpush1.xpose.msra.mxu0 %v949
        %997 = vmatprep.subr.mxu0 0.0
        %998 = vmatpush2.xpose.msra.mxu0 0.0
        %999 = vmatprep.subr.mxu0 0.0
        %1000 = vmatpush2.xpose.msra.mxu0 0.0
        %1001 = vmatprep.subr.mxu0 0.0
        %1002 = vmatpush2.xpose.msra.mxu0 0.0
        %1003 = vmatprep.subr.mxu0 0.0
        %1004 = vmatpush2.xpose.msra.mxu0 0.0
        %1005 = vmatprep.subr.mxu0 0.0
        %1006 = vmatpush2.xpose.msra.mxu0 0.0
        %1007 = vmatprep.subr.mxu0 0.0
        %1008 = vmatpush2.xpose.msra.mxu0 0.0
        %1009 = vmatprep.subr.mxu0 0.0
        %1010 = vmatpush2.xpose.msra.mxu0 0.0
        %1011 = vmatprep.subr.mxu0 0.0
        %1012 = vmatpush2.xpose.msra.mxu0 0.0
        %1013 = vmatprep.subr.mxu0 0.0
        %1014 = vmatpush2.xpose.msra.mxu0 0.0
        %1015 = vmatprep.subr.mxu0 0.0
        %1016 = vmatpush2.xpose.msra.mxu0 0.0
        %1017 = vmatprep.subr.mxu0 0.0
        %1018 = vmatpush2.xpose.msra.mxu0 0.0
        %1019 = vmatprep.subr.mxu0 0.0
        %1020 = vmatpush2.xpose.msra.mxu0 0.0
        %1021 = vmatprep.subr.mxu0 0.0
        %1022 = vmatpush2.xpose.msra.mxu0 0.0
        %1023 = vmatprep.subr.mxu0 0.0
        %1024 = vmatpush2.xpose.msra.mxu0 0.0
        %1025 = vmatprep.subr.mxu0 0.0
        %1026 = vmatpush2.xpose.msra.mxu0 0.0
        %1027 = vmatprep.subr.mxu0 0.0
        %1028 = vmatpush2.xpose.msra.mxu0 0.0
        %1029 = vmatprep.mubr.f32.mxu0 0.0
        %1030 = vmatmul.mubr.f32.gmra.mxu0 %v933
        %v1031 = vpop.f32.mrf.mxu0
        %v1032 = vadd.f32 0.0, %v1031
        %v1033 = vpop.f32.mrf.mxu0
        %1034 = vmatprep.mubr.f32.mxu0 0.0
        %1035 = vmatmul.mubr.f32.gmra.mxu0 %v935
        %v1036 = vpop.f32.mrf.mxu0
        %v1037 = vadd.f32 0.0, %v1036
        %v1038 = vpop.f32.mrf.mxu0
        %1039 = vmatprep.mubr.f32.mxu0 0.0
        %1040 = vmatmul.mubr.f32.gmra.mxu0 %v937
        %v1041 = vpop.f32.mrf.mxu0
        %v1042 = vadd.f32 0.0, %v1041
        %v1043 = vpop.f32.mrf.mxu0
        %1044 = vmatprep.mubr.f32.mxu0 0.0
        %1045 = vmatmul.mubr.f32.gmra.mxu0 %v939
        %v1046 = vpop.f32.mrf.mxu0
        %v1047 = vadd.f32 0.0, %v1046
        %v1048 = vpop.f32.mrf.mxu0
        %1049 = vmatprep.mubr.f32.mxu0 0.0
        %1050 = vmatmul.mubr.f32.gmra.mxu0 %v941
        %v1051 = vpop.f32.mrf.mxu0
        %v1052 = vadd.f32 0.0, %v1051
        %v1053 = vpop.f32.mrf.mxu0
        %1054 = vmatprep.mubr.f32.mxu0 0.0
        %1055 = vmatmul.mubr.f32.gmra.mxu0 %v943
        %v1056 = vpop.f32.mrf.mxu0
        %v1057 = vadd.f32 0.0, %v1056
        %v1058 = vpop.f32.mrf.mxu0
        %1059 = vmatprep.mubr.f32.mxu0 0.0
        %1060 = vmatmul.mubr.f32.gmra.mxu0 %v945
        %v1061 = vpop.f32.mrf.mxu0
        %v1062 = vadd.f32 0.0, %v1061
        %v1063 = vpop.f32.mrf.mxu0
        %1064 = vmatprep.mubr.f32.mxu0 0.0
        %1065 = vmatmul.mubr.f32.gmra.mxu0 %v947
        %v1066 = vpop.f32.mrf.mxu0
        %v1067 = vadd.f32 0.0, %v1066
        %v1068 = vpop.f32.mrf.mxu0
        %1069 = vdwg.mxu0
        %v1070 = vsel %vm683, %v1032, -inf
        %1071 = vmax.xlane.f32.xlu0 %v1070
        %v1072 = vpop.xlane.xlu0 %1071
        %v1073 = vsel %vm683, %v1037, -inf
        %1074 = vmax.xlane.f32.xlu0 %v1073
        %v1075 = vpop.xlane.xlu0 %1074
        %v1076 = vsel %vm683, %v1042, -inf
        %1077 = vmax.xlane.f32.xlu0 %v1076
        %v1078 = vpop.xlane.xlu0 %1077
        %v1079 = vsel %vm683, %v1047, -inf
        %1080 = vmax.xlane.f32.xlu0 %v1079
        %v1081 = vpop.xlane.xlu0 %1080
        %v1082 = vsel %vm683, %v1052, -inf
        %1083 = vmax.xlane.f32.xlu0 %v1082
        %v1084 = vpop.xlane.xlu0 %1083
        %v1085 = vsel %vm683, %v1057, -inf
        %1086 = vmax.xlane.f32.xlu0 %v1085
        %v1087 = vpop.xlane.xlu0 %1086
        %v1088 = vsel %vm683, %v1062, -inf
        %1089 = vmax.xlane.f32.xlu0 %v1088
        %v1090 = vpop.xlane.xlu0 %1089
        %v1091 = vsel %vm683, %v1067, -inf
        %1092 = vmax.xlane.f32.xlu0 %v1091
        %v1093 = vpop.xlane.xlu0 %1092
        %v1094 = vsub.f32 %v1032, %v1072
        %v1095 = vsub.f32 %v1037, %v1075
        %v1096 = vsub.f32 %v1042, %v1078
        %v1097 = vsub.f32 %v1047, %v1081
        %v1098 = vsub.f32 %v1052, %v1084
        %v1099 = vsub.f32 %v1057, %v1087
        %v1100 = vsub.f32 %v1062, %v1090
        %v1101 = vsub.f32 %v1067, %v1093
        %v1102 = vmul.f32 %v1094, 1.442695
        %v1103 = vpow.pop %v1102
        %v1104 = vmul.f32 %v1095, 1.442695
        %v1105 = vpow.pop %v1104
        %v1106 = vmul.f32 %v1096, 1.442695
        %v1107 = vpow.pop %v1106
        %v1108 = vmul.f32 %v1097, 1.442695
        %v1109 = vpow.pop %v1108
        %v1110 = vmul.f32 %v1098, 1.442695
        %v1111 = vpow.pop %v1110
        %v1112 = vmul.f32 %v1099, 1.442695
        %v1113 = vpow.pop %v1112
        %v1114 = vmul.f32 %v1100, 1.442695
        %v1115 = vpow.pop %v1114
        %v1116 = vmul.f32 %v1101, 1.442695
        %v1117 = vpow.pop %v1116
        %v1118 = vsel %vm683, %v1103, 0.0
        %1119 = vadd.xlane.f32.xlu0 %v1118
        %v1120 = vpop.xlane.xlu0 %1119
        %v1121 = vsel %vm683, %v1105, 0.0
        %1122 = vadd.xlane.f32.xlu0 %v1121
        %v1123 = vpop.xlane.xlu0 %1122
        %v1124 = vsel %vm683, %v1107, 0.0
        %1125 = vadd.xlane.f32.xlu0 %v1124
        %v1126 = vpop.xlane.xlu0 %1125
        %v1127 = vsel %vm683, %v1109, 0.0
        %1128 = vadd.xlane.f32.xlu0 %v1127
        %v1129 = vpop.xlane.xlu0 %1128
        %v1130 = vsel %vm683, %v1111, 0.0
        %1131 = vadd.xlane.f32.xlu0 %v1130
        %v1132 = vpop.xlane.xlu0 %1131
        %v1133 = vsel %vm683, %v1113, 0.0
        %1134 = vadd.xlane.f32.xlu0 %v1133
        %v1135 = vpop.xlane.xlu0 %1134
        %v1136 = vsel %vm683, %v1115, 0.0
        %1137 = vadd.xlane.f32.xlu0 %v1136
        %v1138 = vpop.xlane.xlu0 %1137
        %v1139 = vsel %vm683, %v1117, 0.0
        %1140 = vadd.xlane.f32.xlu0 %v1139
        %v1141 = vpop.xlane.xlu0 %1140
        %1150 = vrot.lane.b32.xlu0 %v483, 112
        %v1151 = vpop.permute.xlu0 %1150
        %1152 = vrot.lane.b32.xlu0 %v488, 112
        %v1153 = vpop.permute.xlu0 %1152
        %1154 = vrot.lane.b32.xlu0 %v493, 112
        %v1155 = vpop.permute.xlu0 %1154
        %1156 = vrot.lane.b32.xlu0 %v498, 112
        %v1157 = vpop.permute.xlu0 %1156
        %1158 = vrot.lane.b32.xlu0 %v503, 112
        %v1159 = vpop.permute.xlu0 %1158
        %1160 = vrot.lane.b32.xlu0 %v508, 112
        %v1161 = vpop.permute.xlu0 %1160
        %1162 = vrot.lane.b32.xlu0 %v513, 112
        %v1163 = vpop.permute.xlu0 %1162
        %1164 = vrot.lane.b32.xlu0 %v518, 112
        %v1165 = vpop.permute.xlu0 %1164
        %v1175 = vsel %vm683, %v1103, 0
        %v1178 = vsel %vm683, %v1105, 0
        %v1181 = vsel %vm683, %v1107, 0
        %v1184 = vsel %vm683, %v1109, 0
        %v1187 = vsel %vm683, %v1111, 0
        %v1190 = vsel %vm683, %v1113, 0
        %v1193 = vsel %vm683, %v1115, 0
        %v1196 = vsel %vm683, %v1117, 0
        %1198 = vmatprep.subr.mxu0 0.0
        %1199 = vmatpush1.msra.mxu0 0.0
        %1200 = vmatprep.subr.mxu0 0.0
        %1201 = vmatpush1.msra.mxu0 0.0
        %1202 = vmatprep.subr.mxu0 0.0
        %1203 = vmatpush1.msra.mxu0 0.0
        %1204 = vmatprep.subr.mxu0 0.0
        %1205 = vmatpush1.msra.mxu0 0.0
        %1206 = vmatprep.subr.mxu0 0.0
        %1207 = vmatpush1.msra.mxu0 0.0
        %1208 = vmatprep.subr.mxu0 0.0
        %1209 = vmatpush1.msra.mxu0 0.0
        %1210 = vmatprep.subr.mxu0 0.0
        %1211 = vmatpush1.msra.mxu0 0.0
        %1212 = vmatprep.subr.mxu0 0.0
        %1213 = vmatpush1.msra.mxu0 0.0
        %1214 = vmatprep.subr.mxu0 0.0
        %1215 = vmatpush1.msra.mxu0 %v1165
        %1216 = vmatprep.subr.mxu0 0.0
        %1217 = vmatpush1.msra.mxu0 %v1163
        %1218 = vmatprep.subr.mxu0 0.0
        %1219 = vmatpush1.msra.mxu0 %v1161
        %1220 = vmatprep.subr.mxu0 0.0
        %1221 = vmatpush1.msra.mxu0 %v1159
        %1222 = vmatprep.subr.mxu0 0.0
        %1223 = vmatpush1.msra.mxu0 %v1157
        %1224 = vmatprep.subr.mxu0 0.0
        %1225 = vmatpush1.msra.mxu0 %v1155
        %1226 = vmatprep.subr.mxu0 0.0
        %1227 = vmatpush1.msra.mxu0 %v1153
        %1228 = vmatprep.subr.mxu0 0.0
        %1229 = vmatpush1.msra.mxu0 %v1151
        %1230 = vmatprep.subr.mxu0 0.0
        %1231 = vmatpush2.msra.mxu0 0.0
        %1232 = vmatprep.subr.mxu0 0.0
        %1233 = vmatpush2.msra.mxu0 0.0
        %1234 = vmatprep.subr.mxu0 0.0
        %1235 = vmatpush2.msra.mxu0 0.0
        %1236 = vmatprep.subr.mxu0 0.0
        %1237 = vmatpush2.msra.mxu0 0.0
        %1238 = vmatprep.subr.mxu0 0.0
        %1239 = vmatpush2.msra.mxu0 0.0
        %1240 = vmatprep.subr.mxu0 0.0
        %1241 = vmatpush2.msra.mxu0 0.0
        %1242 = vmatprep.subr.mxu0 0.0
        %1243 = vmatpush2.msra.mxu0 0.0
        %1244 = vmatprep.subr.mxu0 0.0
        %1245 = vmatpush2.msra.mxu0 0.0
        %1246 = vmatprep.subr.mxu0 0.0
        %1247 = vmatpush2.msra.mxu0 0.0
        %1248 = vmatprep.subr.mxu0 0.0
        %1249 = vmatpush2.msra.mxu0 0.0
        %1250 = vmatprep.subr.mxu0 0.0
        %1251 = vmatpush2.msra.mxu0 0.0
        %1252 = vmatprep.subr.mxu0 0.0
        %1253 = vmatpush2.msra.mxu0 0.0
        %1254 = vmatprep.subr.mxu0 0.0
        %1255 = vmatpush2.msra.mxu0 0.0
        %1256 = vmatprep.subr.mxu0 0.0
        %1257 = vmatpush2.msra.mxu0 0.0
        %1258 = vmatprep.subr.mxu0 0.0
        %1259 = vmatpush2.msra.mxu0 0.0
        %1260 = vmatprep.subr.mxu0 0.0
        %1261 = vmatpush2.msra.mxu0 0.0
        %1262 = vmatprep.mubr.f32.mxu0 0.0
        %1263 = vmatmul.mubr.f32.gmra.mxu0 %v1175
        %v1264 = vpop.f32.mrf.mxu0
        %v1265 = vadd.f32 0.0, %v1264
        %v1266 = vpop.f32.mrf.mxu0
        %1267 = vmatprep.mubr.f32.mxu0 0.0
        %1268 = vmatmul.mubr.f32.gmra.mxu0 %v1178
        %v1269 = vpop.f32.mrf.mxu0
        %v1270 = vadd.f32 0.0, %v1269
        %v1271 = vpop.f32.mrf.mxu0
        %1272 = vmatprep.mubr.f32.mxu0 0.0
        %1273 = vmatmul.mubr.f32.gmra.mxu0 %v1181
        %v1274 = vpop.f32.mrf.mxu0
        %v1275 = vadd.f32 0.0, %v1274
        %v1276 = vpop.f32.mrf.mxu0
        %1277 = vmatprep.mubr.f32.mxu0 0.0
        %1278 = vmatmul.mubr.f32.gmra.mxu0 %v1184
        %v1279 = vpop.f32.mrf.mxu0
        %v1280 = vadd.f32 0.0, %v1279
        %v1281 = vpop.f32.mrf.mxu0
        %1282 = vmatprep.mubr.f32.mxu0 0.0
        %1283 = vmatmul.mubr.f32.gmra.mxu0 %v1187
        %v1284 = vpop.f32.mrf.mxu0
        %v1285 = vadd.f32 0.0, %v1284
        %v1286 = vpop.f32.mrf.mxu0
        %1287 = vmatprep.mubr.f32.mxu0 0.0
        %1288 = vmatmul.mubr.f32.gmra.mxu0 %v1190
        %v1289 = vpop.f32.mrf.mxu0
        %v1290 = vadd.f32 0.0, %v1289
        %v1291 = vpop.f32.mrf.mxu0
        %1292 = vmatprep.mubr.f32.mxu0 0.0
        %1293 = vmatmul.mubr.f32.gmra.mxu0 %v1193
        %v1294 = vpop.f32.mrf.mxu0
        %v1295 = vadd.f32 0.0, %v1294
        %v1296 = vpop.f32.mrf.mxu0
        %1297 = vmatprep.mubr.f32.mxu0 0.0
        %1298 = vmatmul.mubr.f32.gmra.mxu0 %v1196
        %v1299 = vpop.f32.mrf.mxu0
        %v1300 = vadd.f32 0.0, %v1299
        %v1301 = vpop.f32.mrf.mxu0
        %1302 = vdwg.mxu0
        %v1303 = vrcp.pop %v1120
        %v1304 = vrcp.pop %v1123
        %v1305 = vrcp.pop %v1126
        %v1306 = vrcp.pop %v1129
        %v1307 = vrcp.pop %v1132
        %v1308 = vrcp.pop %v1135
        %v1309 = vrcp.pop %v1138
        %v1310 = vrcp.pop %v1141
        %v1311 = vmul.f32 %v1265, %v1303
        %v1312 = vmul.f32 %v1270, %v1304
        %v1313 = vmul.f32 %v1275, %v1305
        %v1314 = vmul.f32 %v1280, %v1306
        %v1315 = vmul.f32 %v1285, %v1307
        %v1316 = vmul.f32 %v1290, %v1308
        %v1317 = vmul.f32 %v1295, %v1309
        %v1318 = vmul.f32 %v1300, %v1310
        %1319 = vrot.lane.b32.xlu0 %v521, 96
        %v1320 = vpop.permute.xlu0 %1319
        %1321 = vrot.lane.b32.xlu0 %v522, 96
        %v1322 = vpop.permute.xlu0 %1321
        %1323 = vrot.lane.b32.xlu0 %v523, 96
        %v1324 = vpop.permute.xlu0 %1323
        %1325 = vrot.lane.b32.xlu0 %v524, 96
        %v1326 = vpop.permute.xlu0 %1325
        %1327 = vrot.lane.b32.xlu0 %v525, 96
        %v1328 = vpop.permute.xlu0 %1327
        %1329 = vrot.lane.b32.xlu0 %v526, 96
        %v1330 = vpop.permute.xlu0 %1329
        %1331 = vrot.lane.b32.xlu0 %v527, 96
        %v1332 = vpop.permute.xlu0 %1331
        %1333 = vrot.lane.b32.xlu0 %v528, 96
        %v1334 = vpop.permute.xlu0 %1333
        %1335 = vrot.lane.b32.xlu0 %v372, 96
        %v1336 = vpop.permute.xlu0 %1335
        %1337 = vrot.lane.b32.xlu0 %v378, 96
        %v1338 = vpop.permute.xlu0 %1337
        %1339 = vrot.lane.b32.xlu0 %v384, 96
        %v1340 = vpop.permute.xlu0 %1339
        %1341 = vrot.lane.b32.xlu0 %v390, 96
        %v1342 = vpop.permute.xlu0 %1341
        %1343 = vrot.lane.b32.xlu0 %v396, 96
        %v1344 = vpop.permute.xlu0 %1343
        %1345 = vrot.lane.b32.xlu0 %v402, 96
        %v1346 = vpop.permute.xlu0 %1345
        %1347 = vrot.lane.b32.xlu0 %v408, 96
        %v1348 = vpop.permute.xlu0 %1347
        %1349 = vrot.lane.b32.xlu0 %v414, 96
        %v1350 = vpop.permute.xlu0 %1349
        %v1351 = vsel %vm529, %v1320, 0
        %v1353 = vsel %vm529, %v1322, 0
        %v1355 = vsel %vm529, %v1324, 0
        %v1357 = vsel %vm529, %v1326, 0
        %v1359 = vsel %vm529, %v1328, 0
        %v1361 = vsel %vm529, %v1330, 0
        %v1363 = vsel %vm529, %v1332, 0
        %v1365 = vsel %vm529, %v1334, 0
        %v1367 = vsel %vm529, %v1336, 0
        %v1369 = vsel %vm529, %v1338, 0
        %v1371 = vsel %vm529, %v1340, 0
        %v1373 = vsel %vm529, %v1342, 0
        %v1375 = vsel %vm529, %v1344, 0
        %v1377 = vsel %vm529, %v1346, 0
        %v1379 = vsel %vm529, %v1348, 0
        %v1381 = vsel %vm529, %v1350, 0
        %1383 = vmatprep.subr.mxu0 0.0
        %1384 = vmatpush1.xpose.msra.mxu0 0.0
        %1385 = vmatprep.subr.mxu0 0.0
        %1386 = vmatpush1.xpose.msra.mxu0 0.0
        %1387 = vmatprep.subr.mxu0 0.0
        %1388 = vmatpush1.xpose.msra.mxu0 0.0
        %1389 = vmatprep.subr.mxu0 0.0
        %1390 = vmatpush1.xpose.msra.mxu0 0.0
        %1391 = vmatprep.subr.mxu0 0.0
        %1392 = vmatpush1.xpose.msra.mxu0 0.0
        %1393 = vmatprep.subr.mxu0 0.0
        %1394 = vmatpush1.xpose.msra.mxu0 0.0
        %1395 = vmatprep.subr.mxu0 0.0
        %1396 = vmatpush1.xpose.msra.mxu0 0.0
        %1397 = vmatprep.subr.mxu0 0.0
        %1398 = vmatpush1.xpose.msra.mxu0 0.0
        %1399 = vmatprep.subr.mxu0 0.0
        %1400 = vmatpush1.xpose.msra.mxu0 %v1381
        %1401 = vmatprep.subr.mxu0 0.0
        %1402 = vmatpush1.xpose.msra.mxu0 %v1379
        %1403 = vmatprep.subr.mxu0 0.0
        %1404 = vmatpush1.xpose.msra.mxu0 %v1377
        %1405 = vmatprep.subr.mxu0 0.0
        %1406 = vmatpush1.xpose.msra.mxu0 %v1375
        %1407 = vmatprep.subr.mxu0 0.0
        %1408 = vmatpush1.xpose.msra.mxu0 %v1373
        %1409 = vmatprep.subr.mxu0 0.0
        %1410 = vmatpush1.xpose.msra.mxu0 %v1371
        %1411 = vmatprep.subr.mxu0 0.0
        %1412 = vmatpush1.xpose.msra.mxu0 %v1369
        %1413 = vmatprep.subr.mxu0 0.0
        %1414 = vmatpush1.xpose.msra.mxu0 %v1367
        %1415 = vmatprep.subr.mxu0 0.0
        %1416 = vmatpush2.xpose.msra.mxu0 0.0
        %1417 = vmatprep.subr.mxu0 0.0
        %1418 = vmatpush2.xpose.msra.mxu0 0.0
        %1419 = vmatprep.subr.mxu0 0.0
        %1420 = vmatpush2.xpose.msra.mxu0 0.0
        %1421 = vmatprep.subr.mxu0 0.0
        %1422 = vmatpush2.xpose.msra.mxu0 0.0
        %1423 = vmatprep.subr.mxu0 0.0
        %1424 = vmatpush2.xpose.msra.mxu0 0.0
        %1425 = vmatprep.subr.mxu0 0.0
        %1426 = vmatpush2.xpose.msra.mxu0 0.0
        %1427 = vmatprep.subr.mxu0 0.0
        %1428 = vmatpush2.xpose.msra.mxu0 0.0
        %1429 = vmatprep.subr.mxu0 0.0
        %1430 = vmatpush2.xpose.msra.mxu0 0.0
        %1431 = vmatprep.subr.mxu0 0.0
        %1432 = vmatpush2.xpose.msra.mxu0 0.0
        %1433 = vmatprep.subr.mxu0 0.0
        %1434 = vmatpush2.xpose.msra.mxu0 0.0
        %1435 = vmatprep.subr.mxu0 0.0
        %1436 = vmatpush2.xpose.msra.mxu0 0.0
        %1437 = vmatprep.subr.mxu0 0.0
        %1438 = vmatpush2.xpose.msra.mxu0 0.0
        %1439 = vmatprep.subr.mxu0 0.0
        %1440 = vmatpush2.xpose.msra.mxu0 0.0
        %1441 = vmatprep.subr.mxu0 0.0
        %1442 = vmatpush2.xpose.msra.mxu0 0.0
        %1443 = vmatprep.subr.mxu0 0.0
        %1444 = vmatpush2.xpose.msra.mxu0 0.0
        %1445 = vmatprep.subr.mxu0 0.0
        %1446 = vmatpush2.xpose.msra.mxu0 0.0
        %1447 = vmatprep.mubr.f32.mxu0 0.0
        %1448 = vmatmul.mubr.f32.gmra.mxu0 %v1351
        %v1449 = vpop.f32.mrf.mxu0
        %v1450 = vadd.f32 0.0, %v1449
        %v1451 = vpop.f32.mrf.mxu0
        %1452 = vmatprep.mubr.f32.mxu0 0.0
        %1453 = vmatmul.mubr.f32.gmra.mxu0 %v1353
        %v1454 = vpop.f32.mrf.mxu0
        %v1455 = vadd.f32 0.0, %v1454
        %v1456 = vpop.f32.mrf.mxu0
        %1457 = vmatprep.mubr.f32.mxu0 0.0
        %1458 = vmatmul.mubr.f32.gmra.mxu0 %v1355
        %v1459 = vpop.f32.mrf.mxu0
        %v1460 = vadd.f32 0.0, %v1459
        %v1461 = vpop.f32.mrf.mxu0
        %1462 = vmatprep.mubr.f32.mxu0 0.0
        %1463 = vmatmul.mubr.f32.gmra.mxu0 %v1357
        %v1464 = vpop.f32.mrf.mxu0
        %v1465 = vadd.f32 0.0, %v1464
        %v1466 = vpop.f32.mrf.mxu0
        %1467 = vmatprep.mubr.f32.mxu0 0.0
        %1468 = vmatmul.mubr.f32.gmra.mxu0 %v1359
        %v1469 = vpop.f32.mrf.mxu0
        %v1470 = vadd.f32 0.0, %v1469
        %v1471 = vpop.f32.mrf.mxu0
        %1472 = vmatprep.mubr.f32.mxu0 0.0
        %1473 = vmatmul.mubr.f32.gmra.mxu0 %v1361
        %v1474 = vpop.f32.mrf.mxu0
        %v1475 = vadd.f32 0.0, %v1474
        %v1476 = vpop.f32.mrf.mxu0
        %1477 = vmatprep.mubr.f32.mxu0 0.0
        %1478 = vmatmul.mubr.f32.gmra.mxu0 %v1363
        %v1479 = vpop.f32.mrf.mxu0
        %v1480 = vadd.f32 0.0, %v1479
        %v1481 = vpop.f32.mrf.mxu0
        %1482 = vmatprep.mubr.f32.mxu0 0.0
        %1483 = vmatmul.mubr.f32.gmra.mxu0 %v1365
        %v1484 = vpop.f32.mrf.mxu0
        %v1485 = vadd.f32 0.0, %v1484
        %v1486 = vpop.f32.mrf.mxu0
        %1487 = vdwg.mxu0
        %v1488 = vsel %vm683, %v1450, -inf
        %1489 = vmax.xlane.f32.xlu0 %v1488
        %v1490 = vpop.xlane.xlu0 %1489
        %v1491 = vsel %vm683, %v1455, -inf
        %1492 = vmax.xlane.f32.xlu0 %v1491
        %v1493 = vpop.xlane.xlu0 %1492
        %v1494 = vsel %vm683, %v1460, -inf
        %1495 = vmax.xlane.f32.xlu0 %v1494
        %v1496 = vpop.xlane.xlu0 %1495
        %v1497 = vsel %vm683, %v1465, -inf
        %1498 = vmax.xlane.f32.xlu0 %v1497
        %v1499 = vpop.xlane.xlu0 %1498
        %v1500 = vsel %vm683, %v1470, -inf
        %1501 = vmax.xlane.f32.xlu0 %v1500
        %v1502 = vpop.xlane.xlu0 %1501
        %v1503 = vsel %vm683, %v1475, -inf
        %1504 = vmax.xlane.f32.xlu0 %v1503
        %v1505 = vpop.xlane.xlu0 %1504
        %v1506 = vsel %vm683, %v1480, -inf
        %1507 = vmax.xlane.f32.xlu0 %v1506
        %v1508 = vpop.xlane.xlu0 %1507
        %v1509 = vsel %vm683, %v1485, -inf
        %1510 = vmax.xlane.f32.xlu0 %v1509
        %v1511 = vpop.xlane.xlu0 %1510
        %v1512 = vsub.f32 %v1450, %v1490
        %v1513 = vsub.f32 %v1455, %v1493
        %v1514 = vsub.f32 %v1460, %v1496
        %v1515 = vsub.f32 %v1465, %v1499
        %v1516 = vsub.f32 %v1470, %v1502
        %v1517 = vsub.f32 %v1475, %v1505
        %v1518 = vsub.f32 %v1480, %v1508
        %v1519 = vsub.f32 %v1485, %v1511
        %v1520 = vmul.f32 %v1512, 1.442695
        %v1521 = vpow.pop %v1520
        %v1522 = vmul.f32 %v1513, 1.442695
        %v1523 = vpow.pop %v1522
        %v1524 = vmul.f32 %v1514, 1.442695
        %v1525 = vpow.pop %v1524
        %v1526 = vmul.f32 %v1515, 1.442695
        %v1527 = vpow.pop %v1526
        %v1528 = vmul.f32 %v1516, 1.442695
        %v1529 = vpow.pop %v1528
        %v1530 = vmul.f32 %v1517, 1.442695
        %v1531 = vpow.pop %v1530
        %v1532 = vmul.f32 %v1518, 1.442695
        %v1533 = vpow.pop %v1532
        %v1534 = vmul.f32 %v1519, 1.442695
        %v1535 = vpow.pop %v1534
        %v1536 = vsel %vm683, %v1521, 0.0
        %1537 = vadd.xlane.f32.xlu0 %v1536
        %v1538 = vpop.xlane.xlu0 %1537
        %v1539 = vsel %vm683, %v1523, 0.0
        %1540 = vadd.xlane.f32.xlu0 %v1539
        %v1541 = vpop.xlane.xlu0 %1540
        %v1542 = vsel %vm683, %v1525, 0.0
        %1543 = vadd.xlane.f32.xlu0 %v1542
        %v1544 = vpop.xlane.xlu0 %1543
        %v1545 = vsel %vm683, %v1527, 0.0
        %1546 = vadd.xlane.f32.xlu0 %v1545
        %v1547 = vpop.xlane.xlu0 %1546
        %v1548 = vsel %vm683, %v1529, 0.0
        %1549 = vadd.xlane.f32.xlu0 %v1548
        %v1550 = vpop.xlane.xlu0 %1549
        %v1551 = vsel %vm683, %v1531, 0.0
        %1552 = vadd.xlane.f32.xlu0 %v1551
        %v1553 = vpop.xlane.xlu0 %1552
        %v1554 = vsel %vm683, %v1533, 0.0
        %1555 = vadd.xlane.f32.xlu0 %v1554
        %v1556 = vpop.xlane.xlu0 %1555
        %v1557 = vsel %vm683, %v1535, 0.0
        %1558 = vadd.xlane.f32.xlu0 %v1557
        %v1559 = vpop.xlane.xlu0 %1558
        %1560 = vrot.lane.b32.xlu0 %v483, 96
        %v1561 = vpop.permute.xlu0 %1560
        %1562 = vrot.lane.b32.xlu0 %v488, 96
        %v1563 = vpop.permute.xlu0 %1562
        %1564 = vrot.lane.b32.xlu0 %v493, 96
        %v1565 = vpop.permute.xlu0 %1564
        %1566 = vrot.lane.b32.xlu0 %v498, 96
        %v1567 = vpop.permute.xlu0 %1566
        %1568 = vrot.lane.b32.xlu0 %v503, 96
        %v1569 = vpop.permute.xlu0 %1568
        %1570 = vrot.lane.b32.xlu0 %v508, 96
        %v1571 = vpop.permute.xlu0 %1570
        %1572 = vrot.lane.b32.xlu0 %v513, 96
        %v1573 = vpop.permute.xlu0 %1572
        %1574 = vrot.lane.b32.xlu0 %v518, 96
        %v1575 = vpop.permute.xlu0 %1574
        %v1585 = vsel %vm683, %v1521, 0
        %v1588 = vsel %vm683, %v1523, 0
        %v1591 = vsel %vm683, %v1525, 0
        %v1594 = vsel %vm683, %v1527, 0
        %v1597 = vsel %vm683, %v1529, 0
        %v1600 = vsel %vm683, %v1531, 0
        %v1603 = vsel %vm683, %v1533, 0
        %v1606 = vsel %vm683, %v1535, 0
        %1608 = vmatprep.subr.mxu0 0.0
        %1609 = vmatpush1.msra.mxu0 0.0
        %1610 = vmatprep.subr.mxu0 0.0
        %1611 = vmatpush1.msra.mxu0 0.0
        %1612 = vmatprep.subr.mxu0 0.0
        %1613 = vmatpush1.msra.mxu0 0.0
        %1614 = vmatprep.subr.mxu0 0.0
        %1615 = vmatpush1.msra.mxu0 0.0
        %1616 = vmatprep.subr.mxu0 0.0
        %1617 = vmatpush1.msra.mxu0 0.0
        %1618 = vmatprep.subr.mxu0 0.0
        %1619 = vmatpush1.msra.mxu0 0.0
        %1620 = vmatprep.subr.mxu0 0.0
        %1621 = vmatpush1.msra.mxu0 0.0
        %1622 = vmatprep.subr.mxu0 0.0
        %1623 = vmatpush1.msra.mxu0 0.0
        %1624 = vmatprep.subr.mxu0 0.0
        %1625 = vmatpush1.msra.mxu0 %v1575
        %1626 = vmatprep.subr.mxu0 0.0
        %1627 = vmatpush1.msra.mxu0 %v1573
        %1628 = vmatprep.subr.mxu0 0.0
        %1629 = vmatpush1.msra.mxu0 %v1571
        %1630 = vmatprep.subr.mxu0 0.0
        %1631 = vmatpush1.msra.mxu0 %v1569
        %1632 = vmatprep.subr.mxu0 0.0
        %1633 = vmatpush1.msra.mxu0 %v1567
        %1634 = vmatprep.subr.mxu0 0.0
        %1635 = vmatpush1.msra.mxu0 %v1565
        %1636 = vmatprep.subr.mxu0 0.0
        %1637 = vmatpush1.msra.mxu0 %v1563
        %1638 = vmatprep.subr.mxu0 0.0
        %1639 = vmatpush1.msra.mxu0 %v1561
        %1640 = vmatprep.subr.mxu0 0.0
        %1641 = vmatpush2.msra.mxu0 0.0
        %1642 = vmatprep.subr.mxu0 0.0
        %1643 = vmatpush2.msra.mxu0 0.0
        %1644 = vmatprep.subr.mxu0 0.0
        %1645 = vmatpush2.msra.mxu0 0.0
        %1646 = vmatprep.subr.mxu0 0.0
        %1647 = vmatpush2.msra.mxu0 0.0
        %1648 = vmatprep.subr.mxu0 0.0
        %1649 = vmatpush2.msra.mxu0 0.0
        %1650 = vmatprep.subr.mxu0 0.0
        %1651 = vmatpush2.msra.mxu0 0.0
        %1652 = vmatprep.subr.mxu0 0.0
        %1653 = vmatpush2.msra.mxu0 0.0
        %1654 = vmatprep.subr.mxu0 0.0
        %1655 = vmatpush2.msra.mxu0 0.0
        %1656 = vmatprep.subr.mxu0 0.0
        %1657 = vmatpush2.msra.mxu0 0.0
        %1658 = vmatprep.subr.mxu0 0.0
        %1659 = vmatpush2.msra.mxu0 0.0
        %1660 = vmatprep.subr.mxu0 0.0
        %1661 = vmatpush2.msra.mxu0 0.0
        %1662 = vmatprep.subr.mxu0 0.0
        %1663 = vmatpush2.msra.mxu0 0.0
        %1664 = vmatprep.subr.mxu0 0.0
        %1665 = vmatpush2.msra.mxu0 0.0
        %1666 = vmatprep.subr.mxu0 0.0
        %1667 = vmatpush2.msra.mxu0 0.0
        %1668 = vmatprep.subr.mxu0 0.0
        %1669 = vmatpush2.msra.mxu0 0.0
        %1670 = vmatprep.subr.mxu0 0.0
        %1671 = vmatpush2.msra.mxu0 0.0
        %1672 = vmatprep.mubr.f32.mxu0 0.0
        %1673 = vmatmul.mubr.f32.gmra.mxu0 %v1585
        %v1674 = vpop.f32.mrf.mxu0
        %v1675 = vadd.f32 0.0, %v1674
        %v1676 = vpop.f32.mrf.mxu0
        %1677 = vmatprep.mubr.f32.mxu0 0.0
        %1678 = vmatmul.mubr.f32.gmra.mxu0 %v1588
        %v1679 = vpop.f32.mrf.mxu0
        %v1680 = vadd.f32 0.0, %v1679
        %v1681 = vpop.f32.mrf.mxu0
        %1682 = vmatprep.mubr.f32.mxu0 0.0
        %1683 = vmatmul.mubr.f32.gmra.mxu0 %v1591
        %v1684 = vpop.f32.mrf.mxu0
        %v1685 = vadd.f32 0.0, %v1684
        %v1686 = vpop.f32.mrf.mxu0
        %1687 = vmatprep.mubr.f32.mxu0 0.0
        %1688 = vmatmul.mubr.f32.gmra.mxu0 %v1594
        %v1689 = vpop.f32.mrf.mxu0
        %v1690 = vadd.f32 0.0, %v1689
        %v1691 = vpop.f32.mrf.mxu0
        %1692 = vmatprep.mubr.f32.mxu0 0.0
        %1693 = vmatmul.mubr.f32.gmra.mxu0 %v1597
        %v1694 = vpop.f32.mrf.mxu0
        %v1695 = vadd.f32 0.0, %v1694
        %v1696 = vpop.f32.mrf.mxu0
        %1697 = vmatprep.mubr.f32.mxu0 0.0
        %1698 = vmatmul.mubr.f32.gmra.mxu0 %v1600
        %v1699 = vpop.f32.mrf.mxu0
        %v1700 = vadd.f32 0.0, %v1699
        %v1701 = vpop.f32.mrf.mxu0
        %1702 = vmatprep.mubr.f32.mxu0 0.0
        %1703 = vmatmul.mubr.f32.gmra.mxu0 %v1603
        %v1704 = vpop.f32.mrf.mxu0
        %v1705 = vadd.f32 0.0, %v1704
        %v1706 = vpop.f32.mrf.mxu0
        %1707 = vmatprep.mubr.f32.mxu0 0.0
        %1708 = vmatmul.mubr.f32.gmra.mxu0 %v1606
        %v1709 = vpop.f32.mrf.mxu0
        %v1710 = vadd.f32 0.0, %v1709
        %v1711 = vpop.f32.mrf.mxu0
        %1712 = vdwg.mxu0
        %v1713 = vrcp.pop %v1538
        %v1714 = vrcp.pop %v1541
        %v1715 = vrcp.pop %v1544
        %v1716 = vrcp.pop %v1547
        %v1717 = vrcp.pop %v1550
        %v1718 = vrcp.pop %v1553
        %v1719 = vrcp.pop %v1556
        %v1720 = vrcp.pop %v1559
        %v1721 = vmul.f32 %v1675, %v1713
        %v1722 = vmul.f32 %v1680, %v1714
        %v1723 = vmul.f32 %v1685, %v1715
        %v1724 = vmul.f32 %v1690, %v1716
        %v1725 = vmul.f32 %v1695, %v1717
        %v1726 = vmul.f32 %v1700, %v1718
        %v1727 = vmul.f32 %v1705, %v1719
        %v1728 = vmul.f32 %v1710, %v1720
        %1729 = vrot.lane.b32.xlu0 %v521, 80
        %v1730 = vpop.permute.xlu0 %1729
        %1731 = vrot.lane.b32.xlu0 %v522, 80
        %v1732 = vpop.permute.xlu0 %1731
        %1733 = vrot.lane.b32.xlu0 %v523, 80
        %v1734 = vpop.permute.xlu0 %1733
        %1735 = vrot.lane.b32.xlu0 %v524, 80
        %v1736 = vpop.permute.xlu0 %1735
        %1737 = vrot.lane.b32.xlu0 %v525, 80
        %v1738 = vpop.permute.xlu0 %1737
        %1739 = vrot.lane.b32.xlu0 %v526, 80
        %v1740 = vpop.permute.xlu0 %1739
        %1741 = vrot.lane.b32.xlu0 %v527, 80
        %v1742 = vpop.permute.xlu0 %1741
        %1743 = vrot.lane.b32.xlu0 %v528, 80
        %v1744 = vpop.permute.xlu0 %1743
        %1745 = vrot.lane.b32.xlu0 %v372, 80
        %v1746 = vpop.permute.xlu0 %1745
        %1747 = vrot.lane.b32.xlu0 %v378, 80
        %v1748 = vpop.permute.xlu0 %1747
        %1749 = vrot.lane.b32.xlu0 %v384, 80
        %v1750 = vpop.permute.xlu0 %1749
        %1751 = vrot.lane.b32.xlu0 %v390, 80
        %v1752 = vpop.permute.xlu0 %1751
        %1753 = vrot.lane.b32.xlu0 %v396, 80
        %v1754 = vpop.permute.xlu0 %1753
        %1755 = vrot.lane.b32.xlu0 %v402, 80
        %v1756 = vpop.permute.xlu0 %1755
        %1757 = vrot.lane.b32.xlu0 %v408, 80
        %v1758 = vpop.permute.xlu0 %1757
        %1759 = vrot.lane.b32.xlu0 %v414, 80
        %v1760 = vpop.permute.xlu0 %1759
        %v1761 = vsel %vm529, %v1730, 0
        %v1763 = vsel %vm529, %v1732, 0
        %v1765 = vsel %vm529, %v1734, 0
        %v1767 = vsel %vm529, %v1736, 0
        %v1769 = vsel %vm529, %v1738, 0
        %v1771 = vsel %vm529, %v1740, 0
        %v1773 = vsel %vm529, %v1742, 0
        %v1775 = vsel %vm529, %v1744, 0
        %v1777 = vsel %vm529, %v1746, 0
        %v1779 = vsel %vm529, %v1748, 0
        %v1781 = vsel %vm529, %v1750, 0
        %v1783 = vsel %vm529, %v1752, 0
        %v1785 = vsel %vm529, %v1754, 0
        %v1787 = vsel %vm529, %v1756, 0
        %v1789 = vsel %vm529, %v1758, 0
        %v1791 = vsel %vm529, %v1760, 0
        %1793 = vmatprep.subr.mxu0 0.0
        %1794 = vmatpush1.xpose.msra.mxu0 0.0
        %1795 = vmatprep.subr.mxu0 0.0
        %1796 = vmatpush1.xpose.msra.mxu0 0.0
        %1797 = vmatprep.subr.mxu0 0.0
        %1798 = vmatpush1.xpose.msra.mxu0 0.0
        %1799 = vmatprep.subr.mxu0 0.0
        %1800 = vmatpush1.xpose.msra.mxu0 0.0
        %1801 = vmatprep.subr.mxu0 0.0
        %1802 = vmatpush1.xpose.msra.mxu0 0.0
        %1803 = vmatprep.subr.mxu0 0.0
        %1804 = vmatpush1.xpose.msra.mxu0 0.0
        %1805 = vmatprep.subr.mxu0 0.0
        %1806 = vmatpush1.xpose.msra.mxu0 0.0
        %1807 = vmatprep.subr.mxu0 0.0
        %1808 = vmatpush1.xpose.msra.mxu0 0.0
        %1809 = vmatprep.subr.mxu0 0.0
        %1810 = vmatpush1.xpose.msra.mxu0 %v1791
        %1811 = vmatprep.subr.mxu0 0.0
        %1812 = vmatpush1.xpose.msra.mxu0 %v1789
        %1813 = vmatprep.subr.mxu0 0.0
        %1814 = vmatpush1.xpose.msra.mxu0 %v1787
        %1815 = vmatprep.subr.mxu0 0.0
        %1816 = vmatpush1.xpose.msra.mxu0 %v1785
        %1817 = vmatprep.subr.mxu0 0.0
        %1818 = vmatpush1.xpose.msra.mxu0 %v1783
        %1819 = vmatprep.subr.mxu0 0.0
        %1820 = vmatpush1.xpose.msra.mxu0 %v1781
        %1821 = vmatprep.subr.mxu0 0.0
        %1822 = vmatpush1.xpose.msra.mxu0 %v1779
        %1823 = vmatprep.subr.mxu0 0.0
        %1824 = vmatpush1.xpose.msra.mxu0 %v1777
        %1825 = vmatprep.subr.mxu0 0.0
        %1826 = vmatpush2.xpose.msra.mxu0 0.0
        %1827 = vmatprep.subr.mxu0 0.0
        %1828 = vmatpush2.xpose.msra.mxu0 0.0
        %1829 = vmatprep.subr.mxu0 0.0
        %1830 = vmatpush2.xpose.msra.mxu0 0.0
        %1831 = vmatprep.subr.mxu0 0.0
        %1832 = vmatpush2.xpose.msra.mxu0 0.0
        %1833 = vmatprep.subr.mxu0 0.0
        %1834 = vmatpush2.xpose.msra.mxu0 0.0
        %1835 = vmatprep.subr.mxu0 0.0
        %1836 = vmatpush2.xpose.msra.mxu0 0.0
        %1837 = vmatprep.subr.mxu0 0.0
        %1838 = vmatpush2.xpose.msra.mxu0 0.0
        %1839 = vmatprep.subr.mxu0 0.0
        %1840 = vmatpush2.xpose.msra.mxu0 0.0
        %1841 = vmatprep.subr.mxu0 0.0
        %1842 = vmatpush2.xpose.msra.mxu0 0.0
        %1843 = vmatprep.subr.mxu0 0.0
        %1844 = vmatpush2.xpose.msra.mxu0 0.0
        %1845 = vmatprep.subr.mxu0 0.0
        %1846 = vmatpush2.xpose.msra.mxu0 0.0
        %1847 = vmatprep.subr.mxu0 0.0
        %1848 = vmatpush2.xpose.msra.mxu0 0.0
        %1849 = vmatprep.subr.mxu0 0.0
        %1850 = vmatpush2.xpose.msra.mxu0 0.0
        %1851 = vmatprep.subr.mxu0 0.0
        %1852 = vmatpush2.xpose.msra.mxu0 0.0
        %1853 = vmatprep.subr.mxu0 0.0
        %1854 = vmatpush2.xpose.msra.mxu0 0.0
        %1855 = vmatprep.subr.mxu0 0.0
        %1856 = vmatpush2.xpose.msra.mxu0 0.0
        %1857 = vmatprep.mubr.f32.mxu0 0.0
        %1858 = vmatmul.mubr.f32.gmra.mxu0 %v1761
        %v1859 = vpop.f32.mrf.mxu0
        %v1860 = vadd.f32 0.0, %v1859
        %v1861 = vpop.f32.mrf.mxu0
        %1862 = vmatprep.mubr.f32.mxu0 0.0
        %1863 = vmatmul.mubr.f32.gmra.mxu0 %v1763
        %v1864 = vpop.f32.mrf.mxu0
        %v1865 = vadd.f32 0.0, %v1864
        %v1866 = vpop.f32.mrf.mxu0
        %1867 = vmatprep.mubr.f32.mxu0 0.0
        %1868 = vmatmul.mubr.f32.gmra.mxu0 %v1765
        %v1869 = vpop.f32.mrf.mxu0
        %v1870 = vadd.f32 0.0, %v1869
        %v1871 = vpop.f32.mrf.mxu0
        %1872 = vmatprep.mubr.f32.mxu0 0.0
        %1873 = vmatmul.mubr.f32.gmra.mxu0 %v1767
        %v1874 = vpop.f32.mrf.mxu0
        %v1875 = vadd.f32 0.0, %v1874
        %v1876 = vpop.f32.mrf.mxu0
        %1877 = vmatprep.mubr.f32.mxu0 0.0
        %1878 = vmatmul.mubr.f32.gmra.mxu0 %v1769
        %v1879 = vpop.f32.mrf.mxu0
        %v1880 = vadd.f32 0.0, %v1879
        %v1881 = vpop.f32.mrf.mxu0
        %1882 = vmatprep.mubr.f32.mxu0 0.0
        %1883 = vmatmul.mubr.f32.gmra.mxu0 %v1771
        %v1884 = vpop.f32.mrf.mxu0
        %v1885 = vadd.f32 0.0, %v1884
        %v1886 = vpop.f32.mrf.mxu0
        %1887 = vmatprep.mubr.f32.mxu0 0.0
        %1888 = vmatmul.mubr.f32.gmra.mxu0 %v1773
        %v1889 = vpop.f32.mrf.mxu0
        %v1890 = vadd.f32 0.0, %v1889
        %v1891 = vpop.f32.mrf.mxu0
        %1892 = vmatprep.mubr.f32.mxu0 0.0
        %1893 = vmatmul.mubr.f32.gmra.mxu0 %v1775
        %v1894 = vpop.f32.mrf.mxu0
        %v1895 = vadd.f32 0.0, %v1894
        %v1896 = vpop.f32.mrf.mxu0
        %1897 = vdwg.mxu0
        %v1898 = vsel %vm683, %v1860, -inf
        %1899 = vmax.xlane.f32.xlu0 %v1898
        %v1900 = vpop.xlane.xlu0 %1899
        %v1901 = vsel %vm683, %v1865, -inf
        %1902 = vmax.xlane.f32.xlu0 %v1901
        %v1903 = vpop.xlane.xlu0 %1902
        %v1904 = vsel %vm683, %v1870, -inf
        %1905 = vmax.xlane.f32.xlu0 %v1904
        %v1906 = vpop.xlane.xlu0 %1905
        %v1907 = vsel %vm683, %v1875, -inf
        %1908 = vmax.xlane.f32.xlu0 %v1907
        %v1909 = vpop.xlane.xlu0 %1908
        %v1910 = vsel %vm683, %v1880, -inf
        %1911 = vmax.xlane.f32.xlu0 %v1910
        %v1912 = vpop.xlane.xlu0 %1911
        %v1913 = vsel %vm683, %v1885, -inf
        %1914 = vmax.xlane.f32.xlu0 %v1913
        %v1915 = vpop.xlane.xlu0 %1914
        %v1916 = vsel %vm683, %v1890, -inf
        %1917 = vmax.xlane.f32.xlu0 %v1916
        %v1918 = vpop.xlane.xlu0 %1917
        %v1919 = vsel %vm683, %v1895, -inf
        %1920 = vmax.xlane.f32.xlu0 %v1919
        %v1921 = vpop.xlane.xlu0 %1920
        %v1922 = vsub.f32 %v1860, %v1900
        %v1923 = vsub.f32 %v1865, %v1903
        %v1924 = vsub.f32 %v1870, %v1906
        %v1925 = vsub.f32 %v1875, %v1909
        %v1926 = vsub.f32 %v1880, %v1912
        %v1927 = vsub.f32 %v1885, %v1915
        %v1928 = vsub.f32 %v1890, %v1918
        %v1929 = vsub.f32 %v1895, %v1921
        %v1930 = vmul.f32 %v1922, 1.442695
        %v1931 = vpow.pop %v1930
        %v1932 = vmul.f32 %v1923, 1.442695
        %v1933 = vpow.pop %v1932
        %v1934 = vmul.f32 %v1924, 1.442695
        %v1935 = vpow.pop %v1934
        %v1936 = vmul.f32 %v1925, 1.442695
        %v1937 = vpow.pop %v1936
        %v1938 = vmul.f32 %v1926, 1.442695
        %v1939 = vpow.pop %v1938
        %v1940 = vmul.f32 %v1927, 1.442695
        %v1941 = vpow.pop %v1940
        %v1942 = vmul.f32 %v1928, 1.442695
        %v1943 = vpow.pop %v1942
        %v1944 = vmul.f32 %v1929, 1.442695
        %v1945 = vpow.pop %v1944
        %v1946 = vsel %vm683, %v1931, 0.0
        %1947 = vadd.xlane.f32.xlu0 %v1946
        %v1948 = vpop.xlane.xlu0 %1947
        %v1949 = vsel %vm683, %v1933, 0.0
        %1950 = vadd.xlane.f32.xlu0 %v1949
        %v1951 = vpop.xlane.xlu0 %1950
        %v1952 = vsel %vm683, %v1935, 0.0
        %1953 = vadd.xlane.f32.xlu0 %v1952
        %v1954 = vpop.xlane.xlu0 %1953
        %v1955 = vsel %vm683, %v1937, 0.0
        %1956 = vadd.xlane.f32.xlu0 %v1955
        %v1957 = vpop.xlane.xlu0 %1956
        %v1958 = vsel %vm683, %v1939, 0.0
        %1959 = vadd.xlane.f32.xlu0 %v1958
        %v1960 = vpop.xlane.xlu0 %1959
        %v1961 = vsel %vm683, %v1941, 0.0
        %1962 = vadd.xlane.f32.xlu0 %v1961
        %v1963 = vpop.xlane.xlu0 %1962
        %v1964 = vsel %vm683, %v1943, 0.0
        %1965 = vadd.xlane.f32.xlu0 %v1964
        %v1966 = vpop.xlane.xlu0 %1965
        %v1967 = vsel %vm683, %v1945, 0.0
        %1968 = vadd.xlane.f32.xlu0 %v1967
        %v1969 = vpop.xlane.xlu0 %1968
        %1970 = vrot.lane.b32.xlu0 %v483, 80
        %v1971 = vpop.permute.xlu0 %1970
        %1972 = vrot.lane.b32.xlu0 %v488, 80
        %v1973 = vpop.permute.xlu0 %1972
        %1974 = vrot.lane.b32.xlu0 %v493, 80
        %v1975 = vpop.permute.xlu0 %1974
        %1976 = vrot.lane.b32.xlu0 %v498, 80
        %v1977 = vpop.permute.xlu0 %1976
        %1978 = vrot.lane.b32.xlu0 %v503, 80
        %v1979 = vpop.permute.xlu0 %1978
        %1980 = vrot.lane.b32.xlu0 %v508, 80
        %v1981 = vpop.permute.xlu0 %1980
        %1982 = vrot.lane.b32.xlu0 %v513, 80
        %v1983 = vpop.permute.xlu0 %1982
        %1984 = vrot.lane.b32.xlu0 %v518, 80
        %v1985 = vpop.permute.xlu0 %1984
        %v1995 = vsel %vm683, %v1931, 0
        %v1998 = vsel %vm683, %v1933, 0
        %v2001 = vsel %vm683, %v1935, 0
        %v2004 = vsel %vm683, %v1937, 0
        %v2007 = vsel %vm683, %v1939, 0
        %v2010 = vsel %vm683, %v1941, 0
        %v2013 = vsel %vm683, %v1943, 0
        %v2016 = vsel %vm683, %v1945, 0
        %2018 = vmatprep.subr.mxu0 0.0
        %2019 = vmatpush1.msra.mxu0 0.0
        %2020 = vmatprep.subr.mxu0 0.0
        %2021 = vmatpush1.msra.mxu0 0.0
        %2022 = vmatprep.subr.mxu0 0.0
        %2023 = vmatpush1.msra.mxu0 0.0
        %2024 = vmatprep.subr.mxu0 0.0
        %2025 = vmatpush1.msra.mxu0 0.0
        %2026 = vmatprep.subr.mxu0 0.0
        %2027 = vmatpush1.msra.mxu0 0.0
        %2028 = vmatprep.subr.mxu0 0.0
        %2029 = vmatpush1.msra.mxu0 0.0
        %2030 = vmatprep.subr.mxu0 0.0
        %2031 = vmatpush1.msra.mxu0 0.0
        %2032 = vmatprep.subr.mxu0 0.0
        %2033 = vmatpush1.msra.mxu0 0.0
        %2034 = vmatprep.subr.mxu0 0.0
        %2035 = vmatpush1.msra.mxu0 %v1985
        %2036 = vmatprep.subr.mxu0 0.0
        %2037 = vmatpush1.msra.mxu0 %v1983
        %2038 = vmatprep.subr.mxu0 0.0
        %2039 = vmatpush1.msra.mxu0 %v1981
        %2040 = vmatprep.subr.mxu0 0.0
        %2041 = vmatpush1.msra.mxu0 %v1979
        %2042 = vmatprep.subr.mxu0 0.0
        %2043 = vmatpush1.msra.mxu0 %v1977
        %2044 = vmatprep.subr.mxu0 0.0
        %2045 = vmatpush1.msra.mxu0 %v1975
        %2046 = vmatprep.subr.mxu0 0.0
        %2047 = vmatpush1.msra.mxu0 %v1973
        %2048 = vmatprep.subr.mxu0 0.0
        %2049 = vmatpush1.msra.mxu0 %v1971
        %2050 = vmatprep.subr.mxu0 0.0
        %2051 = vmatpush2.msra.mxu0 0.0
        %2052 = vmatprep.subr.mxu0 0.0
        %2053 = vmatpush2.msra.mxu0 0.0
        %2054 = vmatprep.subr.mxu0 0.0
        %2055 = vmatpush2.msra.mxu0 0.0
        %2056 = vmatprep.subr.mxu0 0.0
        %2057 = vmatpush2.msra.mxu0 0.0
        %2058 = vmatprep.subr.mxu0 0.0
        %2059 = vmatpush2.msra.mxu0 0.0
        %2060 = vmatprep.subr.mxu0 0.0
        %2061 = vmatpush2.msra.mxu0 0.0
        %2062 = vmatprep.subr.mxu0 0.0
        %2063 = vmatpush2.msra.mxu0 0.0
        %2064 = vmatprep.subr.mxu0 0.0
        %2065 = vmatpush2.msra.mxu0 0.0
        %2066 = vmatprep.subr.mxu0 0.0
        %2067 = vmatpush2.msra.mxu0 0.0
        %2068 = vmatprep.subr.mxu0 0.0
        %2069 = vmatpush2.msra.mxu0 0.0
        %2070 = vmatprep.subr.mxu0 0.0
        %2071 = vmatpush2.msra.mxu0 0.0
        %2072 = vmatprep.subr.mxu0 0.0
        %2073 = vmatpush2.msra.mxu0 0.0
        %2074 = vmatprep.subr.mxu0 0.0
        %2075 = vmatpush2.msra.mxu0 0.0
        %2076 = vmatprep.subr.mxu0 0.0
        %2077 = vmatpush2.msra.mxu0 0.0
        %2078 = vmatprep.subr.mxu0 0.0
        %2079 = vmatpush2.msra.mxu0 0.0
        %2080 = vmatprep.subr.mxu0 0.0
        %2081 = vmatpush2.msra.mxu0 0.0
        %2082 = vmatprep.mubr.f32.mxu0 0.0
        %2083 = vmatmul.mubr.f32.gmra.mxu0 %v1995
        %v2084 = vpop.f32.mrf.mxu0
        %v2085 = vadd.f32 0.0, %v2084
        %v2086 = vpop.f32.mrf.mxu0
        %2087 = vmatprep.mubr.f32.mxu0 0.0
        %2088 = vmatmul.mubr.f32.gmra.mxu0 %v1998
        %v2089 = vpop.f32.mrf.mxu0
        %v2090 = vadd.f32 0.0, %v2089
        %v2091 = vpop.f32.mrf.mxu0
        %2092 = vmatprep.mubr.f32.mxu0 0.0
        %2093 = vmatmul.mubr.f32.gmra.mxu0 %v2001
        %v2094 = vpop.f32.mrf.mxu0
        %v2095 = vadd.f32 0.0, %v2094
        %v2096 = vpop.f32.mrf.mxu0
        %2097 = vmatprep.mubr.f32.mxu0 0.0
        %2098 = vmatmul.mubr.f32.gmra.mxu0 %v2004
        %v2099 = vpop.f32.mrf.mxu0
        %v2100 = vadd.f32 0.0, %v2099
        %v2101 = vpop.f32.mrf.mxu0
        %2102 = vmatprep.mubr.f32.mxu0 0.0
        %2103 = vmatmul.mubr.f32.gmra.mxu0 %v2007
        %v2104 = vpop.f32.mrf.mxu0
        %v2105 = vadd.f32 0.0, %v2104
        %v2106 = vpop.f32.mrf.mxu0
        %2107 = vmatprep.mubr.f32.mxu0 0.0
        %2108 = vmatmul.mubr.f32.gmra.mxu0 %v2010
        %v2109 = vpop.f32.mrf.mxu0
        %v2110 = vadd.f32 0.0, %v2109
        %v2111 = vpop.f32.mrf.mxu0
        %2112 = vmatprep.mubr.f32.mxu0 0.0
        %2113 = vmatmul.mubr.f32.gmra.mxu0 %v2013
        %v2114 = vpop.f32.mrf.mxu0
        %v2115 = vadd.f32 0.0, %v2114
        %v2116 = vpop.f32.mrf.mxu0
        %2117 = vmatprep.mubr.f32.mxu0 0.0
        %2118 = vmatmul.mubr.f32.gmra.mxu0 %v2016
        %v2119 = vpop.f32.mrf.mxu0
        %v2120 = vadd.f32 0.0, %v2119
        %v2121 = vpop.f32.mrf.mxu0
        %2122 = vdwg.mxu0
        %v2123 = vrcp.pop %v1948
        %v2124 = vrcp.pop %v1951
        %v2125 = vrcp.pop %v1954
        %v2126 = vrcp.pop %v1957
        %v2127 = vrcp.pop %v1960
        %v2128 = vrcp.pop %v1963
        %v2129 = vrcp.pop %v1966
        %v2130 = vrcp.pop %v1969
        %v2131 = vmul.f32 %v2085, %v2123
        %v2132 = vmul.f32 %v2090, %v2124
        %v2133 = vmul.f32 %v2095, %v2125
        %v2134 = vmul.f32 %v2100, %v2126
        %v2135 = vmul.f32 %v2105, %v2127
        %v2136 = vmul.f32 %v2110, %v2128
        %v2137 = vmul.f32 %v2115, %v2129
        %v2138 = vmul.f32 %v2120, %v2130
        %2139 = vrot.lane.b32.xlu0 %v521, 64
        %v2140 = vpop.permute.xlu0 %2139
        %2141 = vrot.lane.b32.xlu0 %v522, 64
        %v2142 = vpop.permute.xlu0 %2141
        %2143 = vrot.lane.b32.xlu0 %v523, 64
        %v2144 = vpop.permute.xlu0 %2143
        %2145 = vrot.lane.b32.xlu0 %v524, 64
        %v2146 = vpop.permute.xlu0 %2145
        %2147 = vrot.lane.b32.xlu0 %v525, 64
        %v2148 = vpop.permute.xlu0 %2147
        %2149 = vrot.lane.b32.xlu0 %v526, 64
        %v2150 = vpop.permute.xlu0 %2149
        %2151 = vrot.lane.b32.xlu0 %v527, 64
        %v2152 = vpop.permute.xlu0 %2151
        %2153 = vrot.lane.b32.xlu0 %v528, 64
        %v2154 = vpop.permute.xlu0 %2153
        %2155 = vrot.lane.b32.xlu0 %v372, 64
        %v2156 = vpop.permute.xlu0 %2155
        %2157 = vrot.lane.b32.xlu0 %v378, 64
        %v2158 = vpop.permute.xlu0 %2157
        %2159 = vrot.lane.b32.xlu0 %v384, 64
        %v2160 = vpop.permute.xlu0 %2159
        %2161 = vrot.lane.b32.xlu0 %v390, 64
        %v2162 = vpop.permute.xlu0 %2161
        %2163 = vrot.lane.b32.xlu0 %v396, 64
        %v2164 = vpop.permute.xlu0 %2163
        %2165 = vrot.lane.b32.xlu0 %v402, 64
        %v2166 = vpop.permute.xlu0 %2165
        %2167 = vrot.lane.b32.xlu0 %v408, 64
        %v2168 = vpop.permute.xlu0 %2167
        %2169 = vrot.lane.b32.xlu0 %v414, 64
        %v2170 = vpop.permute.xlu0 %2169
        %v2171 = vsel %vm529, %v2140, 0
        %v2173 = vsel %vm529, %v2142, 0
        %v2175 = vsel %vm529, %v2144, 0
        %v2177 = vsel %vm529, %v2146, 0
        %v2179 = vsel %vm529, %v2148, 0
        %v2181 = vsel %vm529, %v2150, 0
        %v2183 = vsel %vm529, %v2152, 0
        %v2185 = vsel %vm529, %v2154, 0
        %v2187 = vsel %vm529, %v2156, 0
        %v2189 = vsel %vm529, %v2158, 0
        %v2191 = vsel %vm529, %v2160, 0
        %v2193 = vsel %vm529, %v2162, 0
        %v2195 = vsel %vm529, %v2164, 0
        %v2197 = vsel %vm529, %v2166, 0
        %v2199 = vsel %vm529, %v2168, 0
        %v2201 = vsel %vm529, %v2170, 0
        %2203 = vmatprep.subr.mxu0 0.0
        %2204 = vmatpush1.xpose.msra.mxu0 0.0
        %2205 = vmatprep.subr.mxu0 0.0
        %2206 = vmatpush1.xpose.msra.mxu0 0.0
        %2207 = vmatprep.subr.mxu0 0.0
        %2208 = vmatpush1.xpose.msra.mxu0 0.0
        %2209 = vmatprep.subr.mxu0 0.0
        %2210 = vmatpush1.xpose.msra.mxu0 0.0
        %2211 = vmatprep.subr.mxu0 0.0
        %2212 = vmatpush1.xpose.msra.mxu0 0.0
        %2213 = vmatprep.subr.mxu0 0.0
        %2214 = vmatpush1.xpose.msra.mxu0 0.0
        %2215 = vmatprep.subr.mxu0 0.0
        %2216 = vmatpush1.xpose.msra.mxu0 0.0
        %2217 = vmatprep.subr.mxu0 0.0
        %2218 = vmatpush1.xpose.msra.mxu0 0.0
        %2219 = vmatprep.subr.mxu0 0.0
        %2220 = vmatpush1.xpose.msra.mxu0 %v2201
        %2221 = vmatprep.subr.mxu0 0.0
        %2222 = vmatpush1.xpose.msra.mxu0 %v2199
        %2223 = vmatprep.subr.mxu0 0.0
        %2224 = vmatpush1.xpose.msra.mxu0 %v2197
        %2225 = vmatprep.subr.mxu0 0.0
        %2226 = vmatpush1.xpose.msra.mxu0 %v2195
        %2227 = vmatprep.subr.mxu0 0.0
        %2228 = vmatpush1.xpose.msra.mxu0 %v2193
        %2229 = vmatprep.subr.mxu0 0.0
        %2230 = vmatpush1.xpose.msra.mxu0 %v2191
        %2231 = vmatprep.subr.mxu0 0.0
        %2232 = vmatpush1.xpose.msra.mxu0 %v2189
        %2233 = vmatprep.subr.mxu0 0.0
        %2234 = vmatpush1.xpose.msra.mxu0 %v2187
        %2235 = vmatprep.subr.mxu0 0.0
        %2236 = vmatpush2.xpose.msra.mxu0 0.0
        %2237 = vmatprep.subr.mxu0 0.0
        %2238 = vmatpush2.xpose.msra.mxu0 0.0
        %2239 = vmatprep.subr.mxu0 0.0
        %2240 = vmatpush2.xpose.msra.mxu0 0.0
        %2241 = vmatprep.subr.mxu0 0.0
        %2242 = vmatpush2.xpose.msra.mxu0 0.0
        %2243 = vmatprep.subr.mxu0 0.0
        %2244 = vmatpush2.xpose.msra.mxu0 0.0
        %2245 = vmatprep.subr.mxu0 0.0
        %2246 = vmatpush2.xpose.msra.mxu0 0.0
        %2247 = vmatprep.subr.mxu0 0.0
        %2248 = vmatpush2.xpose.msra.mxu0 0.0
        %2249 = vmatprep.subr.mxu0 0.0
        %2250 = vmatpush2.xpose.msra.mxu0 0.0
        %2251 = vmatprep.subr.mxu0 0.0
        %2252 = vmatpush2.xpose.msra.mxu0 0.0
        %2253 = vmatprep.subr.mxu0 0.0
        %2254 = vmatpush2.xpose.msra.mxu0 0.0
        %2255 = vmatprep.subr.mxu0 0.0
        %2256 = vmatpush2.xpose.msra.mxu0 0.0
        %2257 = vmatprep.subr.mxu0 0.0
        %2258 = vmatpush2.xpose.msra.mxu0 0.0
        %2259 = vmatprep.subr.mxu0 0.0
        %2260 = vmatpush2.xpose.msra.mxu0 0.0
        %2261 = vmatprep.subr.mxu0 0.0
        %2262 = vmatpush2.xpose.msra.mxu0 0.0
        %2263 = vmatprep.subr.mxu0 0.0
        %2264 = vmatpush2.xpose.msra.mxu0 0.0
        %2265 = vmatprep.subr.mxu0 0.0
        %2266 = vmatpush2.xpose.msra.mxu0 0.0
        %2267 = vmatprep.mubr.f32.mxu0 0.0
        %2268 = vmatmul.mubr.f32.gmra.mxu0 %v2171
        %v2269 = vpop.f32.mrf.mxu0
        %v2270 = vadd.f32 0.0, %v2269
        %v2271 = vpop.f32.mrf.mxu0
        %2272 = vmatprep.mubr.f32.mxu0 0.0
        %2273 = vmatmul.mubr.f32.gmra.mxu0 %v2173
        %v2274 = vpop.f32.mrf.mxu0
        %v2275 = vadd.f32 0.0, %v2274
        %v2276 = vpop.f32.mrf.mxu0
        %2277 = vmatprep.mubr.f32.mxu0 0.0
        %2278 = vmatmul.mubr.f32.gmra.mxu0 %v2175
        %v2279 = vpop.f32.mrf.mxu0
        %v2280 = vadd.f32 0.0, %v2279
        %v2281 = vpop.f32.mrf.mxu0
        %2282 = vmatprep.mubr.f32.mxu0 0.0
        %2283 = vmatmul.mubr.f32.gmra.mxu0 %v2177
        %v2284 = vpop.f32.mrf.mxu0
        %v2285 = vadd.f32 0.0, %v2284
        %v2286 = vpop.f32.mrf.mxu0
        %2287 = vmatprep.mubr.f32.mxu0 0.0
        %2288 = vmatmul.mubr.f32.gmra.mxu0 %v2179
        %v2289 = vpop.f32.mrf.mxu0
        %v2290 = vadd.f32 0.0, %v2289
        %v2291 = vpop.f32.mrf.mxu0
        %2292 = vmatprep.mubr.f32.mxu0 0.0
        %2293 = vmatmul.mubr.f32.gmra.mxu0 %v2181
        %v2294 = vpop.f32.mrf.mxu0
        %v2295 = vadd.f32 0.0, %v2294
        %v2296 = vpop.f32.mrf.mxu0
        %2297 = vmatprep.mubr.f32.mxu0 0.0
        %2298 = vmatmul.mubr.f32.gmra.mxu0 %v2183
        %v2299 = vpop.f32.mrf.mxu0
        %v2300 = vadd.f32 0.0, %v2299
        %v2301 = vpop.f32.mrf.mxu0
        %2302 = vmatprep.mubr.f32.mxu0 0.0
        %2303 = vmatmul.mubr.f32.gmra.mxu0 %v2185
        %v2304 = vpop.f32.mrf.mxu0
        %v2305 = vadd.f32 0.0, %v2304
        %v2306 = vpop.f32.mrf.mxu0
        %2307 = vdwg.mxu0
        %v2308 = vsel %vm683, %v2270, -inf
        %2309 = vmax.xlane.f32.xlu0 %v2308
        %v2310 = vpop.xlane.xlu0 %2309
        %v2311 = vsel %vm683, %v2275, -inf
        %2312 = vmax.xlane.f32.xlu0 %v2311
        %v2313 = vpop.xlane.xlu0 %2312
        %v2314 = vsel %vm683, %v2280, -inf
        %2315 = vmax.xlane.f32.xlu0 %v2314
        %v2316 = vpop.xlane.xlu0 %2315
        %v2317 = vsel %vm683, %v2285, -inf
        %2318 = vmax.xlane.f32.xlu0 %v2317
        %v2319 = vpop.xlane.xlu0 %2318
        %v2320 = vsel %vm683, %v2290, -inf
        %2321 = vmax.xlane.f32.xlu0 %v2320
        %v2322 = vpop.xlane.xlu0 %2321
        %v2323 = vsel %vm683, %v2295, -inf
        %2324 = vmax.xlane.f32.xlu0 %v2323
        %v2325 = vpop.xlane.xlu0 %2324
        %v2326 = vsel %vm683, %v2300, -inf
        %2327 = vmax.xlane.f32.xlu0 %v2326
        %v2328 = vpop.xlane.xlu0 %2327
        %v2329 = vsel %vm683, %v2305, -inf
        %2330 = vmax.xlane.f32.xlu0 %v2329
        %v2331 = vpop.xlane.xlu0 %2330
        %v2332 = vsub.f32 %v2270, %v2310
        %v2333 = vsub.f32 %v2275, %v2313
        %v2334 = vsub.f32 %v2280, %v2316
        %v2335 = vsub.f32 %v2285, %v2319
        %v2336 = vsub.f32 %v2290, %v2322
        %v2337 = vsub.f32 %v2295, %v2325
        %v2338 = vsub.f32 %v2300, %v2328
        %v2339 = vsub.f32 %v2305, %v2331
        %v2340 = vmul.f32 %v2332, 1.442695
        %v2341 = vpow.pop %v2340
        %v2342 = vmul.f32 %v2333, 1.442695
        %v2343 = vpow.pop %v2342
        %v2344 = vmul.f32 %v2334, 1.442695
        %v2345 = vpow.pop %v2344
        %v2346 = vmul.f32 %v2335, 1.442695
        %v2347 = vpow.pop %v2346
        %v2348 = vmul.f32 %v2336, 1.442695
        %v2349 = vpow.pop %v2348
        %v2350 = vmul.f32 %v2337, 1.442695
        %v2351 = vpow.pop %v2350
        %v2352 = vmul.f32 %v2338, 1.442695
        %v2353 = vpow.pop %v2352
        %v2354 = vmul.f32 %v2339, 1.442695
        %v2355 = vpow.pop %v2354
        %v2356 = vsel %vm683, %v2341, 0.0
        %2357 = vadd.xlane.f32.xlu0 %v2356
        %v2358 = vpop.xlane.xlu0 %2357
        %v2359 = vsel %vm683, %v2343, 0.0
        %2360 = vadd.xlane.f32.xlu0 %v2359
        %v2361 = vpop.xlane.xlu0 %2360
        %v2362 = vsel %vm683, %v2345, 0.0
        %2363 = vadd.xlane.f32.xlu0 %v2362
        %v2364 = vpop.xlane.xlu0 %2363
        %v2365 = vsel %vm683, %v2347, 0.0
        %2366 = vadd.xlane.f32.xlu0 %v2365
        %v2367 = vpop.xlane.xlu0 %2366
        %v2368 = vsel %vm683, %v2349, 0.0
        %2369 = vadd.xlane.f32.xlu0 %v2368
        %v2370 = vpop.xlane.xlu0 %2369
        %v2371 = vsel %vm683, %v2351, 0.0
        %2372 = vadd.xlane.f32.xlu0 %v2371
        %v2373 = vpop.xlane.xlu0 %2372
        %v2374 = vsel %vm683, %v2353, 0.0
        %2375 = vadd.xlane.f32.xlu0 %v2374
        %v2376 = vpop.xlane.xlu0 %2375
        %v2377 = vsel %vm683, %v2355, 0.0
        %2378 = vadd.xlane.f32.xlu0 %v2377
        %v2379 = vpop.xlane.xlu0 %2378
        %2380 = vrot.lane.b32.xlu0 %v483, 64
        %v2381 = vpop.permute.xlu0 %2380
        %2382 = vrot.lane.b32.xlu0 %v488, 64
        %v2383 = vpop.permute.xlu0 %2382
        %2384 = vrot.lane.b32.xlu0 %v493, 64
        %v2385 = vpop.permute.xlu0 %2384
        %2386 = vrot.lane.b32.xlu0 %v498, 64
        %v2387 = vpop.permute.xlu0 %2386
        %2388 = vrot.lane.b32.xlu0 %v503, 64
        %v2389 = vpop.permute.xlu0 %2388
        %2390 = vrot.lane.b32.xlu0 %v508, 64
        %v2391 = vpop.permute.xlu0 %2390
        %2392 = vrot.lane.b32.xlu0 %v513, 64
        %v2393 = vpop.permute.xlu0 %2392
        %2394 = vrot.lane.b32.xlu0 %v518, 64
        %v2395 = vpop.permute.xlu0 %2394
        %v2405 = vsel %vm683, %v2341, 0
        %v2408 = vsel %vm683, %v2343, 0
        %v2411 = vsel %vm683, %v2345, 0
        %v2414 = vsel %vm683, %v2347, 0
        %v2417 = vsel %vm683, %v2349, 0
        %v2420 = vsel %vm683, %v2351, 0
        %v2423 = vsel %vm683, %v2353, 0
        %v2426 = vsel %vm683, %v2355, 0
        %2428 = vmatprep.subr.mxu0 0.0
        %2429 = vmatpush1.msra.mxu0 0.0
        %2430 = vmatprep.subr.mxu0 0.0
        %2431 = vmatpush1.msra.mxu0 0.0
        %2432 = vmatprep.subr.mxu0 0.0
        %2433 = vmatpush1.msra.mxu0 0.0
        %2434 = vmatprep.subr.mxu0 0.0
        %2435 = vmatpush1.msra.mxu0 0.0
        %2436 = vmatprep.subr.mxu0 0.0
        %2437 = vmatpush1.msra.mxu0 0.0
        %2438 = vmatprep.subr.mxu0 0.0
        %2439 = vmatpush1.msra.mxu0 0.0
        %2440 = vmatprep.subr.mxu0 0.0
        %2441 = vmatpush1.msra.mxu0 0.0
        %2442 = vmatprep.subr.mxu0 0.0
        %2443 = vmatpush1.msra.mxu0 0.0
        %2444 = vmatprep.subr.mxu0 0.0
        %2445 = vmatpush1.msra.mxu0 %v2395
        %2446 = vmatprep.subr.mxu0 0.0
        %2447 = vmatpush1.msra.mxu0 %v2393
        %2448 = vmatprep.subr.mxu0 0.0
        %2449 = vmatpush1.msra.mxu0 %v2391
        %2450 = vmatprep.subr.mxu0 0.0
        %2451 = vmatpush1.msra.mxu0 %v2389
        %2452 = vmatprep.subr.mxu0 0.0
        %2453 = vmatpush1.msra.mxu0 %v2387
        %2454 = vmatprep.subr.mxu0 0.0
        %2455 = vmatpush1.msra.mxu0 %v2385
        %2456 = vmatprep.subr.mxu0 0.0
        %2457 = vmatpush1.msra.mxu0 %v2383
        %2458 = vmatprep.subr.mxu0 0.0
        %2459 = vmatpush1.msra.mxu0 %v2381
        %2460 = vmatprep.subr.mxu0 0.0
        %2461 = vmatpush2.msra.mxu0 0.0
        %2462 = vmatprep.subr.mxu0 0.0
        %2463 = vmatpush2.msra.mxu0 0.0
        %2464 = vmatprep.subr.mxu0 0.0
        %2465 = vmatpush2.msra.mxu0 0.0
        %2466 = vmatprep.subr.mxu0 0.0
        %2467 = vmatpush2.msra.mxu0 0.0
        %2468 = vmatprep.subr.mxu0 0.0
        %2469 = vmatpush2.msra.mxu0 0.0
        %2470 = vmatprep.subr.mxu0 0.0
        %2471 = vmatpush2.msra.mxu0 0.0
        %2472 = vmatprep.subr.mxu0 0.0
        %2473 = vmatpush2.msra.mxu0 0.0
        %2474 = vmatprep.subr.mxu0 0.0
        %2475 = vmatpush2.msra.mxu0 0.0
        %2476 = vmatprep.subr.mxu0 0.0
        %2477 = vmatpush2.msra.mxu0 0.0
        %2478 = vmatprep.subr.mxu0 0.0
        %2479 = vmatpush2.msra.mxu0 0.0
        %2480 = vmatprep.subr.mxu0 0.0
        %2481 = vmatpush2.msra.mxu0 0.0
        %2482 = vmatprep.subr.mxu0 0.0
        %2483 = vmatpush2.msra.mxu0 0.0
        %2484 = vmatprep.subr.mxu0 0.0
        %2485 = vmatpush2.msra.mxu0 0.0
        %2486 = vmatprep.subr.mxu0 0.0
        %2487 = vmatpush2.msra.mxu0 0.0
        %2488 = vmatprep.subr.mxu0 0.0
        %2489 = vmatpush2.msra.mxu0 0.0
        %2490 = vmatprep.subr.mxu0 0.0
        %2491 = vmatpush2.msra.mxu0 0.0
        %2492 = vmatprep.mubr.f32.mxu0 0.0
        %2493 = vmatmul.mubr.f32.gmra.mxu0 %v2405
        %v2494 = vpop.f32.mrf.mxu0
        %v2495 = vadd.f32 0.0, %v2494
        %v2496 = vpop.f32.mrf.mxu0
        %2497 = vmatprep.mubr.f32.mxu0 0.0
        %2498 = vmatmul.mubr.f32.gmra.mxu0 %v2408
        %v2499 = vpop.f32.mrf.mxu0
        %v2500 = vadd.f32 0.0, %v2499
        %v2501 = vpop.f32.mrf.mxu0
        %2502 = vmatprep.mubr.f32.mxu0 0.0
        %2503 = vmatmul.mubr.f32.gmra.mxu0 %v2411
        %v2504 = vpop.f32.mrf.mxu0
        %v2505 = vadd.f32 0.0, %v2504
        %v2506 = vpop.f32.mrf.mxu0
        %2507 = vmatprep.mubr.f32.mxu0 0.0
        %2508 = vmatmul.mubr.f32.gmra.mxu0 %v2414
        %v2509 = vpop.f32.mrf.mxu0
        %v2510 = vadd.f32 0.0, %v2509
        %v2511 = vpop.f32.mrf.mxu0
        %2512 = vmatprep.mubr.f32.mxu0 0.0
        %2513 = vmatmul.mubr.f32.gmra.mxu0 %v2417
        %v2514 = vpop.f32.mrf.mxu0
        %v2515 = vadd.f32 0.0, %v2514
        %v2516 = vpop.f32.mrf.mxu0
        %2517 = vmatprep.mubr.f32.mxu0 0.0
        %2518 = vmatmul.mubr.f32.gmra.mxu0 %v2420
        %v2519 = vpop.f32.mrf.mxu0
        %v2520 = vadd.f32 0.0, %v2519
        %v2521 = vpop.f32.mrf.mxu0
        %2522 = vmatprep.mubr.f32.mxu0 0.0
        %2523 = vmatmul.mubr.f32.gmra.mxu0 %v2423
        %v2524 = vpop.f32.mrf.mxu0
        %v2525 = vadd.f32 0.0, %v2524
        %v2526 = vpop.f32.mrf.mxu0
        %2527 = vmatprep.mubr.f32.mxu0 0.0
        %2528 = vmatmul.mubr.f32.gmra.mxu0 %v2426
        %v2529 = vpop.f32.mrf.mxu0
        %v2530 = vadd.f32 0.0, %v2529
        %v2531 = vpop.f32.mrf.mxu0
        %2532 = vdwg.mxu0
        %v2533 = vrcp.pop %v2358
        %v2534 = vrcp.pop %v2361
        %v2535 = vrcp.pop %v2364
        %v2536 = vrcp.pop %v2367
        %v2537 = vrcp.pop %v2370
        %v2538 = vrcp.pop %v2373
        %v2539 = vrcp.pop %v2376
        %v2540 = vrcp.pop %v2379
        %v2541 = vmul.f32 %v2495, %v2533
        %v2542 = vmul.f32 %v2500, %v2534
        %v2543 = vmul.f32 %v2505, %v2535
        %v2544 = vmul.f32 %v2510, %v2536
        %v2545 = vmul.f32 %v2515, %v2537
        %v2546 = vmul.f32 %v2520, %v2538
        %v2547 = vmul.f32 %v2525, %v2539
        %v2548 = vmul.f32 %v2530, %v2540
        %2549 = vrot.lane.b32.xlu0 %v521, 48
        %v2550 = vpop.permute.xlu0 %2549
        %2551 = vrot.lane.b32.xlu0 %v522, 48
        %v2552 = vpop.permute.xlu0 %2551
        %2553 = vrot.lane.b32.xlu0 %v523, 48
        %v2554 = vpop.permute.xlu0 %2553
        %2555 = vrot.lane.b32.xlu0 %v524, 48
        %v2556 = vpop.permute.xlu0 %2555
        %2557 = vrot.lane.b32.xlu0 %v525, 48
        %v2558 = vpop.permute.xlu0 %2557
        %2559 = vrot.lane.b32.xlu0 %v526, 48
        %v2560 = vpop.permute.xlu0 %2559
        %2561 = vrot.lane.b32.xlu0 %v527, 48
        %v2562 = vpop.permute.xlu0 %2561
        %2563 = vrot.lane.b32.xlu0 %v528, 48
        %v2564 = vpop.permute.xlu0 %2563
        %2565 = vrot.lane.b32.xlu0 %v372, 48
        %v2566 = vpop.permute.xlu0 %2565
        %2567 = vrot.lane.b32.xlu0 %v378, 48
        %v2568 = vpop.permute.xlu0 %2567
        %2569 = vrot.lane.b32.xlu0 %v384, 48
        %v2570 = vpop.permute.xlu0 %2569
        %2571 = vrot.lane.b32.xlu0 %v390, 48
        %v2572 = vpop.permute.xlu0 %2571
        %2573 = vrot.lane.b32.xlu0 %v396, 48
        %v2574 = vpop.permute.xlu0 %2573
        %2575 = vrot.lane.b32.xlu0 %v402, 48
        %v2576 = vpop.permute.xlu0 %2575
        %2577 = vrot.lane.b32.xlu0 %v408, 48
        %v2578 = vpop.permute.xlu0 %2577
        %2579 = vrot.lane.b32.xlu0 %v414, 48
        %v2580 = vpop.permute.xlu0 %2579
        %v2581 = vsel %vm529, %v2550, 0
        %v2583 = vsel %vm529, %v2552, 0
        %v2585 = vsel %vm529, %v2554, 0
        %v2587 = vsel %vm529, %v2556, 0
        %v2589 = vsel %vm529, %v2558, 0
        %v2591 = vsel %vm529, %v2560, 0
        %v2593 = vsel %vm529, %v2562, 0
        %v2595 = vsel %vm529, %v2564, 0
        %v2597 = vsel %vm529, %v2566, 0
        %v2599 = vsel %vm529, %v2568, 0
        %v2601 = vsel %vm529, %v2570, 0
        %v2603 = vsel %vm529, %v2572, 0
        %v2605 = vsel %vm529, %v2574, 0
        %v2607 = vsel %vm529, %v2576, 0
        %v2609 = vsel %vm529, %v2578, 0
        %v2611 = vsel %vm529, %v2580, 0
        %2613 = vmatprep.subr.mxu0 0.0
        %2614 = vmatpush1.xpose.msra.mxu0 0.0
        %2615 = vmatprep.subr.mxu0 0.0
        %2616 = vmatpush1.xpose.msra.mxu0 0.0
        %2617 = vmatprep.subr.mxu0 0.0
        %2618 = vmatpush1.xpose.msra.mxu0 0.0
        %2619 = vmatprep.subr.mxu0 0.0
        %2620 = vmatpush1.xpose.msra.mxu0 0.0
        %2621 = vmatprep.subr.mxu0 0.0
        %2622 = vmatpush1.xpose.msra.mxu0 0.0
        %2623 = vmatprep.subr.mxu0 0.0
        %2624 = vmatpush1.xpose.msra.mxu0 0.0
        %2625 = vmatprep.subr.mxu0 0.0
        %2626 = vmatpush1.xpose.msra.mxu0 0.0
        %2627 = vmatprep.subr.mxu0 0.0
        %2628 = vmatpush1.xpose.msra.mxu0 0.0
        %2629 = vmatprep.subr.mxu0 0.0
        %2630 = vmatpush1.xpose.msra.mxu0 %v2611
        %2631 = vmatprep.subr.mxu0 0.0
        %2632 = vmatpush1.xpose.msra.mxu0 %v2609
        %2633 = vmatprep.subr.mxu0 0.0
        %2634 = vmatpush1.xpose.msra.mxu0 %v2607
        %2635 = vmatprep.subr.mxu0 0.0
        %2636 = vmatpush1.xpose.msra.mxu0 %v2605
        %2637 = vmatprep.subr.mxu0 0.0
        %2638 = vmatpush1.xpose.msra.mxu0 %v2603
        %2639 = vmatprep.subr.mxu0 0.0
        %2640 = vmatpush1.xpose.msra.mxu0 %v2601
        %2641 = vmatprep.subr.mxu0 0.0
        %2642 = vmatpush1.xpose.msra.mxu0 %v2599
        %2643 = vmatprep.subr.mxu0 0.0
        %2644 = vmatpush1.xpose.msra.mxu0 %v2597
        %2645 = vmatprep.subr.mxu0 0.0
        %2646 = vmatpush2.xpose.msra.mxu0 0.0
        %2647 = vmatprep.subr.mxu0 0.0
        %2648 = vmatpush2.xpose.msra.mxu0 0.0
        %2649 = vmatprep.subr.mxu0 0.0
        %2650 = vmatpush2.xpose.msra.mxu0 0.0
        %2651 = vmatprep.subr.mxu0 0.0
        %2652 = vmatpush2.xpose.msra.mxu0 0.0
        %2653 = vmatprep.subr.mxu0 0.0
        %2654 = vmatpush2.xpose.msra.mxu0 0.0
        %2655 = vmatprep.subr.mxu0 0.0
        %2656 = vmatpush2.xpose.msra.mxu0 0.0
        %2657 = vmatprep.subr.mxu0 0.0
        %2658 = vmatpush2.xpose.msra.mxu0 0.0
        %2659 = vmatprep.subr.mxu0 0.0
        %2660 = vmatpush2.xpose.msra.mxu0 0.0
        %2661 = vmatprep.subr.mxu0 0.0
        %2662 = vmatpush2.xpose.msra.mxu0 0.0
        %2663 = vmatprep.subr.mxu0 0.0
        %2664 = vmatpush2.xpose.msra.mxu0 0.0
        %2665 = vmatprep.subr.mxu0 0.0
        %2666 = vmatpush2.xpose.msra.mxu0 0.0
        %2667 = vmatprep.subr.mxu0 0.0
        %2668 = vmatpush2.xpose.msra.mxu0 0.0
        %2669 = vmatprep.subr.mxu0 0.0
        %2670 = vmatpush2.xpose.msra.mxu0 0.0
        %2671 = vmatprep.subr.mxu0 0.0
        %2672 = vmatpush2.xpose.msra.mxu0 0.0
        %2673 = vmatprep.subr.mxu0 0.0
        %2674 = vmatpush2.xpose.msra.mxu0 0.0
        %2675 = vmatprep.subr.mxu0 0.0
        %2676 = vmatpush2.xpose.msra.mxu0 0.0
        %2677 = vmatprep.mubr.f32.mxu0 0.0
        %2678 = vmatmul.mubr.f32.gmra.mxu0 %v2581
        %v2679 = vpop.f32.mrf.mxu0
        %v2680 = vadd.f32 0.0, %v2679
        %v2681 = vpop.f32.mrf.mxu0
        %2682 = vmatprep.mubr.f32.mxu0 0.0
        %2683 = vmatmul.mubr.f32.gmra.mxu0 %v2583
        %v2684 = vpop.f32.mrf.mxu0
        %v2685 = vadd.f32 0.0, %v2684
        %v2686 = vpop.f32.mrf.mxu0
        %2687 = vmatprep.mubr.f32.mxu0 0.0
        %2688 = vmatmul.mubr.f32.gmra.mxu0 %v2585
        %v2689 = vpop.f32.mrf.mxu0
        %v2690 = vadd.f32 0.0, %v2689
        %v2691 = vpop.f32.mrf.mxu0
        %2692 = vmatprep.mubr.f32.mxu0 0.0
        %2693 = vmatmul.mubr.f32.gmra.mxu0 %v2587
        %v2694 = vpop.f32.mrf.mxu0
        %v2695 = vadd.f32 0.0, %v2694
        %v2696 = vpop.f32.mrf.mxu0
        %2697 = vmatprep.mubr.f32.mxu0 0.0
        %2698 = vmatmul.mubr.f32.gmra.mxu0 %v2589
        %v2699 = vpop.f32.mrf.mxu0
        %v2700 = vadd.f32 0.0, %v2699
        %v2701 = vpop.f32.mrf.mxu0
        %2702 = vmatprep.mubr.f32.mxu0 0.0
        %2703 = vmatmul.mubr.f32.gmra.mxu0 %v2591
        %v2704 = vpop.f32.mrf.mxu0
        %v2705 = vadd.f32 0.0, %v2704
        %v2706 = vpop.f32.mrf.mxu0
        %2707 = vmatprep.mubr.f32.mxu0 0.0
        %2708 = vmatmul.mubr.f32.gmra.mxu0 %v2593
        %v2709 = vpop.f32.mrf.mxu0
        %v2710 = vadd.f32 0.0, %v2709
        %v2711 = vpop.f32.mrf.mxu0
        %2712 = vmatprep.mubr.f32.mxu0 0.0
        %2713 = vmatmul.mubr.f32.gmra.mxu0 %v2595
        %v2714 = vpop.f32.mrf.mxu0
        %v2715 = vadd.f32 0.0, %v2714
        %v2716 = vpop.f32.mrf.mxu0
        %2717 = vdwg.mxu0
        %v2718 = vsel %vm683, %v2680, -inf
        %2719 = vmax.xlane.f32.xlu0 %v2718
        %v2720 = vpop.xlane.xlu0 %2719
        %v2721 = vsel %vm683, %v2685, -inf
        %2722 = vmax.xlane.f32.xlu0 %v2721
        %v2723 = vpop.xlane.xlu0 %2722
        %v2724 = vsel %vm683, %v2690, -inf
        %2725 = vmax.xlane.f32.xlu0 %v2724
        %v2726 = vpop.xlane.xlu0 %2725
        %v2727 = vsel %vm683, %v2695, -inf
        %2728 = vmax.xlane.f32.xlu0 %v2727
        %v2729 = vpop.xlane.xlu0 %2728
        %v2730 = vsel %vm683, %v2700, -inf
        %2731 = vmax.xlane.f32.xlu0 %v2730
        %v2732 = vpop.xlane.xlu0 %2731
        %v2733 = vsel %vm683, %v2705, -inf
        %2734 = vmax.xlane.f32.xlu0 %v2733
        %v2735 = vpop.xlane.xlu0 %2734
        %v2736 = vsel %vm683, %v2710, -inf
        %2737 = vmax.xlane.f32.xlu0 %v2736
        %v2738 = vpop.xlane.xlu0 %2737
        %v2739 = vsel %vm683, %v2715, -inf
        %2740 = vmax.xlane.f32.xlu0 %v2739
        %v2741 = vpop.xlane.xlu0 %2740
        %v2742 = vsub.f32 %v2680, %v2720
        %v2743 = vsub.f32 %v2685, %v2723
        %v2744 = vsub.f32 %v2690, %v2726
        %v2745 = vsub.f32 %v2695, %v2729
        %v2746 = vsub.f32 %v2700, %v2732
        %v2747 = vsub.f32 %v2705, %v2735
        %v2748 = vsub.f32 %v2710, %v2738
        %v2749 = vsub.f32 %v2715, %v2741
        %v2750 = vmul.f32 %v2742, 1.442695
        %v2751 = vpow.pop %v2750
        %v2752 = vmul.f32 %v2743, 1.442695
        %v2753 = vpow.pop %v2752
        %v2754 = vmul.f32 %v2744, 1.442695
        %v2755 = vpow.pop %v2754
        %v2756 = vmul.f32 %v2745, 1.442695
        %v2757 = vpow.pop %v2756
        %v2758 = vmul.f32 %v2746, 1.442695
        %v2759 = vpow.pop %v2758
        %v2760 = vmul.f32 %v2747, 1.442695
        %v2761 = vpow.pop %v2760
        %v2762 = vmul.f32 %v2748, 1.442695
        %v2763 = vpow.pop %v2762
        %v2764 = vmul.f32 %v2749, 1.442695
        %v2765 = vpow.pop %v2764
        %v2766 = vsel %vm683, %v2751, 0.0
        %2767 = vadd.xlane.f32.xlu0 %v2766
        %v2768 = vpop.xlane.xlu0 %2767
        %v2769 = vsel %vm683, %v2753, 0.0
        %2770 = vadd.xlane.f32.xlu0 %v2769
        %v2771 = vpop.xlane.xlu0 %2770
        %v2772 = vsel %vm683, %v2755, 0.0
        %2773 = vadd.xlane.f32.xlu0 %v2772
        %v2774 = vpop.xlane.xlu0 %2773
        %v2775 = vsel %vm683, %v2757, 0.0
        %2776 = vadd.xlane.f32.xlu0 %v2775
        %v2777 = vpop.xlane.xlu0 %2776
        %v2778 = vsel %vm683, %v2759, 0.0
        %2779 = vadd.xlane.f32.xlu0 %v2778
        %v2780 = vpop.xlane.xlu0 %2779
        %v2781 = vsel %vm683, %v2761, 0.0
        %2782 = vadd.xlane.f32.xlu0 %v2781
        %v2783 = vpop.xlane.xlu0 %2782
        %v2784 = vsel %vm683, %v2763, 0.0
        %2785 = vadd.xlane.f32.xlu0 %v2784
        %v2786 = vpop.xlane.xlu0 %2785
        %v2787 = vsel %vm683, %v2765, 0.0
        %2788 = vadd.xlane.f32.xlu0 %v2787
        %v2789 = vpop.xlane.xlu0 %2788
        %2790 = vrot.lane.b32.xlu0 %v483, 48
        %v2791 = vpop.permute.xlu0 %2790
        %2792 = vrot.lane.b32.xlu0 %v488, 48
        %v2793 = vpop.permute.xlu0 %2792
        %2794 = vrot.lane.b32.xlu0 %v493, 48
        %v2795 = vpop.permute.xlu0 %2794
        %2796 = vrot.lane.b32.xlu0 %v498, 48
        %v2797 = vpop.permute.xlu0 %2796
        %2798 = vrot.lane.b32.xlu0 %v503, 48
        %v2799 = vpop.permute.xlu0 %2798
        %2800 = vrot.lane.b32.xlu0 %v508, 48
        %v2801 = vpop.permute.xlu0 %2800
        %2802 = vrot.lane.b32.xlu0 %v513, 48
        %v2803 = vpop.permute.xlu0 %2802
        %2804 = vrot.lane.b32.xlu0 %v518, 48
        %v2805 = vpop.permute.xlu0 %2804
        %v2815 = vsel %vm683, %v2751, 0
        %v2818 = vsel %vm683, %v2753, 0
        %v2821 = vsel %vm683, %v2755, 0
        %v2824 = vsel %vm683, %v2757, 0
        %v2827 = vsel %vm683, %v2759, 0
        %v2830 = vsel %vm683, %v2761, 0
        %v2833 = vsel %vm683, %v2763, 0
        %v2836 = vsel %vm683, %v2765, 0
        %2838 = vmatprep.subr.mxu0 0.0
        %2839 = vmatpush1.msra.mxu0 0.0
        %2840 = vmatprep.subr.mxu0 0.0
        %2841 = vmatpush1.msra.mxu0 0.0
        %2842 = vmatprep.subr.mxu0 0.0
        %2843 = vmatpush1.msra.mxu0 0.0
        %2844 = vmatprep.subr.mxu0 0.0
        %2845 = vmatpush1.msra.mxu0 0.0
        %2846 = vmatprep.subr.mxu0 0.0
        %2847 = vmatpush1.msra.mxu0 0.0
        %2848 = vmatprep.subr.mxu0 0.0
        %2849 = vmatpush1.msra.mxu0 0.0
        %2850 = vmatprep.subr.mxu0 0.0
        %2851 = vmatpush1.msra.mxu0 0.0
        %2852 = vmatprep.subr.mxu0 0.0
        %2853 = vmatpush1.msra.mxu0 0.0
        %2854 = vmatprep.subr.mxu0 0.0
        %2855 = vmatpush1.msra.mxu0 %v2805
        %2856 = vmatprep.subr.mxu0 0.0
        %2857 = vmatpush1.msra.mxu0 %v2803
        %2858 = vmatprep.subr.mxu0 0.0
        %2859 = vmatpush1.msra.mxu0 %v2801
        %2860 = vmatprep.subr.mxu0 0.0
        %2861 = vmatpush1.msra.mxu0 %v2799
        %2862 = vmatprep.subr.mxu0 0.0
        %2863 = vmatpush1.msra.mxu0 %v2797
        %2864 = vmatprep.subr.mxu0 0.0
        %2865 = vmatpush1.msra.mxu0 %v2795
        %2866 = vmatprep.subr.mxu0 0.0
        %2867 = vmatpush1.msra.mxu0 %v2793
        %2868 = vmatprep.subr.mxu0 0.0
        %2869 = vmatpush1.msra.mxu0 %v2791
        %2870 = vmatprep.subr.mxu0 0.0
        %2871 = vmatpush2.msra.mxu0 0.0
        %2872 = vmatprep.subr.mxu0 0.0
        %2873 = vmatpush2.msra.mxu0 0.0
        %2874 = vmatprep.subr.mxu0 0.0
        %2875 = vmatpush2.msra.mxu0 0.0
        %2876 = vmatprep.subr.mxu0 0.0
        %2877 = vmatpush2.msra.mxu0 0.0
        %2878 = vmatprep.subr.mxu0 0.0
        %2879 = vmatpush2.msra.mxu0 0.0
        %2880 = vmatprep.subr.mxu0 0.0
        %2881 = vmatpush2.msra.mxu0 0.0
        %2882 = vmatprep.subr.mxu0 0.0
        %2883 = vmatpush2.msra.mxu0 0.0
        %2884 = vmatprep.subr.mxu0 0.0
        %2885 = vmatpush2.msra.mxu0 0.0
        %2886 = vmatprep.subr.mxu0 0.0
        %2887 = vmatpush2.msra.mxu0 0.0
        %2888 = vmatprep.subr.mxu0 0.0
        %2889 = vmatpush2.msra.mxu0 0.0
        %2890 = vmatprep.subr.mxu0 0.0
        %2891 = vmatpush2.msra.mxu0 0.0
        %2892 = vmatprep.subr.mxu0 0.0
        %2893 = vmatpush2.msra.mxu0 0.0
        %2894 = vmatprep.subr.mxu0 0.0
        %2895 = vmatpush2.msra.mxu0 0.0
        %2896 = vmatprep.subr.mxu0 0.0
        %2897 = vmatpush2.msra.mxu0 0.0
        %2898 = vmatprep.subr.mxu0 0.0
        %2899 = vmatpush2.msra.mxu0 0.0
        %2900 = vmatprep.subr.mxu0 0.0
        %2901 = vmatpush2.msra.mxu0 0.0
        %2902 = vmatprep.mubr.f32.mxu0 0.0
        %2903 = vmatmul.mubr.f32.gmra.mxu0 %v2815
        %v2904 = vpop.f32.mrf.mxu0
        %v2905 = vadd.f32 0.0, %v2904
        %v2906 = vpop.f32.mrf.mxu0
        %2907 = vmatprep.mubr.f32.mxu0 0.0
        %2908 = vmatmul.mubr.f32.gmra.mxu0 %v2818
        %v2909 = vpop.f32.mrf.mxu0
        %v2910 = vadd.f32 0.0, %v2909
        %v2911 = vpop.f32.mrf.mxu0
        %2912 = vmatprep.mubr.f32.mxu0 0.0
        %2913 = vmatmul.mubr.f32.gmra.mxu0 %v2821
        %v2914 = vpop.f32.mrf.mxu0
        %v2915 = vadd.f32 0.0, %v2914
        %v2916 = vpop.f32.mrf.mxu0
        %2917 = vmatprep.mubr.f32.mxu0 0.0
        %2918 = vmatmul.mubr.f32.gmra.mxu0 %v2824
        %v2919 = vpop.f32.mrf.mxu0
        %v2920 = vadd.f32 0.0, %v2919
        %v2921 = vpop.f32.mrf.mxu0
        %2922 = vmatprep.mubr.f32.mxu0 0.0
        %2923 = vmatmul.mubr.f32.gmra.mxu0 %v2827
        %v2924 = vpop.f32.mrf.mxu0
        %v2925 = vadd.f32 0.0, %v2924
        %v2926 = vpop.f32.mrf.mxu0
        %2927 = vmatprep.mubr.f32.mxu0 0.0
        %2928 = vmatmul.mubr.f32.gmra.mxu0 %v2830
        %v2929 = vpop.f32.mrf.mxu0
        %v2930 = vadd.f32 0.0, %v2929
        %v2931 = vpop.f32.mrf.mxu0
        %2932 = vmatprep.mubr.f32.mxu0 0.0
        %2933 = vmatmul.mubr.f32.gmra.mxu0 %v2833
        %v2934 = vpop.f32.mrf.mxu0
        %v2935 = vadd.f32 0.0, %v2934
        %v2936 = vpop.f32.mrf.mxu0
        %2937 = vmatprep.mubr.f32.mxu0 0.0
        %2938 = vmatmul.mubr.f32.gmra.mxu0 %v2836
        %v2939 = vpop.f32.mrf.mxu0
        %v2940 = vadd.f32 0.0, %v2939
        %v2941 = vpop.f32.mrf.mxu0
        %2942 = vdwg.mxu0
        %v2943 = vrcp.pop %v2768
        %v2944 = vrcp.pop %v2771
        %v2945 = vrcp.pop %v2774
        %v2946 = vrcp.pop %v2777
        %v2947 = vrcp.pop %v2780
        %v2948 = vrcp.pop %v2783
        %v2949 = vrcp.pop %v2786
        %v2950 = vrcp.pop %v2789
        %v2951 = vmul.f32 %v2905, %v2943
        %v2952 = vmul.f32 %v2910, %v2944
        %v2953 = vmul.f32 %v2915, %v2945
        %v2954 = vmul.f32 %v2920, %v2946
        %v2955 = vmul.f32 %v2925, %v2947
        %v2956 = vmul.f32 %v2930, %v2948
        %v2957 = vmul.f32 %v2935, %v2949
        %v2958 = vmul.f32 %v2940, %v2950
        %2959 = vrot.lane.b32.xlu0 %v521, 32
        %v2960 = vpop.permute.xlu0 %2959
        %2961 = vrot.lane.b32.xlu0 %v522, 32
        %v2962 = vpop.permute.xlu0 %2961
        %2963 = vrot.lane.b32.xlu0 %v523, 32
        %v2964 = vpop.permute.xlu0 %2963
        %2965 = vrot.lane.b32.xlu0 %v524, 32
        %v2966 = vpop.permute.xlu0 %2965
        %2967 = vrot.lane.b32.xlu0 %v525, 32
        %v2968 = vpop.permute.xlu0 %2967
        %2969 = vrot.lane.b32.xlu0 %v526, 32
        %v2970 = vpop.permute.xlu0 %2969
        %2971 = vrot.lane.b32.xlu0 %v527, 32
        %v2972 = vpop.permute.xlu0 %2971
        %2973 = vrot.lane.b32.xlu0 %v528, 32
        %v2974 = vpop.permute.xlu0 %2973
        %2975 = vrot.lane.b32.xlu0 %v372, 32
        %v2976 = vpop.permute.xlu0 %2975
        %2977 = vrot.lane.b32.xlu0 %v378, 32
        %v2978 = vpop.permute.xlu0 %2977
        %2979 = vrot.lane.b32.xlu0 %v384, 32
        %v2980 = vpop.permute.xlu0 %2979
        %2981 = vrot.lane.b32.xlu0 %v390, 32
        %v2982 = vpop.permute.xlu0 %2981
        %2983 = vrot.lane.b32.xlu0 %v396, 32
        %v2984 = vpop.permute.xlu0 %2983
        %2985 = vrot.lane.b32.xlu0 %v402, 32
        %v2986 = vpop.permute.xlu0 %2985
        %2987 = vrot.lane.b32.xlu0 %v408, 32
        %v2988 = vpop.permute.xlu0 %2987
        %2989 = vrot.lane.b32.xlu0 %v414, 32
        %v2990 = vpop.permute.xlu0 %2989
        %v2991 = vsel %vm529, %v2960, 0
        %v2993 = vsel %vm529, %v2962, 0
        %v2995 = vsel %vm529, %v2964, 0
        %v2997 = vsel %vm529, %v2966, 0
        %v2999 = vsel %vm529, %v2968, 0
        %v3001 = vsel %vm529, %v2970, 0
        %v3003 = vsel %vm529, %v2972, 0
        %v3005 = vsel %vm529, %v2974, 0
        %v3007 = vsel %vm529, %v2976, 0
        %v3009 = vsel %vm529, %v2978, 0
        %v3011 = vsel %vm529, %v2980, 0
        %v3013 = vsel %vm529, %v2982, 0
        %v3015 = vsel %vm529, %v2984, 0
        %v3017 = vsel %vm529, %v2986, 0
        %v3019 = vsel %vm529, %v2988, 0
        %v3021 = vsel %vm529, %v2990, 0
        %3023 = vmatprep.subr.mxu0 0.0
        %3024 = vmatpush1.xpose.msra.mxu0 0.0
        %3025 = vmatprep.subr.mxu0 0.0
        %3026 = vmatpush1.xpose.msra.mxu0 0.0
        %3027 = vmatprep.subr.mxu0 0.0
        %3028 = vmatpush1.xpose.msra.mxu0 0.0
        %3029 = vmatprep.subr.mxu0 0.0
        %3030 = vmatpush1.xpose.msra.mxu0 0.0
        %3031 = vmatprep.subr.mxu0 0.0
        %3032 = vmatpush1.xpose.msra.mxu0 0.0
        %3033 = vmatprep.subr.mxu0 0.0
        %3034 = vmatpush1.xpose.msra.mxu0 0.0
        %3035 = vmatprep.subr.mxu0 0.0
        %3036 = vmatpush1.xpose.msra.mxu0 0.0
        %3037 = vmatprep.subr.mxu0 0.0
        %3038 = vmatpush1.xpose.msra.mxu0 0.0
        %3039 = vmatprep.subr.mxu0 0.0
        %3040 = vmatpush1.xpose.msra.mxu0 %v3021
        %3041 = vmatprep.subr.mxu0 0.0
        %3042 = vmatpush1.xpose.msra.mxu0 %v3019
        %3043 = vmatprep.subr.mxu0 0.0
        %3044 = vmatpush1.xpose.msra.mxu0 %v3017
        %3045 = vmatprep.subr.mxu0 0.0
        %3046 = vmatpush1.xpose.msra.mxu0 %v3015
        %3047 = vmatprep.subr.mxu0 0.0
        %3048 = vmatpush1.xpose.msra.mxu0 %v3013
        %3049 = vmatprep.subr.mxu0 0.0
        %3050 = vmatpush1.xpose.msra.mxu0 %v3011
        %3051 = vmatprep.subr.mxu0 0.0
        %3052 = vmatpush1.xpose.msra.mxu0 %v3009
        %3053 = vmatprep.subr.mxu0 0.0
        %3054 = vmatpush1.xpose.msra.mxu0 %v3007
        %3055 = vmatprep.subr.mxu0 0.0
        %3056 = vmatpush2.xpose.msra.mxu0 0.0
        %3057 = vmatprep.subr.mxu0 0.0
        %3058 = vmatpush2.xpose.msra.mxu0 0.0
        %3059 = vmatprep.subr.mxu0 0.0
        %3060 = vmatpush2.xpose.msra.mxu0 0.0
        %3061 = vmatprep.subr.mxu0 0.0
        %3062 = vmatpush2.xpose.msra.mxu0 0.0
        %3063 = vmatprep.subr.mxu0 0.0
        %3064 = vmatpush2.xpose.msra.mxu0 0.0
        %3065 = vmatprep.subr.mxu0 0.0
        %3066 = vmatpush2.xpose.msra.mxu0 0.0
        %3067 = vmatprep.subr.mxu0 0.0
        %3068 = vmatpush2.xpose.msra.mxu0 0.0
        %3069 = vmatprep.subr.mxu0 0.0
        %3070 = vmatpush2.xpose.msra.mxu0 0.0
        %3071 = vmatprep.subr.mxu0 0.0
        %3072 = vmatpush2.xpose.msra.mxu0 0.0
        %3073 = vmatprep.subr.mxu0 0.0
        %3074 = vmatpush2.xpose.msra.mxu0 0.0
        %3075 = vmatprep.subr.mxu0 0.0
        %3076 = vmatpush2.xpose.msra.mxu0 0.0
        %3077 = vmatprep.subr.mxu0 0.0
        %3078 = vmatpush2.xpose.msra.mxu0 0.0
        %3079 = vmatprep.subr.mxu0 0.0
        %3080 = vmatpush2.xpose.msra.mxu0 0.0
        %3081 = vmatprep.subr.mxu0 0.0
        %3082 = vmatpush2.xpose.msra.mxu0 0.0
        %3083 = vmatprep.subr.mxu0 0.0
        %3084 = vmatpush2.xpose.msra.mxu0 0.0
        %3085 = vmatprep.subr.mxu0 0.0
        %3086 = vmatpush2.xpose.msra.mxu0 0.0
        %3087 = vmatprep.mubr.f32.mxu0 0.0
        %3088 = vmatmul.mubr.f32.gmra.mxu0 %v2991
        %v3089 = vpop.f32.mrf.mxu0
        %v3090 = vadd.f32 0.0, %v3089
        %v3091 = vpop.f32.mrf.mxu0
        %3092 = vmatprep.mubr.f32.mxu0 0.0
        %3093 = vmatmul.mubr.f32.gmra.mxu0 %v2993
        %v3094 = vpop.f32.mrf.mxu0
        %v3095 = vadd.f32 0.0, %v3094
        %v3096 = vpop.f32.mrf.mxu0
        %3097 = vmatprep.mubr.f32.mxu0 0.0
        %3098 = vmatmul.mubr.f32.gmra.mxu0 %v2995
        %v3099 = vpop.f32.mrf.mxu0
        %v3100 = vadd.f32 0.0, %v3099
        %v3101 = vpop.f32.mrf.mxu0
        %3102 = vmatprep.mubr.f32.mxu0 0.0
        %3103 = vmatmul.mubr.f32.gmra.mxu0 %v2997
        %v3104 = vpop.f32.mrf.mxu0
        %v3105 = vadd.f32 0.0, %v3104
        %v3106 = vpop.f32.mrf.mxu0
        %3107 = vmatprep.mubr.f32.mxu0 0.0
        %3108 = vmatmul.mubr.f32.gmra.mxu0 %v2999
        %v3109 = vpop.f32.mrf.mxu0
        %v3110 = vadd.f32 0.0, %v3109
        %v3111 = vpop.f32.mrf.mxu0
        %3112 = vmatprep.mubr.f32.mxu0 0.0
        %3113 = vmatmul.mubr.f32.gmra.mxu0 %v3001
        %v3114 = vpop.f32.mrf.mxu0
        %v3115 = vadd.f32 0.0, %v3114
        %v3116 = vpop.f32.mrf.mxu0
        %3117 = vmatprep.mubr.f32.mxu0 0.0
        %3118 = vmatmul.mubr.f32.gmra.mxu0 %v3003
        %v3119 = vpop.f32.mrf.mxu0
        %v3120 = vadd.f32 0.0, %v3119
        %v3121 = vpop.f32.mrf.mxu0
        %3122 = vmatprep.mubr.f32.mxu0 0.0
        %3123 = vmatmul.mubr.f32.gmra.mxu0 %v3005
        %v3124 = vpop.f32.mrf.mxu0
        %v3125 = vadd.f32 0.0, %v3124
        %v3126 = vpop.f32.mrf.mxu0
        %3127 = vdwg.mxu0
        %v3128 = vsel %vm683, %v3090, -inf
        %3129 = vmax.xlane.f32.xlu0 %v3128
        %v3130 = vpop.xlane.xlu0 %3129
        %v3131 = vsel %vm683, %v3095, -inf
        %3132 = vmax.xlane.f32.xlu0 %v3131
        %v3133 = vpop.xlane.xlu0 %3132
        %v3134 = vsel %vm683, %v3100, -inf
        %3135 = vmax.xlane.f32.xlu0 %v3134
        %v3136 = vpop.xlane.xlu0 %3135
        %v3137 = vsel %vm683, %v3105, -inf
        %3138 = vmax.xlane.f32.xlu0 %v3137
        %v3139 = vpop.xlane.xlu0 %3138
        %v3140 = vsel %vm683, %v3110, -inf
        %3141 = vmax.xlane.f32.xlu0 %v3140
        %v3142 = vpop.xlane.xlu0 %3141
        %v3143 = vsel %vm683, %v3115, -inf
        %3144 = vmax.xlane.f32.xlu0 %v3143
        %v3145 = vpop.xlane.xlu0 %3144
        %v3146 = vsel %vm683, %v3120, -inf
        %3147 = vmax.xlane.f32.xlu0 %v3146
        %v3148 = vpop.xlane.xlu0 %3147
        %v3149 = vsel %vm683, %v3125, -inf
        %3150 = vmax.xlane.f32.xlu0 %v3149
        %v3151 = vpop.xlane.xlu0 %3150
        %v3152 = vsub.f32 %v3090, %v3130
        %v3153 = vsub.f32 %v3095, %v3133
        %v3154 = vsub.f32 %v3100, %v3136
        %v3155 = vsub.f32 %v3105, %v3139
        %v3156 = vsub.f32 %v3110, %v3142
        %v3157 = vsub.f32 %v3115, %v3145
        %v3158 = vsub.f32 %v3120, %v3148
        %v3159 = vsub.f32 %v3125, %v3151
        %v3160 = vmul.f32 %v3152, 1.442695
        %v3161 = vpow.pop %v3160
        %v3162 = vmul.f32 %v3153, 1.442695
        %v3163 = vpow.pop %v3162
        %v3164 = vmul.f32 %v3154, 1.442695
        %v3165 = vpow.pop %v3164
        %v3166 = vmul.f32 %v3155, 1.442695
        %v3167 = vpow.pop %v3166
        %v3168 = vmul.f32 %v3156, 1.442695
        %v3169 = vpow.pop %v3168
        %v3170 = vmul.f32 %v3157, 1.442695
        %v3171 = vpow.pop %v3170
        %v3172 = vmul.f32 %v3158, 1.442695
        %v3173 = vpow.pop %v3172
        %v3174 = vmul.f32 %v3159, 1.442695
        %v3175 = vpow.pop %v3174
        %v3176 = vsel %vm683, %v3161, 0.0
        %3177 = vadd.xlane.f32.xlu0 %v3176
        %v3178 = vpop.xlane.xlu0 %3177
        %v3179 = vsel %vm683, %v3163, 0.0
        %3180 = vadd.xlane.f32.xlu0 %v3179
        %v3181 = vpop.xlane.xlu0 %3180
        %v3182 = vsel %vm683, %v3165, 0.0
        %3183 = vadd.xlane.f32.xlu0 %v3182
        %v3184 = vpop.xlane.xlu0 %3183
        %v3185 = vsel %vm683, %v3167, 0.0
        %3186 = vadd.xlane.f32.xlu0 %v3185
        %v3187 = vpop.xlane.xlu0 %3186
        %v3188 = vsel %vm683, %v3169, 0.0
        %3189 = vadd.xlane.f32.xlu0 %v3188
        %v3190 = vpop.xlane.xlu0 %3189
        %v3191 = vsel %vm683, %v3171, 0.0
        %3192 = vadd.xlane.f32.xlu0 %v3191
        %v3193 = vpop.xlane.xlu0 %3192
        %v3194 = vsel %vm683, %v3173, 0.0
        %3195 = vadd.xlane.f32.xlu0 %v3194
        %v3196 = vpop.xlane.xlu0 %3195
        %v3197 = vsel %vm683, %v3175, 0.0
        %3198 = vadd.xlane.f32.xlu0 %v3197
        %v3199 = vpop.xlane.xlu0 %3198
        %3200 = vrot.lane.b32.xlu0 %v483, 32
        %v3201 = vpop.permute.xlu0 %3200
        %3202 = vrot.lane.b32.xlu0 %v488, 32
        %v3203 = vpop.permute.xlu0 %3202
        %3204 = vrot.lane.b32.xlu0 %v493, 32
        %v3205 = vpop.permute.xlu0 %3204
        %3206 = vrot.lane.b32.xlu0 %v498, 32
        %v3207 = vpop.permute.xlu0 %3206
        %3208 = vrot.lane.b32.xlu0 %v503, 32
        %v3209 = vpop.permute.xlu0 %3208
        %3210 = vrot.lane.b32.xlu0 %v508, 32
        %v3211 = vpop.permute.xlu0 %3210
        %3212 = vrot.lane.b32.xlu0 %v513, 32
        %v3213 = vpop.permute.xlu0 %3212
        %3214 = vrot.lane.b32.xlu0 %v518, 32
        %v3215 = vpop.permute.xlu0 %3214
        %v3225 = vsel %vm683, %v3161, 0
        %v3228 = vsel %vm683, %v3163, 0
        %v3231 = vsel %vm683, %v3165, 0
        %v3234 = vsel %vm683, %v3167, 0
        %v3237 = vsel %vm683, %v3169, 0
        %v3240 = vsel %vm683, %v3171, 0
        %v3243 = vsel %vm683, %v3173, 0
        %v3246 = vsel %vm683, %v3175, 0
        %3248 = vmatprep.subr.mxu0 0.0
        %3249 = vmatpush1.msra.mxu0 0.0
        %3250 = vmatprep.subr.mxu0 0.0
        %3251 = vmatpush1.msra.mxu0 0.0
        %3252 = vmatprep.subr.mxu0 0.0
        %3253 = vmatpush1.msra.mxu0 0.0
        %3254 = vmatprep.subr.mxu0 0.0
        %3255 = vmatpush1.msra.mxu0 0.0
        %3256 = vmatprep.subr.mxu0 0.0
        %3257 = vmatpush1.msra.mxu0 0.0
        %3258 = vmatprep.subr.mxu0 0.0
        %3259 = vmatpush1.msra.mxu0 0.0
        %3260 = vmatprep.subr.mxu0 0.0
        %3261 = vmatpush1.msra.mxu0 0.0
        %3262 = vmatprep.subr.mxu0 0.0
        %3263 = vmatpush1.msra.mxu0 0.0
        %3264 = vmatprep.subr.mxu0 0.0
        %3265 = vmatpush1.msra.mxu0 %v3215
        %3266 = vmatprep.subr.mxu0 0.0
        %3267 = vmatpush1.msra.mxu0 %v3213
        %3268 = vmatprep.subr.mxu0 0.0
        %3269 = vmatpush1.msra.mxu0 %v3211
        %3270 = vmatprep.subr.mxu0 0.0
        %3271 = vmatpush1.msra.mxu0 %v3209
        %3272 = vmatprep.subr.mxu0 0.0
        %3273 = vmatpush1.msra.mxu0 %v3207
        %3274 = vmatprep.subr.mxu0 0.0
        %3275 = vmatpush1.msra.mxu0 %v3205
        %3276 = vmatprep.subr.mxu0 0.0
        %3277 = vmatpush1.msra.mxu0 %v3203
        %3278 = vmatprep.subr.mxu0 0.0
        %3279 = vmatpush1.msra.mxu0 %v3201
        %3280 = vmatprep.subr.mxu0 0.0
        %3281 = vmatpush2.msra.mxu0 0.0
        %3282 = vmatprep.subr.mxu0 0.0
        %3283 = vmatpush2.msra.mxu0 0.0
        %3284 = vmatprep.subr.mxu0 0.0
        %3285 = vmatpush2.msra.mxu0 0.0
        %3286 = vmatprep.subr.mxu0 0.0
        %3287 = vmatpush2.msra.mxu0 0.0
        %3288 = vmatprep.subr.mxu0 0.0
        %3289 = vmatpush2.msra.mxu0 0.0
        %3290 = vmatprep.subr.mxu0 0.0
        %3291 = vmatpush2.msra.mxu0 0.0
        %3292 = vmatprep.subr.mxu0 0.0
        %3293 = vmatpush2.msra.mxu0 0.0
        %3294 = vmatprep.subr.mxu0 0.0
        %3295 = vmatpush2.msra.mxu0 0.0
        %3296 = vmatprep.subr.mxu0 0.0
        %3297 = vmatpush2.msra.mxu0 0.0
        %3298 = vmatprep.subr.mxu0 0.0
        %3299 = vmatpush2.msra.mxu0 0.0
        %3300 = vmatprep.subr.mxu0 0.0
        %3301 = vmatpush2.msra.mxu0 0.0
        %3302 = vmatprep.subr.mxu0 0.0
        %3303 = vmatpush2.msra.mxu0 0.0
        %3304 = vmatprep.subr.mxu0 0.0
        %3305 = vmatpush2.msra.mxu0 0.0
        %3306 = vmatprep.subr.mxu0 0.0
        %3307 = vmatpush2.msra.mxu0 0.0
        %3308 = vmatprep.subr.mxu0 0.0
        %3309 = vmatpush2.msra.mxu0 0.0
        %3310 = vmatprep.subr.mxu0 0.0
        %3311 = vmatpush2.msra.mxu0 0.0
        %3312 = vmatprep.mubr.f32.mxu0 0.0
        %3313 = vmatmul.mubr.f32.gmra.mxu0 %v3225
        %v3314 = vpop.f32.mrf.mxu0
        %v3315 = vadd.f32 0.0, %v3314
        %v3316 = vpop.f32.mrf.mxu0
        %3317 = vmatprep.mubr.f32.mxu0 0.0
        %3318 = vmatmul.mubr.f32.gmra.mxu0 %v3228
        %v3319 = vpop.f32.mrf.mxu0
        %v3320 = vadd.f32 0.0, %v3319
        %v3321 = vpop.f32.mrf.mxu0
        %3322 = vmatprep.mubr.f32.mxu0 0.0
        %3323 = vmatmul.mubr.f32.gmra.mxu0 %v3231
        %v3324 = vpop.f32.mrf.mxu0
        %v3325 = vadd.f32 0.0, %v3324
        %v3326 = vpop.f32.mrf.mxu0
        %3327 = vmatprep.mubr.f32.mxu0 0.0
        %3328 = vmatmul.mubr.f32.gmra.mxu0 %v3234
        %v3329 = vpop.f32.mrf.mxu0
        %v3330 = vadd.f32 0.0, %v3329
        %v3331 = vpop.f32.mrf.mxu0
        %3332 = vmatprep.mubr.f32.mxu0 0.0
        %3333 = vmatmul.mubr.f32.gmra.mxu0 %v3237
        %v3334 = vpop.f32.mrf.mxu0
        %v3335 = vadd.f32 0.0, %v3334
        %v3336 = vpop.f32.mrf.mxu0
        %3337 = vmatprep.mubr.f32.mxu0 0.0
        %3338 = vmatmul.mubr.f32.gmra.mxu0 %v3240
        %v3339 = vpop.f32.mrf.mxu0
        %v3340 = vadd.f32 0.0, %v3339
        %v3341 = vpop.f32.mrf.mxu0
        %3342 = vmatprep.mubr.f32.mxu0 0.0
        %3343 = vmatmul.mubr.f32.gmra.mxu0 %v3243
        %v3344 = vpop.f32.mrf.mxu0
        %v3345 = vadd.f32 0.0, %v3344
        %v3346 = vpop.f32.mrf.mxu0
        %3347 = vmatprep.mubr.f32.mxu0 0.0
        %3348 = vmatmul.mubr.f32.gmra.mxu0 %v3246
        %v3349 = vpop.f32.mrf.mxu0
        %v3350 = vadd.f32 0.0, %v3349
        %v3351 = vpop.f32.mrf.mxu0
        %3352 = vdwg.mxu0
        %v3353 = vrcp.pop %v3178
        %v3354 = vrcp.pop %v3181
        %v3355 = vrcp.pop %v3184
        %v3356 = vrcp.pop %v3187
        %v3357 = vrcp.pop %v3190
        %v3358 = vrcp.pop %v3193
        %v3359 = vrcp.pop %v3196
        %v3360 = vrcp.pop %v3199
        %v3361 = vmul.f32 %v3315, %v3353
        %v3362 = vmul.f32 %v3320, %v3354
        %v3363 = vmul.f32 %v3325, %v3355
        %v3364 = vmul.f32 %v3330, %v3356
        %v3365 = vmul.f32 %v3335, %v3357
        %v3366 = vmul.f32 %v3340, %v3358
        %v3367 = vmul.f32 %v3345, %v3359
        %v3368 = vmul.f32 %v3350, %v3360
        %3369 = vrot.lane.b32.xlu0 %v521, 16
        %v3370 = vpop.permute.xlu0 %3369
        %3371 = vrot.lane.b32.xlu0 %v522, 16
        %v3372 = vpop.permute.xlu0 %3371
        %3373 = vrot.lane.b32.xlu0 %v523, 16
        %v3374 = vpop.permute.xlu0 %3373
        %3375 = vrot.lane.b32.xlu0 %v524, 16
        %v3376 = vpop.permute.xlu0 %3375
        %3377 = vrot.lane.b32.xlu0 %v525, 16
        %v3378 = vpop.permute.xlu0 %3377
        %3379 = vrot.lane.b32.xlu0 %v526, 16
        %v3380 = vpop.permute.xlu0 %3379
        %3381 = vrot.lane.b32.xlu0 %v527, 16
        %v3382 = vpop.permute.xlu0 %3381
        %3383 = vrot.lane.b32.xlu0 %v528, 16
        %v3384 = vpop.permute.xlu0 %3383
        %3385 = vrot.lane.b32.xlu0 %v372, 16
        %v3386 = vpop.permute.xlu0 %3385
        %3387 = vrot.lane.b32.xlu0 %v378, 16
        %v3388 = vpop.permute.xlu0 %3387
        %3389 = vrot.lane.b32.xlu0 %v384, 16
        %v3390 = vpop.permute.xlu0 %3389
        %3391 = vrot.lane.b32.xlu0 %v390, 16
        %v3392 = vpop.permute.xlu0 %3391
        %3393 = vrot.lane.b32.xlu0 %v396, 16
        %v3394 = vpop.permute.xlu0 %3393
        %3395 = vrot.lane.b32.xlu0 %v402, 16
        %v3396 = vpop.permute.xlu0 %3395
        %3397 = vrot.lane.b32.xlu0 %v408, 16
        %v3398 = vpop.permute.xlu0 %3397
        %3399 = vrot.lane.b32.xlu0 %v414, 16
        %v3400 = vpop.permute.xlu0 %3399
        %v3401 = vsel %vm529, %v3370, 0
        %v3403 = vsel %vm529, %v3372, 0
        %v3405 = vsel %vm529, %v3374, 0
        %v3407 = vsel %vm529, %v3376, 0
        %v3409 = vsel %vm529, %v3378, 0
        %v3411 = vsel %vm529, %v3380, 0
        %v3413 = vsel %vm529, %v3382, 0
        %v3415 = vsel %vm529, %v3384, 0
        %v3417 = vsel %vm529, %v3386, 0
        %v3419 = vsel %vm529, %v3388, 0
        %v3421 = vsel %vm529, %v3390, 0
        %v3423 = vsel %vm529, %v3392, 0
        %v3425 = vsel %vm529, %v3394, 0
        %v3427 = vsel %vm529, %v3396, 0
        %v3429 = vsel %vm529, %v3398, 0
        %v3431 = vsel %vm529, %v3400, 0
        %3433 = vmatprep.subr.mxu0 0.0
        %3434 = vmatpush1.xpose.msra.mxu0 0.0
        %3435 = vmatprep.subr.mxu0 0.0
        %3436 = vmatpush1.xpose.msra.mxu0 0.0
        %3437 = vmatprep.subr.mxu0 0.0
        %3438 = vmatpush1.xpose.msra.mxu0 0.0
        %3439 = vmatprep.subr.mxu0 0.0
        %3440 = vmatpush1.xpose.msra.mxu0 0.0
        %3441 = vmatprep.subr.mxu0 0.0
        %3442 = vmatpush1.xpose.msra.mxu0 0.0
        %3443 = vmatprep.subr.mxu0 0.0
        %3444 = vmatpush1.xpose.msra.mxu0 0.0
        %3445 = vmatprep.subr.mxu0 0.0
        %3446 = vmatpush1.xpose.msra.mxu0 0.0
        %3447 = vmatprep.subr.mxu0 0.0
        %3448 = vmatpush1.xpose.msra.mxu0 0.0
        %3449 = vmatprep.subr.mxu0 0.0
        %3450 = vmatpush1.xpose.msra.mxu0 %v3431
        %3451 = vmatprep.subr.mxu0 0.0
        %3452 = vmatpush1.xpose.msra.mxu0 %v3429
        %3453 = vmatprep.subr.mxu0 0.0
        %3454 = vmatpush1.xpose.msra.mxu0 %v3427
        %3455 = vmatprep.subr.mxu0 0.0
        %3456 = vmatpush1.xpose.msra.mxu0 %v3425
        %3457 = vmatprep.subr.mxu0 0.0
        %3458 = vmatpush1.xpose.msra.mxu0 %v3423
        %3459 = vmatprep.subr.mxu0 0.0
        %3460 = vmatpush1.xpose.msra.mxu0 %v3421
        %3461 = vmatprep.subr.mxu0 0.0
        %3462 = vmatpush1.xpose.msra.mxu0 %v3419
        %3463 = vmatprep.subr.mxu0 0.0
        %3464 = vmatpush1.xpose.msra.mxu0 %v3417
        %3465 = vmatprep.subr.mxu0 0.0
        %3466 = vmatpush2.xpose.msra.mxu0 0.0
        %3467 = vmatprep.subr.mxu0 0.0
        %3468 = vmatpush2.xpose.msra.mxu0 0.0
        %3469 = vmatprep.subr.mxu0 0.0
        %3470 = vmatpush2.xpose.msra.mxu0 0.0
        %3471 = vmatprep.subr.mxu0 0.0
        %3472 = vmatpush2.xpose.msra.mxu0 0.0
        %3473 = vmatprep.subr.mxu0 0.0
        %3474 = vmatpush2.xpose.msra.mxu0 0.0
        %3475 = vmatprep.subr.mxu0 0.0
        %3476 = vmatpush2.xpose.msra.mxu0 0.0
        %3477 = vmatprep.subr.mxu0 0.0
        %3478 = vmatpush2.xpose.msra.mxu0 0.0
        %3479 = vmatprep.subr.mxu0 0.0
        %3480 = vmatpush2.xpose.msra.mxu0 0.0
        %3481 = vmatprep.subr.mxu0 0.0
        %3482 = vmatpush2.xpose.msra.mxu0 0.0
        %3483 = vmatprep.subr.mxu0 0.0
        %3484 = vmatpush2.xpose.msra.mxu0 0.0
        %3485 = vmatprep.subr.mxu0 0.0
        %3486 = vmatpush2.xpose.msra.mxu0 0.0
        %3487 = vmatprep.subr.mxu0 0.0
        %3488 = vmatpush2.xpose.msra.mxu0 0.0
        %3489 = vmatprep.subr.mxu0 0.0
        %3490 = vmatpush2.xpose.msra.mxu0 0.0
        %3491 = vmatprep.subr.mxu0 0.0
        %3492 = vmatpush2.xpose.msra.mxu0 0.0
        %3493 = vmatprep.subr.mxu0 0.0
        %3494 = vmatpush2.xpose.msra.mxu0 0.0
        %3495 = vmatprep.subr.mxu0 0.0
        %3496 = vmatpush2.xpose.msra.mxu0 0.0
        %3497 = vmatprep.mubr.f32.mxu0 0.0
        %3498 = vmatmul.mubr.f32.gmra.mxu0 %v3401
        %v3499 = vpop.f32.mrf.mxu0
        %v3500 = vadd.f32 0.0, %v3499
        %v3501 = vpop.f32.mrf.mxu0
        %3502 = vmatprep.mubr.f32.mxu0 0.0
        %3503 = vmatmul.mubr.f32.gmra.mxu0 %v3403
        %v3504 = vpop.f32.mrf.mxu0
        %v3505 = vadd.f32 0.0, %v3504
        %v3506 = vpop.f32.mrf.mxu0
        %3507 = vmatprep.mubr.f32.mxu0 0.0
        %3508 = vmatmul.mubr.f32.gmra.mxu0 %v3405
        %v3509 = vpop.f32.mrf.mxu0
        %v3510 = vadd.f32 0.0, %v3509
        %v3511 = vpop.f32.mrf.mxu0
        %3512 = vmatprep.mubr.f32.mxu0 0.0
        %3513 = vmatmul.mubr.f32.gmra.mxu0 %v3407
        %v3514 = vpop.f32.mrf.mxu0
        %v3515 = vadd.f32 0.0, %v3514
        %v3516 = vpop.f32.mrf.mxu0
        %3517 = vmatprep.mubr.f32.mxu0 0.0
        %3518 = vmatmul.mubr.f32.gmra.mxu0 %v3409
        %v3519 = vpop.f32.mrf.mxu0
        %v3520 = vadd.f32 0.0, %v3519
        %v3521 = vpop.f32.mrf.mxu0
        %3522 = vmatprep.mubr.f32.mxu0 0.0
        %3523 = vmatmul.mubr.f32.gmra.mxu0 %v3411
        %v3524 = vpop.f32.mrf.mxu0
        %v3525 = vadd.f32 0.0, %v3524
        %v3526 = vpop.f32.mrf.mxu0
        %3527 = vmatprep.mubr.f32.mxu0 0.0
        %3528 = vmatmul.mubr.f32.gmra.mxu0 %v3413
        %v3529 = vpop.f32.mrf.mxu0
        %v3530 = vadd.f32 0.0, %v3529
        %v3531 = vpop.f32.mrf.mxu0
        %3532 = vmatprep.mubr.f32.mxu0 0.0
        %3533 = vmatmul.mubr.f32.gmra.mxu0 %v3415
        %v3534 = vpop.f32.mrf.mxu0
        %v3535 = vadd.f32 0.0, %v3534
        %v3536 = vpop.f32.mrf.mxu0
        %3537 = vdwg.mxu0
        %v3538 = vsel %vm683, %v3500, -inf
        %3539 = vmax.xlane.f32.xlu0 %v3538
        %v3540 = vpop.xlane.xlu0 %3539
        %v3541 = vsel %vm683, %v3505, -inf
        %3542 = vmax.xlane.f32.xlu0 %v3541
        %v3543 = vpop.xlane.xlu0 %3542
        %v3544 = vsel %vm683, %v3510, -inf
        %3545 = vmax.xlane.f32.xlu0 %v3544
        %v3546 = vpop.xlane.xlu0 %3545
        %v3547 = vsel %vm683, %v3515, -inf
        %3548 = vmax.xlane.f32.xlu0 %v3547
        %v3549 = vpop.xlane.xlu0 %3548
        %v3550 = vsel %vm683, %v3520, -inf
        %3551 = vmax.xlane.f32.xlu0 %v3550
        %v3552 = vpop.xlane.xlu0 %3551
        %v3553 = vsel %vm683, %v3525, -inf
        %3554 = vmax.xlane.f32.xlu0 %v3553
        %v3555 = vpop.xlane.xlu0 %3554
        %v3556 = vsel %vm683, %v3530, -inf
        %3557 = vmax.xlane.f32.xlu0 %v3556
        %v3558 = vpop.xlane.xlu0 %3557
        %v3559 = vsel %vm683, %v3535, -inf
        %3560 = vmax.xlane.f32.xlu0 %v3559
        %v3561 = vpop.xlane.xlu0 %3560
        %v3562 = vsub.f32 %v3500, %v3540
        %v3563 = vsub.f32 %v3505, %v3543
        %v3564 = vsub.f32 %v3510, %v3546
        %v3565 = vsub.f32 %v3515, %v3549
        %v3566 = vsub.f32 %v3520, %v3552
        %v3567 = vsub.f32 %v3525, %v3555
        %v3568 = vsub.f32 %v3530, %v3558
        %v3569 = vsub.f32 %v3535, %v3561
        %v3570 = vmul.f32 %v3562, 1.442695
        %v3571 = vpow.pop %v3570
        %v3572 = vmul.f32 %v3563, 1.442695
        %v3573 = vpow.pop %v3572
        %v3574 = vmul.f32 %v3564, 1.442695
        %v3575 = vpow.pop %v3574
        %v3576 = vmul.f32 %v3565, 1.442695
        %v3577 = vpow.pop %v3576
        %v3578 = vmul.f32 %v3566, 1.442695
        %v3579 = vpow.pop %v3578
        %v3580 = vmul.f32 %v3567, 1.442695
        %v3581 = vpow.pop %v3580
        %v3582 = vmul.f32 %v3568, 1.442695
        %v3583 = vpow.pop %v3582
        %v3584 = vmul.f32 %v3569, 1.442695
        %v3585 = vpow.pop %v3584
        %v3586 = vsel %vm683, %v3571, 0.0
        %3587 = vadd.xlane.f32.xlu0 %v3586
        %v3588 = vpop.xlane.xlu0 %3587
        %v3589 = vsel %vm683, %v3573, 0.0
        %3590 = vadd.xlane.f32.xlu0 %v3589
        %v3591 = vpop.xlane.xlu0 %3590
        %v3592 = vsel %vm683, %v3575, 0.0
        %3593 = vadd.xlane.f32.xlu0 %v3592
        %v3594 = vpop.xlane.xlu0 %3593
        %v3595 = vsel %vm683, %v3577, 0.0
        %3596 = vadd.xlane.f32.xlu0 %v3595
        %v3597 = vpop.xlane.xlu0 %3596
        %v3598 = vsel %vm683, %v3579, 0.0
        %3599 = vadd.xlane.f32.xlu0 %v3598
        %v3600 = vpop.xlane.xlu0 %3599
        %v3601 = vsel %vm683, %v3581, 0.0
        %3602 = vadd.xlane.f32.xlu0 %v3601
        %v3603 = vpop.xlane.xlu0 %3602
        %v3604 = vsel %vm683, %v3583, 0.0
        %3605 = vadd.xlane.f32.xlu0 %v3604
        %v3606 = vpop.xlane.xlu0 %3605
        %v3607 = vsel %vm683, %v3585, 0.0
        %3608 = vadd.xlane.f32.xlu0 %v3607
        %v3609 = vpop.xlane.xlu0 %3608
        %3610 = vrot.lane.b32.xlu0 %v483, 16
        %v3611 = vpop.permute.xlu0 %3610
        %3612 = vrot.lane.b32.xlu0 %v488, 16
        %v3613 = vpop.permute.xlu0 %3612
        %3614 = vrot.lane.b32.xlu0 %v493, 16
        %v3615 = vpop.permute.xlu0 %3614
        %3616 = vrot.lane.b32.xlu0 %v498, 16
        %v3617 = vpop.permute.xlu0 %3616
        %3618 = vrot.lane.b32.xlu0 %v503, 16
        %v3619 = vpop.permute.xlu0 %3618
        %3620 = vrot.lane.b32.xlu0 %v508, 16
        %v3621 = vpop.permute.xlu0 %3620
        %3622 = vrot.lane.b32.xlu0 %v513, 16
        %v3623 = vpop.permute.xlu0 %3622
        %3624 = vrot.lane.b32.xlu0 %v518, 16
        %v3625 = vpop.permute.xlu0 %3624
        %v3635 = vsel %vm683, %v3571, 0
        %v3638 = vsel %vm683, %v3573, 0
        %v3641 = vsel %vm683, %v3575, 0
        %v3644 = vsel %vm683, %v3577, 0
        %v3647 = vsel %vm683, %v3579, 0
        %v3650 = vsel %vm683, %v3581, 0
        %v3653 = vsel %vm683, %v3583, 0
        %v3656 = vsel %vm683, %v3585, 0
        %3658 = vmatprep.subr.mxu0 0.0
        %3659 = vmatpush1.msra.mxu0 0.0
        %3660 = vmatprep.subr.mxu0 0.0
        %3661 = vmatpush1.msra.mxu0 0.0
        %3662 = vmatprep.subr.mxu0 0.0
        %3663 = vmatpush1.msra.mxu0 0.0
        %3664 = vmatprep.subr.mxu0 0.0
        %3665 = vmatpush1.msra.mxu0 0.0
        %3666 = vmatprep.subr.mxu0 0.0
        %3667 = vmatpush1.msra.mxu0 0.0
        %3668 = vmatprep.subr.mxu0 0.0
        %3669 = vmatpush1.msra.mxu0 0.0
        %3670 = vmatprep.subr.mxu0 0.0
        %3671 = vmatpush1.msra.mxu0 0.0
        %3672 = vmatprep.subr.mxu0 0.0
        %3673 = vmatpush1.msra.mxu0 0.0
        %3674 = vmatprep.subr.mxu0 0.0
        %3675 = vmatpush1.msra.mxu0 %v3625
        %3676 = vmatprep.subr.mxu0 0.0
        %3677 = vmatpush1.msra.mxu0 %v3623
        %3678 = vmatprep.subr.mxu0 0.0
        %3679 = vmatpush1.msra.mxu0 %v3621
        %3680 = vmatprep.subr.mxu0 0.0
        %3681 = vmatpush1.msra.mxu0 %v3619
        %3682 = vmatprep.subr.mxu0 0.0
        %3683 = vmatpush1.msra.mxu0 %v3617
        %3684 = vmatprep.subr.mxu0 0.0
        %3685 = vmatpush1.msra.mxu0 %v3615
        %3686 = vmatprep.subr.mxu0 0.0
        %3687 = vmatpush1.msra.mxu0 %v3613
        %3688 = vmatprep.subr.mxu0 0.0
        %3689 = vmatpush1.msra.mxu0 %v3611
        %3690 = vmatprep.subr.mxu0 0.0
        %3691 = vmatpush2.msra.mxu0 0.0
        %3692 = vmatprep.subr.mxu0 0.0
        %3693 = vmatpush2.msra.mxu0 0.0
        %3694 = vmatprep.subr.mxu0 0.0
        %3695 = vmatpush2.msra.mxu0 0.0
        %3696 = vmatprep.subr.mxu0 0.0
        %3697 = vmatpush2.msra.mxu0 0.0
        %3698 = vmatprep.subr.mxu0 0.0
        %3699 = vmatpush2.msra.mxu0 0.0
        %3700 = vmatprep.subr.mxu0 0.0
        %3701 = vmatpush2.msra.mxu0 0.0
        %3702 = vmatprep.subr.mxu0 0.0
        %3703 = vmatpush2.msra.mxu0 0.0
        %3704 = vmatprep.subr.mxu0 0.0
        %3705 = vmatpush2.msra.mxu0 0.0
        %3706 = vmatprep.subr.mxu0 0.0
        %3707 = vmatpush2.msra.mxu0 0.0
        %3708 = vmatprep.subr.mxu0 0.0
        %3709 = vmatpush2.msra.mxu0 0.0
        %3710 = vmatprep.subr.mxu0 0.0
        %3711 = vmatpush2.msra.mxu0 0.0
        %3712 = vmatprep.subr.mxu0 0.0
        %3713 = vmatpush2.msra.mxu0 0.0
        %3714 = vmatprep.subr.mxu0 0.0
        %3715 = vmatpush2.msra.mxu0 0.0
        %3716 = vmatprep.subr.mxu0 0.0
        %3717 = vmatpush2.msra.mxu0 0.0
        %3718 = vmatprep.subr.mxu0 0.0
        %3719 = vmatpush2.msra.mxu0 0.0
        %3720 = vmatprep.subr.mxu0 0.0
        %3721 = vmatpush2.msra.mxu0 0.0
        %3722 = vmatprep.mubr.f32.mxu0 0.0
        %3723 = vmatmul.mubr.f32.gmra.mxu0 %v3635
        %v3724 = vpop.f32.mrf.mxu0
        %v3725 = vadd.f32 0.0, %v3724
        %v3726 = vpop.f32.mrf.mxu0
        %3727 = vmatprep.mubr.f32.mxu0 0.0
        %3728 = vmatmul.mubr.f32.gmra.mxu0 %v3638
        %v3729 = vpop.f32.mrf.mxu0
        %v3730 = vadd.f32 0.0, %v3729
        %v3731 = vpop.f32.mrf.mxu0
        %3732 = vmatprep.mubr.f32.mxu0 0.0
        %3733 = vmatmul.mubr.f32.gmra.mxu0 %v3641
        %v3734 = vpop.f32.mrf.mxu0
        %v3735 = vadd.f32 0.0, %v3734
        %v3736 = vpop.f32.mrf.mxu0
        %3737 = vmatprep.mubr.f32.mxu0 0.0
        %3738 = vmatmul.mubr.f32.gmra.mxu0 %v3644
        %v3739 = vpop.f32.mrf.mxu0
        %v3740 = vadd.f32 0.0, %v3739
        %v3741 = vpop.f32.mrf.mxu0
        %3742 = vmatprep.mubr.f32.mxu0 0.0
        %3743 = vmatmul.mubr.f32.gmra.mxu0 %v3647
        %v3744 = vpop.f32.mrf.mxu0
        %v3745 = vadd.f32 0.0, %v3744
        %v3746 = vpop.f32.mrf.mxu0
        %3747 = vmatprep.mubr.f32.mxu0 0.0
        %3748 = vmatmul.mubr.f32.gmra.mxu0 %v3650
        %v3749 = vpop.f32.mrf.mxu0
        %v3750 = vadd.f32 0.0, %v3749
        %v3751 = vpop.f32.mrf.mxu0
        %3752 = vmatprep.mubr.f32.mxu0 0.0
        %3753 = vmatmul.mubr.f32.gmra.mxu0 %v3653
        %v3754 = vpop.f32.mrf.mxu0
        %v3755 = vadd.f32 0.0, %v3754
        %v3756 = vpop.f32.mrf.mxu0
        %3757 = vmatprep.mubr.f32.mxu0 0.0
        %3758 = vmatmul.mubr.f32.gmra.mxu0 %v3656
        %v3759 = vpop.f32.mrf.mxu0
        %v3760 = vadd.f32 0.0, %v3759
        %v3761 = vpop.f32.mrf.mxu0
        %3762 = vdwg.mxu0
        %v3763 = vrcp.pop %v3588
        %v3764 = vrcp.pop %v3591
        %v3765 = vrcp.pop %v3594
        %v3766 = vrcp.pop %v3597
        %v3767 = vrcp.pop %v3600
        %v3768 = vrcp.pop %v3603
        %v3769 = vrcp.pop %v3606
        %v3770 = vrcp.pop %v3609
        %v3771 = vmul.f32 %v3725, %v3763
        %v3772 = vmul.f32 %v3730, %v3764
        %v3773 = vmul.f32 %v3735, %v3765
        %v3774 = vmul.f32 %v3740, %v3766
        %v3775 = vmul.f32 %v3745, %v3767
        %v3776 = vmul.f32 %v3750, %v3768
        %v3777 = vmul.f32 %v3755, %v3769
        %v3778 = vmul.f32 %v3760, %v3770
        %3787 = vrot.lane.b32.xlu0 %v1311, 16
        %v3788 = vpop.permute.xlu0 %3787
        %3789 = vrot.lane.b32.xlu0 %v1312, 16
        %v3790 = vpop.permute.xlu0 %3789
        %3791 = vrot.lane.b32.xlu0 %v1313, 16
        %v3792 = vpop.permute.xlu0 %3791
        %3793 = vrot.lane.b32.xlu0 %v1314, 16
        %v3794 = vpop.permute.xlu0 %3793
        %3795 = vrot.lane.b32.xlu0 %v1315, 16
        %v3796 = vpop.permute.xlu0 %3795
        %3797 = vrot.lane.b32.xlu0 %v1316, 16
        %v3798 = vpop.permute.xlu0 %3797
        %3799 = vrot.lane.b32.xlu0 %v1317, 16
        %v3800 = vpop.permute.xlu0 %3799
        %3801 = vrot.lane.b32.xlu0 %v1318, 16
        %v3802 = vpop.permute.xlu0 %3801
        %3819 = vrot.lane.b32.xlu0 %v1721, 32
        %v3820 = vpop.permute.xlu0 %3819
        %3821 = vrot.lane.b32.xlu0 %v1722, 32
        %v3822 = vpop.permute.xlu0 %3821
        %3823 = vrot.lane.b32.xlu0 %v1723, 32
        %v3824 = vpop.permute.xlu0 %3823
        %3825 = vrot.lane.b32.xlu0 %v1724, 32
        %v3826 = vpop.permute.xlu0 %3825
        %3827 = vrot.lane.b32.xlu0 %v1725, 32
        %v3828 = vpop.permute.xlu0 %3827
        %3829 = vrot.lane.b32.xlu0 %v1726, 32
        %v3830 = vpop.permute.xlu0 %3829
        %3831 = vrot.lane.b32.xlu0 %v1727, 32
        %v3832 = vpop.permute.xlu0 %3831
        %3833 = vrot.lane.b32.xlu0 %v1728, 32
        %v3834 = vpop.permute.xlu0 %3833
        %3851 = vrot.lane.b32.xlu0 %v2131, 48
        %v3852 = vpop.permute.xlu0 %3851
        %3853 = vrot.lane.b32.xlu0 %v2132, 48
        %v3854 = vpop.permute.xlu0 %3853
        %3855 = vrot.lane.b32.xlu0 %v2133, 48
        %v3856 = vpop.permute.xlu0 %3855
        %3857 = vrot.lane.b32.xlu0 %v2134, 48
        %v3858 = vpop.permute.xlu0 %3857
        %3859 = vrot.lane.b32.xlu0 %v2135, 48
        %v3860 = vpop.permute.xlu0 %3859
        %3861 = vrot.lane.b32.xlu0 %v2136, 48
        %v3862 = vpop.permute.xlu0 %3861
        %3863 = vrot.lane.b32.xlu0 %v2137, 48
        %v3864 = vpop.permute.xlu0 %3863
        %3865 = vrot.lane.b32.xlu0 %v2138, 48
        %v3866 = vpop.permute.xlu0 %3865
        %3883 = vrot.lane.b32.xlu0 %v2541, 64
        %v3884 = vpop.permute.xlu0 %3883
        %3885 = vrot.lane.b32.xlu0 %v2542, 64
        %v3886 = vpop.permute.xlu0 %3885
        %3887 = vrot.lane.b32.xlu0 %v2543, 64
        %v3888 = vpop.permute.xlu0 %3887
        %3889 = vrot.lane.b32.xlu0 %v2544, 64
        %v3890 = vpop.permute.xlu0 %3889
        %3891 = vrot.lane.b32.xlu0 %v2545, 64
        %v3892 = vpop.permute.xlu0 %3891
        %3893 = vrot.lane.b32.xlu0 %v2546, 64
        %v3894 = vpop.permute.xlu0 %3893
        %3895 = vrot.lane.b32.xlu0 %v2547, 64
        %v3896 = vpop.permute.xlu0 %3895
        %3897 = vrot.lane.b32.xlu0 %v2548, 64
        %v3898 = vpop.permute.xlu0 %3897
        %3915 = vrot.lane.b32.xlu0 %v2951, 80
        %v3916 = vpop.permute.xlu0 %3915
        %3917 = vrot.lane.b32.xlu0 %v2952, 80
        %v3918 = vpop.permute.xlu0 %3917
        %3919 = vrot.lane.b32.xlu0 %v2953, 80
        %v3920 = vpop.permute.xlu0 %3919
        %3921 = vrot.lane.b32.xlu0 %v2954, 80
        %v3922 = vpop.permute.xlu0 %3921
        %3923 = vrot.lane.b32.xlu0 %v2955, 80
        %v3924 = vpop.permute.xlu0 %3923
        %3925 = vrot.lane.b32.xlu0 %v2956, 80
        %v3926 = vpop.permute.xlu0 %3925
        %3927 = vrot.lane.b32.xlu0 %v2957, 80
        %v3928 = vpop.permute.xlu0 %3927
        %3929 = vrot.lane.b32.xlu0 %v2958, 80
        %v3930 = vpop.permute.xlu0 %3929
        %3947 = vrot.lane.b32.xlu0 %v3361, 96
        %v3948 = vpop.permute.xlu0 %3947
        %3949 = vrot.lane.b32.xlu0 %v3362, 96
        %v3950 = vpop.permute.xlu0 %3949
        %3951 = vrot.lane.b32.xlu0 %v3363, 96
        %v3952 = vpop.permute.xlu0 %3951
        %3953 = vrot.lane.b32.xlu0 %v3364, 96
        %v3954 = vpop.permute.xlu0 %3953
        %3955 = vrot.lane.b32.xlu0 %v3365, 96
        %v3956 = vpop.permute.xlu0 %3955
        %3957 = vrot.lane.b32.xlu0 %v3366, 96
        %v3958 = vpop.permute.xlu0 %3957
        %3959 = vrot.lane.b32.xlu0 %v3367, 96
        %v3960 = vpop.permute.xlu0 %3959
        %3961 = vrot.lane.b32.xlu0 %v3368, 96
        %v3962 = vpop.permute.xlu0 %3961
        %3979 = vrot.lane.b32.xlu0 %v3771, 112
        %v3980 = vpop.permute.xlu0 %3979
        %3981 = vrot.lane.b32.xlu0 %v3772, 112
        %v3982 = vpop.permute.xlu0 %3981
        %3983 = vrot.lane.b32.xlu0 %v3773, 112
        %v3984 = vpop.permute.xlu0 %3983
        %3985 = vrot.lane.b32.xlu0 %v3774, 112
        %v3986 = vpop.permute.xlu0 %3985
        %3987 = vrot.lane.b32.xlu0 %v3775, 112
        %v3988 = vpop.permute.xlu0 %3987
        %3989 = vrot.lane.b32.xlu0 %v3776, 112
        %v3990 = vpop.permute.xlu0 %3989
        %3991 = vrot.lane.b32.xlu0 %v3777, 112
        %v3992 = vpop.permute.xlu0 %3991
        %3993 = vrot.lane.b32.xlu0 %v3778, 112
        %v3994 = vpop.permute.xlu0 %3993
        %v4003 = vsel %vm529, %v893, %v3788
        %v4004 = vsel %vm529, %v894, %v3790
        %v4005 = vsel %vm529, %v895, %v3792
        %v4006 = vsel %vm529, %v896, %v3794
        %v4007 = vsel %vm529, %v897, %v3796
        %v4008 = vsel %vm529, %v898, %v3798
        %v4009 = vsel %vm529, %v899, %v3800
        %v4010 = vsel %vm529, %v900, %v3802
        %vm4011 = vcmask 261120
        %v4012 = vsel %vm4011, %v4003, %v3820
        %v4013 = vsel %vm4011, %v4004, %v3822
        %v4014 = vsel %vm4011, %v4005, %v3824
        %v4015 = vsel %vm4011, %v4006, %v3826
        %v4016 = vsel %vm4011, %v4007, %v3828
        %v4017 = vsel %vm4011, %v4008, %v3830
        %v4018 = vsel %vm4011, %v4009, %v3832
        %v4019 = vsel %vm4011, %v4010, %v3834
        %vm4020 = vcmask 392192
        %v4021 = vsel %vm4020, %v4012, %v3852
        %v4022 = vsel %vm4020, %v4013, %v3854
        %v4023 = vsel %vm4020, %v4014, %v3856
        %v4024 = vsel %vm4020, %v4015, %v3858
        %v4025 = vsel %vm4020, %v4016, %v3860
        %v4026 = vsel %vm4020, %v4017, %v3862
        %v4027 = vsel %vm4020, %v4018, %v3864
        %v4028 = vsel %vm4020, %v4019, %v3866
        %v4029 = vsel %vm683, %v4021, %v3884
        %v4030 = vsel %vm683, %v4022, %v3886
        %v4031 = vsel %vm683, %v4023, %v3888
        %v4032 = vsel %vm683, %v4024, %v3890
        %v4033 = vsel %vm683, %v4025, %v3892
        %v4034 = vsel %vm683, %v4026, %v3894
        %v4035 = vsel %vm683, %v4027, %v3896
        %v4036 = vsel %vm683, %v4028, %v3898
        %vm4037 = vcmask 654336
        %v4038 = vsel %vm4037, %v4029, %v3916
        %v4039 = vsel %vm4037, %v4030, %v3918
        %v4040 = vsel %vm4037, %v4031, %v3920
        %v4041 = vsel %vm4037, %v4032, %v3922
        %v4042 = vsel %vm4037, %v4033, %v3924
        %v4043 = vsel %vm4037, %v4034, %v3926
        %v4044 = vsel %vm4037, %v4035, %v3928
        %v4045 = vsel %vm4037, %v4036, %v3930
        %vm4046 = vcmask 785408
        %v4047 = vsel %vm4046, %v4038, %v3948
        %v4048 = vsel %vm4046, %v4039, %v3950
        %v4049 = vsel %vm4046, %v4040, %v3952
        %v4050 = vsel %vm4046, %v4041, %v3954
        %v4051 = vsel %vm4046, %v4042, %v3956
        %v4052 = vsel %vm4046, %v4043, %v3958
        %v4053 = vsel %vm4046, %v4044, %v3960
        %v4054 = vsel %vm4046, %v4045, %v3962
        %vm4055 = vcmask 916480
        %v4056 = vsel %vm4055, %v4047, %v3980
        %v4057 = vsel %vm4055, %v4048, %v3982
        %v4058 = vsel %vm4055, %v4049, %v3984
        %v4059 = vsel %vm4055, %v4050, %v3986
        %v4060 = vsel %vm4055, %v4051, %v3988
        %v4061 = vsel %vm4055, %v4052, %v3990
        %v4062 = vsel %vm4055, %v4053, %v3992
        %v4063 = vsel %vm4055, %v4054, %v3994
        %v4064 = vld [vmem:[#allocation7] sm:$0xff]
        %v4065 = vld [vmem:[#allocation7 + $0x8] sm:$0xff]
        %v4066 = vld [vmem:[#allocation7 + $0x10] sm:$0xff]
        %v4067 = vld [vmem:[#allocation7 + $0x18] sm:$0xff]
        %v4068 = vld [vmem:[#allocation7 + $0x20] sm:$0xff]
        %v4069 = vld [vmem:[#allocation7 + $0x28] sm:$0xff]
        %v4070 = vld [vmem:[#allocation7 + $0x30] sm:$0xff]
        %v4071 = vld [vmem:[#allocation7 + $0x38] sm:$0xff]
        %v4072 = vld [vmem:[#allocation7 + $0x40] sm:$0xff]
        %v4073 = vld [vmem:[#allocation7 + $0x48] sm:$0xff]
        %v4074 = vld [vmem:[#allocation7 + $0x50] sm:$0xff]
        %v4075 = vld [vmem:[#allocation7 + $0x58] sm:$0xff]
        %v4076 = vld [vmem:[#allocation7 + $0x60] sm:$0xff]
        %v4077 = vld [vmem:[#allocation7 + $0x68] sm:$0xff]
        %v4078 = vld [vmem:[#allocation7 + $0x70] sm:$0xff]
        %v4079 = vld [vmem:[#allocation7 + $0x78] sm:$0xff]
        %v4080 = vld [vmem:[%s3] sm:$0x1]
        %v4082 = vlaneseq
        %v4083 = vshrl.u32 %v4082, 7
        %v4084 = vsub.s32 0, %v4083
        %v4085 = vrot.slane %v4080, %v4084
        %4087 = vmatprep.subr.mxu0 0.0
        %4088 = vmatpush1.msra.mxu0 %v4079
        %4089 = vmatprep.subr.mxu0 0.0
        %4090 = vmatpush1.msra.mxu0 %v4078
        %4091 = vmatprep.subr.mxu0 0.0
        %4092 = vmatpush1.msra.mxu0 %v4077
        %4093 = vmatprep.subr.mxu0 0.0
        %4094 = vmatpush1.msra.mxu0 %v4076
        %4095 = vmatprep.subr.mxu0 0.0
        %4096 = vmatpush1.msra.mxu0 %v4075
        %4097 = vmatprep.subr.mxu0 0.0
        %4098 = vmatpush1.msra.mxu0 %v4074
        %4099 = vmatprep.subr.mxu0 0.0
        %4100 = vmatpush1.msra.mxu0 %v4073
        %4101 = vmatprep.subr.mxu0 0.0
        %4102 = vmatpush1.msra.mxu0 %v4072
        %4103 = vmatprep.subr.mxu0 0.0
        %4104 = vmatpush1.msra.mxu0 %v4071
        %4105 = vmatprep.subr.mxu0 0.0
        %4106 = vmatpush1.msra.mxu0 %v4070
        %4107 = vmatprep.subr.mxu0 0.0
        %4108 = vmatpush1.msra.mxu0 %v4069
        %4109 = vmatprep.subr.mxu0 0.0
        %4110 = vmatpush1.msra.mxu0 %v4068
        %4111 = vmatprep.subr.mxu0 0.0
        %4112 = vmatpush1.msra.mxu0 %v4067
        %4113 = vmatprep.subr.mxu0 0.0
        %4114 = vmatpush1.msra.mxu0 %v4066
        %4115 = vmatprep.subr.mxu0 0.0
        %4116 = vmatpush1.msra.mxu0 %v4065
        %4117 = vmatprep.subr.mxu0 0.0
        %4118 = vmatpush1.msra.mxu0 %v4064
        %4119 = vmatprep.subr.mxu0 0.0
        %4120 = vmatpush2.msra.mxu0 0.0
        %4121 = vmatprep.subr.mxu0 0.0
        %4122 = vmatpush2.msra.mxu0 0.0
        %4123 = vmatprep.subr.mxu0 0.0
        %4124 = vmatpush2.msra.mxu0 0.0
        %4125 = vmatprep.subr.mxu0 0.0
        %4126 = vmatpush2.msra.mxu0 0.0
        %4127 = vmatprep.subr.mxu0 0.0
        %4128 = vmatpush2.msra.mxu0 0.0
        %4129 = vmatprep.subr.mxu0 0.0
        %4130 = vmatpush2.msra.mxu0 0.0
        %4131 = vmatprep.subr.mxu0 0.0
        %4132 = vmatpush2.msra.mxu0 0.0
        %4133 = vmatprep.subr.mxu0 0.0
        %4134 = vmatpush2.msra.mxu0 0.0
        %4135 = vmatprep.subr.mxu0 0.0
        %4136 = vmatpush2.msra.mxu0 0.0
        %4137 = vmatprep.subr.mxu0 0.0
        %4138 = vmatpush2.msra.mxu0 0.0
        %4139 = vmatprep.subr.mxu0 0.0
        %4140 = vmatpush2.msra.mxu0 0.0
        %4141 = vmatprep.subr.mxu0 0.0
        %4142 = vmatpush2.msra.mxu0 0.0
        %4143 = vmatprep.subr.mxu0 0.0
        %4144 = vmatpush2.msra.mxu0 0.0
        %4145 = vmatprep.subr.mxu0 0.0
        %4146 = vmatpush2.msra.mxu0 0.0
        %4147 = vmatprep.subr.mxu0 0.0
        %4148 = vmatpush2.msra.mxu0 0.0
        %4149 = vmatprep.subr.mxu0 0.0
        %4150 = vmatpush2.msra.mxu0 0.0
        %4151 = vmatprep.mubr.f32.mxu0 0.0
        %4152 = vmatmul.mubr.f32.gmra.mxu0 %v4056
        %v4153 = vpop.f32.mrf.mxu0
        %v4154 = vadd.f32 %v4085, %v4153
        %v4155 = vpop.f32.mrf.mxu0
        %4156 = vmatprep.mubr.f32.mxu0 0.0
        %4157 = vmatmul.mubr.f32.gmra.mxu0 %v4057
        %v4158 = vpop.f32.mrf.mxu0
        %v4159 = vadd.f32 %v4085, %v4158
        %v4160 = vpop.f32.mrf.mxu0
        %4161 = vmatprep.mubr.f32.mxu0 0.0
        %4162 = vmatmul.mubr.f32.gmra.mxu0 %v4058
        %v4163 = vpop.f32.mrf.mxu0
        %v4164 = vadd.f32 %v4085, %v4163
        %v4165 = vpop.f32.mrf.mxu0
        %4166 = vmatprep.mubr.f32.mxu0 0.0
        %4167 = vmatmul.mubr.f32.gmra.mxu0 %v4059
        %v4168 = vpop.f32.mrf.mxu0
        %v4169 = vadd.f32 %v4085, %v4168
        %v4170 = vpop.f32.mrf.mxu0
        %4171 = vmatprep.mubr.f32.mxu0 0.0
        %4172 = vmatmul.mubr.f32.gmra.mxu0 %v4060
        %v4173 = vpop.f32.mrf.mxu0
        %v4174 = vadd.f32 %v4085, %v4173
        %v4175 = vpop.f32.mrf.mxu0
        %4176 = vmatprep.mubr.f32.mxu0 0.0
        %4177 = vmatmul.mubr.f32.gmra.mxu0 %v4061
        %v4178 = vpop.f32.mrf.mxu0
        %v4179 = vadd.f32 %v4085, %v4178
        %v4180 = vpop.f32.mrf.mxu0
        %4181 = vmatprep.mubr.f32.mxu0 0.0
        %4182 = vmatmul.mubr.f32.gmra.mxu0 %v4062
        %v4183 = vpop.f32.mrf.mxu0
        %v4184 = vadd.f32 %v4085, %v4183
        %v4185 = vpop.f32.mrf.mxu0
        %4186 = vmatprep.mubr.f32.mxu0 0.0
        %4187 = vmatmul.mubr.f32.gmra.mxu0 %v4063
        %v4188 = vpop.f32.mrf.mxu0
        %v4189 = vadd.f32 %v4085, %v4188
        %v4190 = vpop.f32.mrf.mxu0
        %4191 = vdwg.mxu0
        %4192 = vst [vmem:[%s244] sm:$0xff] %v4154
        %4193 = vst [vmem:[%s244 + $0x8] sm:$0xff] %v4159
        %4194 = vst [vmem:[%s244 + $0x10] sm:$0xff] %v4164
        %4195 = vst [vmem:[%s244 + $0x18] sm:$0xff] %v4169
        %4196 = vst [vmem:[%s244 + $0x20] sm:$0xff] %v4174
        %4197 = vst [vmem:[%s244 + $0x28] sm:$0xff] %v4179
        %4198 = vst [vmem:[%s244 + $0x30] sm:$0xff] %v4184
        %4199 = vst [vmem:[%s244 + $0x38] sm:$0xff] %v4189
        %s4200 = sand.u32 %s119, 1
        %s4201 = scalar_lea.sflag [#allocation4], %s4200
        %s4202 = sand.u32 %s119, 1
        %s4203 = smul.addr %s4202, 64
        %s4204 = scalar_lea.vmem [#allocation8], %s4203
        // Predicated region
        $region49: #{tpu_custom_call.1} parent=35 // pred_check
          %p4205 = pneg %p129
        $region50: #{tpu_custom_call.1} parent=35 // pred_check_branch
          %4207 = sbr.rel (%p4205) target = $region52
        $region51: #{tpu_custom_call.1} parent=35 // pred_region
          %s4208 = smul.u32 8, %s22
          %s4210 = ssub.s32 1024, 1024
          %4211 = vsyncadd %s4201, %s4210
          %s4212 = smul.addr %s4208, 128
          %s4213 = scalar_lea.hbm %s4, %s4212
          %s4214 = sshll.u32 %s4204, 4
          %s4215 = int_to_ptr.vmem [resolvable:$true] %s4214
          %4220 = dma.vmem_to_hbm [thread:$0]  %s4215, 1024, %s4213, %s4201, 128, 128, 8
        $region52: #{tpu_custom_call.1} parent=35 // pred_fallthru
          _
      $region36: #{tpu_custom_call.1} parent=5 // pred_fallthru
        _
      %p4221 = scmp.le.s32.totalorder 2, %s17
      // Predicated region
      $region53: #{tpu_custom_call.1} parent=5 // pred_check
        %p4222 = pneg %p4221
      $region54: #{tpu_custom_call.1} parent=5 // pred_check_branch
        %4224 = sbr.rel (%p4222) target = $region56
      $region55: #{tpu_custom_call.1} parent=5 // pred_region
        %s4225 = ssub.s32 %s17, 2
        // Predicated region
        $region57: #{tpu_custom_call.1} parent=55 // pred_check
          %p4226 = pneg %p135
        $region58: #{tpu_custom_call.1} parent=55 // pred_check_branch
          %4228 = sbr.rel (%p4226) target = $region60
        $region59: #{tpu_custom_call.1} parent=55 // pred_region
          %s4229 = sand.u32 %s120, 1
          %s4230 = scalar_lea.sflag [#allocation4], %s4229
          %s4231 = sand.u32 %s120, 1
          %s4232 = smul.addr %s4231, 64
          %s4233 = scalar_lea.vmem [#allocation8], %s4232
          %4234 = dma.done %s4230, 1024
        $region60: #{tpu_custom_call.1} parent=55 // pred_fallthru
          _
      $region56: #{tpu_custom_call.1} parent=5 // pred_fallthru
        _
    $region6: #{tpu_custom_call.1} parent=1 // loop_footer
      %s21 = sadd.s32 1, %s17
    $region7: #{tpu_custom_call.1} parent=1 // loop_footer_branch
      %16 = sbr.rel target = $region3
    $region8: #{tpu_custom_call.1} parent=1 // loop_exit
      _
    %4235 = vsyncpa [#allocation3], 1
    %s4236 = scalar_lea.sflag [#allocation3], 1
    %4237 = vsyncpa %s4236, 1
    %4238 = vsyncpa [#allocation6], 1
    %4239 = vsyncpa [#allocation4], 1
    %s4240 = scalar_lea.sflag [#allocation4], 1
    %4241 = vsyncpa %s4240, 1

</llo_original>
